<compile_context>
chip_gen: v7x
topology: tpu7x:2x2x1
jax: 0.10.0
libtpu: 0.0.40
codegen_flags: <defaults>
</compile_context>

<pallas_src>
import functools

import jax
import jax.numpy as jnp
from jax.experimental import pallas as pl
from jax.experimental.pallas import tpu as pltpu

IMAGE_SIZE = 784     # 28 * 28
HIDDEN = 196
LATENT = 10
LATENT_PAD = 128     # one lane-width; mu -> lanes [0,128), log_var -> [128,256)


def vae_fc_kernel(x_ref, eps_ref,
                  w_eh_ref, b_eh_ref,
                  w_mulv_ref, b_mulv_ref,
                  w_dh_ref, b_dh_ref,
                  w_do_ref, b_do_ref,
                  img_ref, mlv_ref):
    """Whole VAE forward for one batch tile (all matmuls hit the MXU)."""
    x = x_ref[...]                                                    # (bm, 784)

    # ----- encode -----
    h = jnp.dot(x, w_eh_ref[...], preferred_element_type=jnp.float32) + b_eh_ref[...]
    h = jnp.maximum(h, 0.0)                                           # ReLU, (bm, 196)

    # fused mu|log_var projection: (bm, 196) @ (196, 256) -> (bm, 256)
    mlv = jnp.dot(h, w_mulv_ref[...], preferred_element_type=jnp.float32) + b_mulv_ref[...]
    mu_pad = mlv[:, :LATENT_PAD]                                      # lane-aligned slice
    lv_pad = mlv[:, LATENT_PAD:]                                      # lane-aligned slice

    # ----- reparameterize: z = mu + eps * exp(log_var / 2) -----
    # padding lanes: mu=0, log_var=0 -> exp=1, eps=0  =>  z=0 (safe, exact)
    z_pad = mu_pad + eps_ref[...] * jnp.exp(lv_pad * 0.5)             # (bm, 128)
    # TODO(synk): PyTorch side effect `self.mid_layer = z.detach().cpu().numpy()`
    # (host-side numpy stash) has no Pallas equivalent; skipped.

    # ----- decode -----
    # w_dh is padded with zero rows for lanes >= LATENT, so padded z lanes are inert.
    hd = jnp.dot(z_pad, w_dh_ref[...], preferred_element_type=jnp.float32) + b_dh_ref[...]
    hd = jnp.maximum(hd, 0.0)                                         # ReLU, (bm, 196)
    logits = jnp.dot(hd, w_do_ref[...], preferred_element_type=jnp.float32) + b_do_ref[...]

    img_ref[...] = jax.nn.sigmoid(logits)                             # (bm, 784)
    mlv_ref[...] = mlv                                                # (bm, 256) lane-dense


def init_params(key):
    """Deterministic PyTorch-Linear-style init: U(-1/sqrt(fan_in), 1/sqrt(fan_in))."""
    def linear(k, fan_in, fan_out):
        kw, kb = jax.random.split(k)
        bound = 1.0 / jnp.sqrt(jnp.float32(fan_in))
        w = jax.random.uniform(kw, (fan_in, fan_out), jnp.float32, -bound, bound)
        b = jax.random.uniform(kb, (1, fan_out), jnp.float32, -bound, bound)
        return w, b

    keys = jax.random.split(key, 5)
    params = {}
    params["en_hidden"] = linear(keys[0], IMAGE_SIZE, HIDDEN)
    params["en_mu"] = linear(keys[1], HIDDEN, LATENT)
    params["en_log_var"] = linear(keys[2], HIDDEN, LATENT)
    params["de_hidden"] = linear(keys[3], LATENT, HIDDEN)
    params["de_out"] = linear(keys[4], HIDDEN, IMAGE_SIZE)
    return params


@functools.partial(jax.jit, static_argnames=("bm",))
def vae_fc_forward(x, eps, params, *, bm=128):
    """x: (B, 1, 28, 28) float32, eps: (B, 10) float32 -> (imgs, mu, log_var)."""
    B = x.shape[0]
    x2 = x.reshape(B, IMAGE_SIZE).astype(jnp.float32)

    w_eh, b_eh = params["en_hidden"]
    w_mu, b_mu = params["en_mu"]
    w_lv, b_lv = params["en_log_var"]
    w_dh, b_dh = params["de_hidden"]
    w_do, b_do = params["de_out"]

    # --- fuse mu / log_var weights into one lane-aligned (196, 256) matmul ---
    w_mulv = jnp.zeros((HIDDEN, 2 * LATENT_PAD), jnp.float32)
    w_mulv = w_mulv.at[:, :LATENT].set(w_mu)
    w_mulv = w_mulv.at[:, LATENT_PAD:LATENT_PAD + LATENT].set(w_lv)
    b_mulv = jnp.zeros((1, 2 * LATENT_PAD), jnp.float32)
    b_mulv = b_mulv.at[:, :LATENT].set(b_mu)
    b_mulv = b_mulv.at[:, LATENT_PAD:LATENT_PAD + LATENT].set(b_lv)

    # --- pad decoder-hidden weight rows and eps lanes to LATENT_PAD ---
    w_dh_pad = jnp.zeros((LATENT_PAD, HIDDEN), jnp.float32).at[:LATENT, :].set(w_dh)

    # --- pad batch to a multiple of bm so no garbage rows hit exp/sigmoid ---
    n_blocks = pl.cdiv(B, bm)
    B_pad = n_blocks * bm
    x_pad = jnp.zeros((B_pad, IMAGE_SIZE), jnp.float32).at[:B, :].set(x2)
    eps_pad = jnp.zeros((B_pad, LATENT_PAD), jnp.float32).at[:B, :LATENT].set(
        eps.astype(jnp.float32))

    grid = (n_blocks,)

    def row_spec(cols):           # tiled over batch
        return pl.BlockSpec((bm, cols), lambda i: (i, 0))

    def full_spec(shape):         # parameters: whole array resident in VMEM
        return pl.BlockSpec(shape, lambda i: (0,) * len(shape))

    in_specs = [
        row_spec(IMAGE_SIZE),                      # x
        row_spec(LATENT_PAD),                      # eps (lane-dense)
        full_spec(w_eh.shape), full_spec(b_eh.shape),
        full_spec(w_mulv.shape), full_spec(b_mulv.shape),
        full_spec(w_dh_pad.shape), full_spec(b_dh.shape),
        full_spec(w_do.shape), full_spec(b_do.shape),
    ]
    out_specs = [
        row_spec(IMAGE_SIZE),                      # decoded images (flat)
        row_spec(2 * LATENT_PAD),                  # mu | log_var slab (lane-dense)
    ]
    out_shape = [
        jax.ShapeDtypeStruct((B_pad, IMAGE_SIZE), jnp.float32),
        jax.ShapeDtypeStruct((B_pad, 2 * LATENT_PAD), jnp.float32),
    ]

    imgs_flat, mlv = pl.pallas_call(
        vae_fc_kernel,
        grid=grid,
        in_specs=in_specs,
        out_specs=out_specs,
        out_shape=out_shape,
        compiler_params=pltpu.CompilerParams(
            dimension_semantics=("parallel",)),
    )(x_pad, eps_pad, w_eh, b_eh, w_mulv, b_mulv, w_dh_pad, b_dh, w_do, b_do)

    imgs = imgs_flat[:B, :].reshape(B, 1, 28, 28)
    mu = mlv[:B, :LATENT]
    log_var = mlv[:B, LATENT_PAD:LATENT_PAD + LATENT]
    return imgs, mu, log_var


def vae_fc_reference(x, eps, params):
    """Pure-JAX reference for correctness check."""
    B = x.shape[0]
    x2 = x.reshape(B, IMAGE_SIZE).astype(jnp.float32)
    w_eh, b_eh = params["en_hidden"]
    w_mu, b_mu = params["en_mu"]
    w_lv, b_lv = params["en_log_var"]
    w_dh, b_dh = params["de_hidden"]
    w_do, b_do = params["de_out"]
    h = jnp.maximum(x2 @ w_eh + b_eh, 0.0)
    mu = h @ w_mu + b_mu
    log_var = h @ w_lv + b_lv
    z = mu + eps * jnp.exp(log_var * 0.5)
    hd = jnp.maximum(z @ w_dh + b_dh, 0.0)
    out = jax.nn.sigmoid(hd @ w_do + b_do)
    return out.reshape(B, 1, 28, 28), mu, log_var


if __name__ == "__main__":
    key = jax.random.PRNGKey(0)
    k_param, k_x, k_eps = jax.random.split(key, 3)

    # batch 256 with bm=128 -> grid of 2 "parallel" steps (both v7x TCs busy).
    B = 256
    params = init_params(k_param)
    x = jax.random.uniform(k_x, (B, 1, 28, 28), jnp.float32)       # NCHW input
    eps = jax.random.normal(k_eps, (B, LATENT), jnp.float32)       # reparam noise

    imgs, mu, log_var = vae_fc_forward(x, eps, params, bm=128)
    jax.block_until_ready((imgs, mu, log_var))

    imgs_ref, mu_ref, lv_ref = vae_fc_reference(x, eps, params)
    assert imgs.shape == (B, 1, 28, 28) and mu.shape == (B, LATENT)
    assert jnp.allclose(imgs, imgs_ref, atol=1e-5, rtol=1e-5)
    assert jnp.allclose(mu, mu_ref, atol=1e-5, rtol=1e-5)
    assert jnp.allclose(log_var, lv_ref, atol=1e-5, rtol=1e-5)

    print("KERNEL_OK")
</pallas_src>

<mosaic_0001>
module attributes {stable_mosaic.version = 11 : i64} {
  func.func @vae_fc_kernel(%arg0: i32, %arg1: memref<128x784xf32, #tpu.memory_space<vmem>>, %arg2: memref<128x128xf32, #tpu.memory_space<vmem>>, %arg3: memref<784x196xf32, #tpu.memory_space<vmem>>, %arg4: memref<1x196xf32, #tpu.memory_space<vmem>>, %arg5: memref<196x256xf32, #tpu.memory_space<vmem>>, %arg6: memref<1x256xf32, #tpu.memory_space<vmem>>, %arg7: memref<128x196xf32, #tpu.memory_space<vmem>>, %arg8: memref<1x196xf32, #tpu.memory_space<vmem>>, %arg9: memref<196x784xf32, #tpu.memory_space<vmem>>, %arg10: memref<1x784xf32, #tpu.memory_space<vmem>>, %arg11: memref<128x784xf32, #tpu.memory_space<vmem>>, %arg12: memref<128x256xf32, #tpu.memory_space<vmem>>) attributes {dimension_semantics = [#tpu.dimension_semantics<parallel>], iteration_bounds = array<i64: 2>, scalar_prefetch = 0 : i64, scratch_operands = 0 : i64, tpu.core_type = #tpu.core_type<tc>, window_params = [{transform_indices = @transform_0, window_bounds = array<i64: 128, 784>}, {transform_indices = @transform_1, window_bounds = array<i64: 128, 128>}, {pipeline_mode = #tpu.pipeline_mode<synchronous>, transform_indices = @transform_2, window_bounds = array<i64: 784, 196>}, {pipeline_mode = #tpu.pipeline_mode<synchronous>, transform_indices = @transform_3, window_bounds = array<i64: 1, 196>}, {pipeline_mode = #tpu.pipeline_mode<synchronous>, transform_indices = @transform_4, window_bounds = array<i64: 196, 256>}, {pipeline_mode = #tpu.pipeline_mode<synchronous>, transform_indices = @transform_5, window_bounds = array<i64: 1, 256>}, {pipeline_mode = #tpu.pipeline_mode<synchronous>, transform_indices = @transform_6, window_bounds = array<i64: 128, 196>}, {pipeline_mode = #tpu.pipeline_mode<synchronous>, transform_indices = @transform_7, window_bounds = array<i64: 1, 196>}, {pipeline_mode = #tpu.pipeline_mode<synchronous>, transform_indices = @transform_8, window_bounds = array<i64: 196, 784>}, {pipeline_mode = #tpu.pipeline_mode<synchronous>, transform_indices = @transform_9, window_bounds = array<i64: 1, 784>}, {transform_indices = @transform_10, window_bounds = array<i64: 128, 784>}, {transform_indices = @transform_11, window_bounds = array<i64: 128, 256>}]} {
    %c0 = arith.constant 0 : index
    %c0_0 = arith.constant 0 : index
    %0 = vector.load %arg1[%c0, %c0_0] : memref<128x784xf32, #tpu.memory_space<vmem>>, vector<128x784xf32>
    %c0_1 = arith.constant 0 : index
    %c0_2 = arith.constant 0 : index
    %1 = vector.load %arg3[%c0_1, %c0_2] : memref<784x196xf32, #tpu.memory_space<vmem>>, vector<784x196xf32>
    %cst = arith.constant dense<0.000000e+00> : vector<128x196xf32>
    %2 = tpu.matmul %0, %1, %cst {dimension_numbers = #tpu.dot_dimension_numbers<[1], [0], [0], [1], [0, 0, 1, 1], [], []>} : vector<128x784xf32>, vector<784x196xf32>, vector<128x196xf32> -> vector<128x196xf32>
    %c0_3 = arith.constant 0 : index
    %c0_4 = arith.constant 0 : index
    %3 = vector.load %arg4[%c0_3, %c0_4] : memref<1x196xf32, #tpu.memory_space<vmem>>, vector<1x196xf32>
    %4 = vector.broadcast %3 : vector<1x196xf32> to vector<128x196xf32>
    %5 = arith.addf %2, %4 : vector<128x196xf32>
    %cst_5 = arith.constant 0.000000e+00 : f32
    %6 = vector.broadcast %cst_5 : f32 to vector<128x196xf32>
    %7 = arith.maximumf %5, %6 : vector<128x196xf32>
    %c0_6 = arith.constant 0 : index
    %c0_7 = arith.constant 0 : index
    %8 = vector.load %arg5[%c0_6, %c0_7] : memref<196x256xf32, #tpu.memory_space<vmem>>, vector<196x256xf32>
    %cst_8 = arith.constant dense<0.000000e+00> : vector<128x256xf32>
    %9 = tpu.matmul %7, %8, %cst_8 {dimension_numbers = #tpu.dot_dimension_numbers<[1], [0], [0], [1], [0, 0, 1, 1], [], []>} : vector<128x196xf32>, vector<196x256xf32>, vector<128x256xf32> -> vector<128x256xf32>
    %c0_9 = arith.constant 0 : index
    %c0_10 = arith.constant 0 : index
    %10 = vector.load %arg6[%c0_9, %c0_10] : memref<1x256xf32, #tpu.memory_space<vmem>>, vector<1x256xf32>
    %11 = vector.broadcast %10 : vector<1x256xf32> to vector<128x256xf32>
    %12 = arith.addf %9, %11 : vector<128x256xf32>
    %13 = vector.extract_strided_slice %12 {offsets = [0, 0], sizes = [128, 128], strides = [1, 1]} : vector<128x256xf32> to vector<128x128xf32>
    %14 = vector.extract_strided_slice %12 {offsets = [0, 128], sizes = [128, 128], strides = [1, 1]} : vector<128x256xf32> to vector<128x128xf32>
    %c0_11 = arith.constant 0 : index
    %c0_12 = arith.constant 0 : index
    %15 = vector.load %arg2[%c0_11, %c0_12] : memref<128x128xf32, #tpu.memory_space<vmem>>, vector<128x128xf32>
    %cst_13 = arith.constant 5.000000e-01 : f32
    %16 = vector.broadcast %cst_13 : f32 to vector<128x128xf32>
    %17 = arith.mulf %14, %16 : vector<128x128xf32>
    %18 = math.exp %17 : vector<128x128xf32>
    %19 = arith.mulf %15, %18 : vector<128x128xf32>
    %20 = arith.addf %13, %19 : vector<128x128xf32>
    %c0_14 = arith.constant 0 : index
    %c0_15 = arith.constant 0 : index
    %21 = vector.load %arg7[%c0_14, %c0_15] : memref<128x196xf32, #tpu.memory_space<vmem>>, vector<128x196xf32>
    %cst_16 = arith.constant dense<0.000000e+00> : vector<128x196xf32>
    %22 = tpu.matmul %20, %21, %cst_16 {dimension_numbers = #tpu.dot_dimension_numbers<[1], [0], [0], [1], [0, 0, 1, 1], [], []>} : vector<128x128xf32>, vector<128x196xf32>, vector<128x196xf32> -> vector<128x196xf32>
    %c0_17 = arith.constant 0 : index
    %c0_18 = arith.constant 0 : index
    %23 = vector.load %arg8[%c0_17, %c0_18] : memref<1x196xf32, #tpu.memory_space<vmem>>, vector<1x196xf32>
    %24 = vector.broadcast %23 : vector<1x196xf32> to vector<128x196xf32>
    %25 = arith.addf %22, %24 : vector<128x196xf32>
    %cst_19 = arith.constant 0.000000e+00 : f32
    %26 = vector.broadcast %cst_19 : f32 to vector<128x196xf32>
    %27 = arith.maximumf %25, %26 : vector<128x196xf32>
    %c0_20 = arith.constant 0 : index
    %c0_21 = arith.constant 0 : index
    %28 = vector.load %arg9[%c0_20, %c0_21] : memref<196x784xf32, #tpu.memory_space<vmem>>, vector<196x784xf32>
    %cst_22 = arith.constant dense<0.000000e+00> : vector<128x784xf32>
    %29 = tpu.matmul %27, %28, %cst_22 {dimension_numbers = #tpu.dot_dimension_numbers<[1], [0], [0], [1], [0, 0, 1, 1], [], []>} : vector<128x196xf32>, vector<196x784xf32>, vector<128x784xf32> -> vector<128x784xf32>
    %c0_23 = arith.constant 0 : index
    %c0_24 = arith.constant 0 : index
    %30 = vector.load %arg10[%c0_23, %c0_24] : memref<1x784xf32, #tpu.memory_space<vmem>>, vector<1x784xf32>
    %31 = vector.broadcast %30 : vector<1x784xf32> to vector<128x784xf32>
    %32 = arith.addf %29, %31 : vector<128x784xf32>
    %33 = arith.negf %32 : vector<128x784xf32>
    %34 = math.exp %33 : vector<128x784xf32>
    %cst_25 = arith.constant 1.000000e+00 : f32
    %35 = vector.broadcast %cst_25 : f32 to vector<128x784xf32>
    %36 = arith.addf %35, %34 : vector<128x784xf32>
    %37 = arith.divf %35, %36 : vector<128x784xf32>
    %c0_26 = arith.constant 0 : index
    %c0_27 = arith.constant 0 : index
    %38 = vector.load %arg11[%c0_26, %c0_27] : memref<128x784xf32, #tpu.memory_space<vmem>>, vector<128x784xf32>
    tpu.vector_store %arg11[%c0_26, %c0_27], %37 {strides = array<i32>} : memref<128x784xf32, #tpu.memory_space<vmem>>, vector<128x784xf32>,
    %c0_28 = arith.constant 0 : index
    %c0_29 = arith.constant 0 : index
    %39 = vector.load %arg12[%c0_28, %c0_29] : memref<128x256xf32, #tpu.memory_space<vmem>>, vector<128x256xf32>
    tpu.vector_store %arg12[%c0_28, %c0_29], %12 {strides = array<i32>} : memref<128x256xf32, #tpu.memory_space<vmem>>, vector<128x256xf32>,
    return
  }
  func.func @transform_0(%arg0: i32) -> (i32, i32) {
    %c0_i32 = arith.constant 0 : i32
    %c0_i32_0 = arith.constant 0 : i32
    return %arg0, %c0_i32 : i32, i32
  }
  func.func @transform_1(%arg0: i32) -> (i32, i32) {
    %c0_i32 = arith.constant 0 : i32
    %c0_i32_0 = arith.constant 0 : i32
    return %arg0, %c0_i32 : i32, i32
  }
  func.func @transform_2(%arg0: i32) -> (i32, i32) {
    %c0_i32 = arith.constant 0 : i32
    %c0_i32_0 = arith.constant 0 : i32
    %c0_i32_1 = arith.constant 0 : i32
    return %c0_i32, %c0_i32_0 : i32, i32
  }
  func.func @transform_3(%arg0: i32) -> (i32, i32) {
    %c0_i32 = arith.constant 0 : i32
    %c0_i32_0 = arith.constant 0 : i32
    %c0_i32_1 = arith.constant 0 : i32
    return %c0_i32, %c0_i32_0 : i32, i32
  }
  func.func @transform_4(%arg0: i32) -> (i32, i32) {
    %c0_i32 = arith.constant 0 : i32
    %c0_i32_0 = arith.constant 0 : i32
    %c0_i32_1 = arith.constant 0 : i32
    return %c0_i32, %c0_i32_0 : i32, i32
  }
  func.func @transform_5(%arg0: i32) -> (i32, i32) {
    %c0_i32 = arith.constant 0 : i32
    %c0_i32_0 = arith.constant 0 : i32
    %c0_i32_1 = arith.constant 0 : i32
    return %c0_i32, %c0_i32_0 : i32, i32
  }
  func.func @transform_6(%arg0: i32) -> (i32, i32) {
    %c0_i32 = arith.constant 0 : i32
    %c0_i32_0 = arith.constant 0 : i32
    %c0_i32_1 = arith.constant 0 : i32
    return %c0_i32, %c0_i32_0 : i32, i32
  }
  func.func @transform_7(%arg0: i32) -> (i32, i32) {
    %c0_i32 = arith.constant 0 : i32
    %c0_i32_0 = arith.constant 0 : i32
    %c0_i32_1 = arith.constant 0 : i32
    return %c0_i32, %c0_i32_0 : i32, i32
  }
  func.func @transform_8(%arg0: i32) -> (i32, i32) {
    %c0_i32 = arith.constant 0 : i32
    %c0_i32_0 = arith.constant 0 : i32
    %c0_i32_1 = arith.constant 0 : i32
    return %c0_i32, %c0_i32_0 : i32, i32
  }
  func.func @transform_9(%arg0: i32) -> (i32, i32) {
    %c0_i32 = arith.constant 0 : i32
    %c0_i32_0 = arith.constant 0 : i32
    %c0_i32_1 = arith.constant 0 : i32
    return %c0_i32, %c0_i32_0 : i32, i32
  }
  func.func @transform_10(%arg0: i32) -> (i32, i32) {
    %c0_i32 = arith.constant 0 : i32
    %c0_i32_0 = arith.constant 0 : i32
    return %arg0, %c0_i32 : i32, i32
  }
  func.func @transform_11(%arg0: i32) -> (i32, i32) {
    %c0_i32 = arith.constant 0 : i32
    %c0_i32_0 = arith.constant 0 : i32
    return %arg0, %c0_i32 : i32, i32
  }
}

</mosaic_0001>

<llo_original>
// kernel: vae_fc_forward.1
$region0: #{vae_fc_forward.1}
  #allocation0 [shape = 'u32[]', space=smem, size = 0x4, offset = 0x4, fixed_abs, tag = 'smem constant byte address 0x4 - core index']
  #allocation1 [shape = 'u32[144,128]{1,0:T(1,128)}', space=vmem, size = 0x12000, scoped, tag = 'internal scratch']
  %s0 = inlined_call_operand.vmem [shape: f32[256,784], index: 0, kind: input, shape index: {}]
  %s1 = inlined_call_operand.vmem [shape: f32[256,128], index: 1, kind: input, shape index: {}]
  %s2 = inlined_call_operand.vmem [shape: f32[784,196], index: 2, kind: input, shape index: {}]
  %s3 = inlined_call_operand.vmem [shape: f32[1,196], index: 3, kind: input, shape index: {}]
  %s4 = inlined_call_operand.vmem [shape: f32[196,256], index: 4, kind: input, shape index: {}]
  %s5 = inlined_call_operand.vmem [shape: f32[1,256], index: 5, kind: input, shape index: {}]
  %s6 = inlined_call_operand.vmem [shape: f32[128,196], index: 6, kind: input, shape index: {}]
  %s7 = inlined_call_operand.vmem [shape: f32[1,196], index: 7, kind: input, shape index: {}]
  %s8 = inlined_call_operand.vmem [shape: f32[196,784], index: 8, kind: input, shape index: {}]
  %s9 = inlined_call_operand.vmem [shape: f32[1,784], index: 9, kind: input, shape index: {}]
  %s10 = inlined_call_operand.vmem [shape: f32[256,784], index: 10, kind: output, shape index: {0}]
  %s11 = inlined_call_operand.vmem [shape: f32[256,256], index: 11, kind: output, shape index: {1}]
  %12 = xla_tuple %s10, %s11
  %s13 = sld [smem:[#allocation0]]
  $region81: #{vae_fc_forward.1} parent=0
    _
  %s15 = ssub.s32 1, %s13
  %s16 = scalar_select 0, %s15, %s13
  loop: start=0, step=1, limit=4
  $region2: #{vae_fc_forward.1} parent=0 // loop_pre_header
    _
  $region3: #{vae_fc_forward.1} parent=0 // loop_header
    %s18 = sphi 0, %s22
    %p19 = scmp.ge.s32.totalorder %s18, 4
    %s28 = sphi 0, %s30
    %s31 = sphi 0, %s28
    %s32 = sphi 0, %s31
    %s48 = sphi 0, %s32
    %s54 = sphi 0, %s56
    %s57 = sphi 0, %s54
    %s58 = sphi 0, %s57
    %s74 = sphi 0, %s58
    %s78 = sphi 0, %s78
    %s80 = sphi 0, %s78
    %s81 = sphi 0, %s80
    %s95 = sphi 0, %s81
    %s99 = sphi 0, %s99
    %s101 = sphi 0, %s99
    %s102 = sphi 0, %s101
    %s116 = sphi 0, %s102
    %s120 = sphi 0, %s120
    %s122 = sphi 0, %s120
    %s123 = sphi 0, %s122
    %s137 = sphi 0, %s123
    %s141 = sphi 0, %s141
    %s143 = sphi 0, %s141
    %s144 = sphi 0, %s143
    %s158 = sphi 0, %s144
    %s162 = sphi 0, %s162
    %s164 = sphi 0, %s162
    %s165 = sphi 0, %s164
    %s179 = sphi 0, %s165
    %s183 = sphi 0, %s183
    %s185 = sphi 0, %s183
    %s186 = sphi 0, %s185
    %s200 = sphi 0, %s186
    %s204 = sphi 0, %s204
    %s206 = sphi 0, %s204
    %s207 = sphi 0, %s206
    %s221 = sphi 0, %s207
    %s225 = sphi 0, %s225
    %s227 = sphi 0, %s225
    %s228 = sphi 0, %s227
    %s242 = sphi 0, %s228
    %s248 = sphi 0, %s250
    %s251 = sphi 0, %s248
    %s252 = sphi 0, %s251
    %s268 = sphi 0, %s252
    %s274 = sphi 0, %s276
    %s277 = sphi 0, %s274
    %s278 = sphi 0, %s277
    %s294 = sphi 0, %s278
  $region4: #{vae_fc_forward.1} parent=0 // loop_header_branch
    %21 = sbr.rel (%p19) target = $region8
  $region5: #{vae_fc_forward.1} parent=0 // loop_body
    %s23 = ssub.s32 %s18, 1
    %s24 = ssub.s32 %s18, 2
    %s25 = sadd.s32 %s18, 1
    %s26 = ssub.s32 %s18, %s25
    %p27 = scmp.eq.s32.totalorder %s26, 0
    %s29 = sadd.s32 %s28, 1
    %s30 = scalar_select %p27, %s28, %s29
    %p33 = pneg %p27
    %p34 = scmp.eq.s32.totalorder %s18, 1
    %p35 = por %p33, %p34
    %p36 = scmp.ne.s32.totalorder %s28, %s31
    %p37 = scmp.eq.s32.totalorder %s18, 0
    %p38 = por %p36, %p37
    %p39 = scmp.ne.s32.totalorder %s28, %s31
    %p40 = scmp.eq.s32.totalorder %s23, 1
    %p41 = por %p39, %p40
    %p42 = scmp.ne.s32.totalorder %s31, %s32
    %p43 = scmp.eq.s32.totalorder %s23, 0
    %p44 = por %p42, %p43
    %p45 = scmp.ne.s32.totalorder %s31, %s32
    %p46 = scmp.eq.s32.totalorder %s24, 1
    %p47 = por %p45, %p46
    %p49 = scmp.ne.s32.totalorder %s32, %s48
    %p50 = scmp.eq.s32.totalorder %s24, 0
    %p51 = por %p49, %p50
    %s52 = ssub.s32 %s18, %s25
    %p53 = scmp.eq.s32.totalorder %s52, 0
    %s55 = sadd.s32 %s54, 1
    %s56 = scalar_select %p53, %s54, %s55
    %p59 = pneg %p53
    %p60 = scmp.eq.s32.totalorder %s18, 1
    %p61 = por %p59, %p60
    %p62 = scmp.ne.s32.totalorder %s54, %s57
    %p63 = scmp.eq.s32.totalorder %s18, 0
    %p64 = por %p62, %p63
    %p65 = scmp.ne.s32.totalorder %s54, %s57
    %p66 = scmp.eq.s32.totalorder %s23, 1
    %p67 = por %p65, %p66
    %p68 = scmp.ne.s32.totalorder %s57, %s58
    %p69 = scmp.eq.s32.totalorder %s23, 0
    %p70 = por %p68, %p69
    %p71 = scmp.ne.s32.totalorder %s57, %s58
    %p72 = scmp.eq.s32.totalorder %s24, 1
    %p73 = por %p71, %p72
    %p75 = scmp.ne.s32.totalorder %s58, %s74
    %p76 = scmp.eq.s32.totalorder %s24, 0
    %p77 = por %p75, %p76
    %s79 = sadd.s32 %s78, 1
    %p82 = scmp.eq.s32.totalorder %s18, 1
    %p83 = scmp.ne.s32.totalorder %s78, %s80
    %p84 = scmp.eq.s32.totalorder %s18, 0
    %p85 = por %p83, %p84
    %p86 = scmp.ne.s32.totalorder %s78, %s80
    %p87 = scmp.eq.s32.totalorder %s23, 1
    %p88 = por %p86, %p87
    %p89 = scmp.ne.s32.totalorder %s80, %s81
    %p90 = scmp.eq.s32.totalorder %s23, 0
    %p91 = por %p89, %p90
    %p92 = scmp.ne.s32.totalorder %s80, %s81
    %p93 = scmp.eq.s32.totalorder %s24, 1
    %p94 = por %p92, %p93
    %p96 = scmp.ne.s32.totalorder %s81, %s95
    %p97 = scmp.eq.s32.totalorder %s24, 0
    %p98 = por %p96, %p97
    %s100 = sadd.s32 %s99, 1
    %p103 = scmp.eq.s32.totalorder %s18, 1
    %p104 = scmp.ne.s32.totalorder %s99, %s101
    %p105 = scmp.eq.s32.totalorder %s18, 0
    %p106 = por %p104, %p105
    %p107 = scmp.ne.s32.totalorder %s99, %s101
    %p108 = scmp.eq.s32.totalorder %s23, 1
    %p109 = por %p107, %p108
    %p110 = scmp.ne.s32.totalorder %s101, %s102
    %p111 = scmp.eq.s32.totalorder %s23, 0
    %p112 = por %p110, %p111
    %p113 = scmp.ne.s32.totalorder %s101, %s102
    %p114 = scmp.eq.s32.totalorder %s24, 1
    %p115 = por %p113, %p114
    %p117 = scmp.ne.s32.totalorder %s102, %s116
    %p118 = scmp.eq.s32.totalorder %s24, 0
    %p119 = por %p117, %p118
    %s121 = sadd.s32 %s120, 1
    %p124 = scmp.eq.s32.totalorder %s18, 1
    %p125 = scmp.ne.s32.totalorder %s120, %s122
    %p126 = scmp.eq.s32.totalorder %s18, 0
    %p127 = por %p125, %p126
    %p128 = scmp.ne.s32.totalorder %s120, %s122
    %p129 = scmp.eq.s32.totalorder %s23, 1
    %p130 = por %p128, %p129
    %p131 = scmp.ne.s32.totalorder %s122, %s123
    %p132 = scmp.eq.s32.totalorder %s23, 0
    %p133 = por %p131, %p132
    %p134 = scmp.ne.s32.totalorder %s122, %s123
    %p135 = scmp.eq.s32.totalorder %s24, 1
    %p136 = por %p134, %p135
    %p138 = scmp.ne.s32.totalorder %s123, %s137
    %p139 = scmp.eq.s32.totalorder %s24, 0
    %p140 = por %p138, %p139
    %s142 = sadd.s32 %s141, 1
    %p145 = scmp.eq.s32.totalorder %s18, 1
    %p146 = scmp.ne.s32.totalorder %s141, %s143
    %p147 = scmp.eq.s32.totalorder %s18, 0
    %p148 = por %p146, %p147
    %p149 = scmp.ne.s32.totalorder %s141, %s143
    %p150 = scmp.eq.s32.totalorder %s23, 1
    %p151 = por %p149, %p150
    %p152 = scmp.ne.s32.totalorder %s143, %s144
    %p153 = scmp.eq.s32.totalorder %s23, 0
    %p154 = por %p152, %p153
    %p155 = scmp.ne.s32.totalorder %s143, %s144
    %p156 = scmp.eq.s32.totalorder %s24, 1
    %p157 = por %p155, %p156
    %p159 = scmp.ne.s32.totalorder %s144, %s158
    %p160 = scmp.eq.s32.totalorder %s24, 0
    %p161 = por %p159, %p160
    %s163 = sadd.s32 %s162, 1
    %p166 = scmp.eq.s32.totalorder %s18, 1
    %p167 = scmp.ne.s32.totalorder %s162, %s164
    %p168 = scmp.eq.s32.totalorder %s18, 0
    %p169 = por %p167, %p168
    %p170 = scmp.ne.s32.totalorder %s162, %s164
    %p171 = scmp.eq.s32.totalorder %s23, 1
    %p172 = por %p170, %p171
    %p173 = scmp.ne.s32.totalorder %s164, %s165
    %p174 = scmp.eq.s32.totalorder %s23, 0
    %p175 = por %p173, %p174
    %p176 = scmp.ne.s32.totalorder %s164, %s165
    %p177 = scmp.eq.s32.totalorder %s24, 1
    %p178 = por %p176, %p177
    %p180 = scmp.ne.s32.totalorder %s165, %s179
    %p181 = scmp.eq.s32.totalorder %s24, 0
    %p182 = por %p180, %p181
    %s184 = sadd.s32 %s183, 1
    %p187 = scmp.eq.s32.totalorder %s18, 1
    %p188 = scmp.ne.s32.totalorder %s183, %s185
    %p189 = scmp.eq.s32.totalorder %s18, 0
    %p190 = por %p188, %p189
    %p191 = scmp.ne.s32.totalorder %s183, %s185
    %p192 = scmp.eq.s32.totalorder %s23, 1
    %p193 = por %p191, %p192
    %p194 = scmp.ne.s32.totalorder %s185, %s186
    %p195 = scmp.eq.s32.totalorder %s23, 0
    %p196 = por %p194, %p195
    %p197 = scmp.ne.s32.totalorder %s185, %s186
    %p198 = scmp.eq.s32.totalorder %s24, 1
    %p199 = por %p197, %p198
    %p201 = scmp.ne.s32.totalorder %s186, %s200
    %p202 = scmp.eq.s32.totalorder %s24, 0
    %p203 = por %p201, %p202
    %s205 = sadd.s32 %s204, 1
    %p208 = scmp.eq.s32.totalorder %s18, 1
    %p209 = scmp.ne.s32.totalorder %s204, %s206
    %p210 = scmp.eq.s32.totalorder %s18, 0
    %p211 = por %p209, %p210
    %p212 = scmp.ne.s32.totalorder %s204, %s206
    %p213 = scmp.eq.s32.totalorder %s23, 1
    %p214 = por %p212, %p213
    %p215 = scmp.ne.s32.totalorder %s206, %s207
    %p216 = scmp.eq.s32.totalorder %s23, 0
    %p217 = por %p215, %p216
    %p218 = scmp.ne.s32.totalorder %s206, %s207
    %p219 = scmp.eq.s32.totalorder %s24, 1
    %p220 = por %p218, %p219
    %p222 = scmp.ne.s32.totalorder %s207, %s221
    %p223 = scmp.eq.s32.totalorder %s24, 0
    %p224 = por %p222, %p223
    %s226 = sadd.s32 %s225, 1
    %p229 = scmp.eq.s32.totalorder %s18, 1
    %p230 = scmp.ne.s32.totalorder %s225, %s227
    %p231 = scmp.eq.s32.totalorder %s18, 0
    %p232 = por %p230, %p231
    %p233 = scmp.ne.s32.totalorder %s225, %s227
    %p234 = scmp.eq.s32.totalorder %s23, 1
    %p235 = por %p233, %p234
    %p236 = scmp.ne.s32.totalorder %s227, %s228
    %p237 = scmp.eq.s32.totalorder %s23, 0
    %p238 = por %p236, %p237
    %p239 = scmp.ne.s32.totalorder %s227, %s228
    %p240 = scmp.eq.s32.totalorder %s24, 1
    %p241 = por %p239, %p240
    %p243 = scmp.ne.s32.totalorder %s228, %s242
    %p244 = scmp.eq.s32.totalorder %s24, 0
    %p245 = por %p243, %p244
    %s246 = ssub.s32 %s18, %s25
    %p247 = scmp.eq.s32.totalorder %s246, 0
    %s249 = sadd.s32 %s248, 1
    %s250 = scalar_select %p247, %s248, %s249
    %p253 = pneg %p247
    %p254 = scmp.eq.s32.totalorder %s18, 1
    %p255 = por %p253, %p254
    %p256 = scmp.ne.s32.totalorder %s248, %s251
    %p257 = scmp.eq.s32.totalorder %s18, 0
    %p258 = por %p256, %p257
    %p259 = scmp.ne.s32.totalorder %s248, %s251
    %p260 = scmp.eq.s32.totalorder %s23, 1
    %p261 = por %p259, %p260
    %p262 = scmp.ne.s32.totalorder %s251, %s252
    %p263 = scmp.eq.s32.totalorder %s23, 0
    %p264 = por %p262, %p263
    %p265 = scmp.ne.s32.totalorder %s251, %s252
    %p266 = scmp.eq.s32.totalorder %s24, 1
    %p267 = por %p265, %p266
    %p269 = scmp.ne.s32.totalorder %s252, %s268
    %p270 = scmp.eq.s32.totalorder %s24, 0
    %p271 = por %p269, %p270
    %s272 = ssub.s32 %s18, %s25
    %p273 = scmp.eq.s32.totalorder %s272, 0
    %s275 = sadd.s32 %s274, 1
    %s276 = scalar_select %p273, %s274, %s275
    %p279 = pneg %p273
    %p280 = scmp.eq.s32.totalorder %s18, 1
    %p281 = por %p279, %p280
    %p282 = scmp.ne.s32.totalorder %s274, %s277
    %p283 = scmp.eq.s32.totalorder %s18, 0
    %p284 = por %p282, %p283
    %p285 = scmp.ne.s32.totalorder %s274, %s277
    %p286 = scmp.eq.s32.totalorder %s23, 1
    %p287 = por %p285, %p286
    %p288 = scmp.ne.s32.totalorder %s277, %s278
    %p289 = scmp.eq.s32.totalorder %s23, 0
    %p290 = por %p288, %p289
    %p291 = scmp.ne.s32.totalorder %s277, %s278
    %p292 = scmp.eq.s32.totalorder %s24, 1
    %p293 = por %p291, %p292
    %p295 = scmp.ne.s32.totalorder %s278, %s294
    %p296 = scmp.eq.s32.totalorder %s24, 0
    %p297 = por %p295, %p296
    %p298 = scmp.le.s32.totalorder 1, %s18
    %p299 = scmp.lt.s32.totalorder %s18, 3
    %p300 = pnand %p298, %p299
    %p301 = pneg %p300
    // Predicated region
    $region9: #{vae_fc_forward.1} parent=5 // pred_check
      _
    $region10: #{vae_fc_forward.1} parent=5 // pred_check_branch
      %303 = sbr.rel (%p300) target = $region12
    $region11: #{vae_fc_forward.1} parent=5 // pred_region
      %s304 = ssub.s32 %s18, 1
      // Predicated region
      $region13: #{vae_fc_forward.1} parent=11 // pred_check
        %p305 = pneg %p91
      $region14: #{vae_fc_forward.1} parent=11 // pred_check_branch
        %307 = sbr.rel (%p305) target = $region16
      $region15: #{vae_fc_forward.1} parent=11 // pred_region
        _
      $region16: #{vae_fc_forward.1} parent=11 // pred_fallthru
        _
      // Predicated region
      $region17: #{vae_fc_forward.1} parent=11 // pred_check
        %p308 = pneg %p112
      $region18: #{vae_fc_forward.1} parent=11 // pred_check_branch
        %310 = sbr.rel (%p308) target = $region20
      $region19: #{vae_fc_forward.1} parent=11 // pred_region
        _
      $region20: #{vae_fc_forward.1} parent=11 // pred_fallthru
        _
      // Predicated region
      $region21: #{vae_fc_forward.1} parent=11 // pred_check
        %p311 = pneg %p133
      $region22: #{vae_fc_forward.1} parent=11 // pred_check_branch
        %313 = sbr.rel (%p311) target = $region24
      $region23: #{vae_fc_forward.1} parent=11 // pred_region
        _
      $region24: #{vae_fc_forward.1} parent=11 // pred_fallthru
        _
      // Predicated region
      $region25: #{vae_fc_forward.1} parent=11 // pred_check
        %p314 = pneg %p154
      $region26: #{vae_fc_forward.1} parent=11 // pred_check_branch
        %316 = sbr.rel (%p314) target = $region28
      $region27: #{vae_fc_forward.1} parent=11 // pred_region
        _
      $region28: #{vae_fc_forward.1} parent=11 // pred_fallthru
        _
      // Predicated region
      $region29: #{vae_fc_forward.1} parent=11 // pred_check
        %p317 = pneg %p175
      $region30: #{vae_fc_forward.1} parent=11 // pred_check_branch
        %319 = sbr.rel (%p317) target = $region32
      $region31: #{vae_fc_forward.1} parent=11 // pred_region
        _
      $region32: #{vae_fc_forward.1} parent=11 // pred_fallthru
        _
      // Predicated region
      $region33: #{vae_fc_forward.1} parent=11 // pred_check
        %p320 = pneg %p196
      $region34: #{vae_fc_forward.1} parent=11 // pred_check_branch
        %322 = sbr.rel (%p320) target = $region36
      $region35: #{vae_fc_forward.1} parent=11 // pred_region
        _
      $region36: #{vae_fc_forward.1} parent=11 // pred_fallthru
        _
      // Predicated region
      $region37: #{vae_fc_forward.1} parent=11 // pred_check
        %p323 = pneg %p217
      $region38: #{vae_fc_forward.1} parent=11 // pred_check_branch
        %325 = sbr.rel (%p323) target = $region40
      $region39: #{vae_fc_forward.1} parent=11 // pred_region
        _
      $region40: #{vae_fc_forward.1} parent=11 // pred_fallthru
        _
      // Predicated region
      $region41: #{vae_fc_forward.1} parent=11 // pred_check
        %p326 = pneg %p238
      $region42: #{vae_fc_forward.1} parent=11 // pred_check_branch
        %328 = sbr.rel (%p326) target = $region44
      $region43: #{vae_fc_forward.1} parent=11 // pred_region
        _
      $region44: #{vae_fc_forward.1} parent=11 // pred_fallthru
        _
    $region12: #{vae_fc_forward.1} parent=5 // pred_fallthru
      _
    %p329 = scmp.lt.s32.totalorder %s18, 2
    // Predicated region
    $region45: #{vae_fc_forward.1} parent=5 // pred_check
      %p330 = pneg %p329
    $region46: #{vae_fc_forward.1} parent=5 // pred_check_branch
      %332 = sbr.rel (%p330) target = $region48
    $region47: #{vae_fc_forward.1} parent=5 // pred_region
      // Predicated region
      $region49: #{vae_fc_forward.1} parent=47 // pred_check
        %p333 = pneg %p38
      $region50: #{vae_fc_forward.1} parent=47 // pred_check_branch
        %335 = sbr.rel (%p333) target = $region52
      $region51: #{vae_fc_forward.1} parent=47 // pred_region
        %s336 = smul.u32 16, %s18
        %p337 = scmp.lt.s32.totalorder %s336, 31
        %s338 = scalar_select %p337, %s336, 31
        %s339 = smul.addr %s338, 7
        %s340 = smul.addr %s339, 8
        %s341 = scalar_lea.vmem %s0, %s340
        %s342 = smul.u32 16, %s18
      $region52: #{vae_fc_forward.1} parent=47 // pred_fallthru
        _
      // Predicated region
      $region53: #{vae_fc_forward.1} parent=47 // pred_check
        %p343 = pneg %p64
      $region54: #{vae_fc_forward.1} parent=47 // pred_check_branch
        %345 = sbr.rel (%p343) target = $region56
      $region55: #{vae_fc_forward.1} parent=47 // pred_region
        %s346 = smul.u32 16, %s18
        %p347 = scmp.lt.s32.totalorder %s346, 31
        %s348 = scalar_select %p347, %s346, 31
        %s349 = smul.addr %s348, 8
        %s350 = scalar_lea.vmem %s1, %s349
        %s351 = smul.u32 16, %s18
      $region56: #{vae_fc_forward.1} parent=47 // pred_fallthru
        _
    $region48: #{vae_fc_forward.1} parent=5 // pred_fallthru
      _
    %p352 = scmp.le.s32.totalorder 1, %s18
    %p353 = scmp.lt.s32.totalorder %s18, 3
    %p354 = pnand %p352, %p353
    %p355 = pneg %p354
    // Predicated region
    $region57: #{vae_fc_forward.1} parent=5 // pred_check
      _
    $region58: #{vae_fc_forward.1} parent=5 // pred_check_branch
      %357 = sbr.rel (%p354) target = $region60
    $region59: #{vae_fc_forward.1} parent=5 // pred_region
      %s358 = ssub.s32 %s18, 1
      %s359 = smul.u32 16, %s23
      %p360 = scmp.lt.s32.totalorder %s359, 31
      %s361 = scalar_select %p360, %s359, 31
      %s362 = smul.addr %s361, 7
      %s363 = smul.addr %s362, 8
      %s364 = scalar_lea.vmem %s0, %s363
      %p365 = pneg %p44
      %p366 = pneg %p41
      %s367 = smul.u32 16, %s23
      %p368 = scmp.lt.s32.totalorder %s367, 31
      %s369 = scalar_select %p368, %s367, 31
      %s370 = smul.addr %s369, 8
      %s371 = scalar_lea.vmem %s1, %s370
      %p372 = pneg %p70
      %p373 = pneg %p67
      %p374 = pneg %p91
      %p375 = pneg %p88
      %p376 = pneg %p112
      %p377 = pneg %p109
      %p378 = pneg %p133
      %p379 = pneg %p130
      %p380 = pneg %p154
      %p381 = pneg %p151
      %p382 = pneg %p175
      %p383 = pneg %p172
      %p384 = pneg %p196
      %p385 = pneg %p193
      %p386 = pneg %p217
      %p387 = pneg %p214
      %p388 = pneg %p238
      %p389 = pneg %p235
      %p390 = pneg %p264
      %p391 = pneg %p261
      %s392 = smul.u32 16, %s23
      %p393 = scmp.lt.s32.totalorder %s392, 31
      %s394 = scalar_select %p393, %s392, 31
      %s395 = smul.addr %s394, 7
      %s396 = smul.addr %s395, 8
      %s397 = scalar_lea.vmem %s10, %s396
      %p398 = pneg %p290
      %p399 = pneg %p287
      %s400 = smul.u32 16, %s23
      %p401 = scmp.lt.s32.totalorder %s400, 31
      %s402 = scalar_select %p401, %s400, 31
      %s403 = smul.addr %s402, 2
      %s404 = smul.addr %s403, 8
      %s405 = scalar_lea.vmem %s11, %s404
      %s406 = smul.u32 16, %s23
      %p407 = scmp.lt.s32.totalorder %s406, 31
      %s408 = scalar_select %p407, %s406, 31
      %s409 = smul.addr %s408, 7
      %s410 = smul.addr %s409, 8
      %s411 = scalar_lea.vmem %s0, %s410
      %s412 = smul.u32 16, %s23
      %s413 = smul.u32 16, %s23
      %p414 = scmp.lt.s32.totalorder %s413, 31
      %s415 = scalar_select %p414, %s413, 31
      %s416 = smul.addr %s415, 8
      %s417 = scalar_lea.vmem %s1, %s416
      %s418 = smul.u32 16, %s23
      %s419 = smul.u32 16, %s23
      %p420 = scmp.lt.s32.totalorder %s419, 31
      %s421 = scalar_select %p420, %s419, 31
      %s422 = smul.addr %s421, 7
      %s423 = smul.addr %s422, 8
      %s424 = scalar_lea.vmem %s10, %s423
      %s425 = smul.u32 16, %s23
      %s426 = smul.u32 16, %s23
      %p427 = scmp.lt.s32.totalorder %s426, 31
      %s428 = scalar_select %p427, %s426, 31
      %s429 = smul.addr %s428, 2
      %s430 = smul.addr %s429, 8
      %s431 = scalar_lea.vmem %s11, %s430
      %s432 = smul.u32 16, %s23
      %v433 = vld [vmem:[%s411] sm:$0xff]
      %v434 = vld [vmem:[%s411 + $0x8] sm:$0xff]
      %v435 = vld [vmem:[%s411 + $0x10] sm:$0xff]
      %v436 = vld [vmem:[%s411 + $0x18] sm:$0xff]
      %v437 = vld [vmem:[%s411 + $0x20] sm:$0xff]
      %v438 = vld [vmem:[%s411 + $0x28] sm:$0xff]
      %v439 = vld [vmem:[%s411 + $0x30] sm:$0xff]
      %v440 = vld [vmem:[%s411 + $0x38] sm:$0xff]
      %v441 = vld [vmem:[%s411 + $0x40] sm:$0xff]
      %v442 = vld [vmem:[%s411 + $0x48] sm:$0xff]
      %v443 = vld [vmem:[%s411 + $0x50] sm:$0xff]
      %v444 = vld [vmem:[%s411 + $0x58] sm:$0xff]
      %v445 = vld [vmem:[%s411 + $0x60] sm:$0xff]
      %v446 = vld [vmem:[%s411 + $0x68] sm:$0xff]
      %v447 = vld [vmem:[%s411 + $0x70] sm:$0xff]
      %v448 = vld [vmem:[%s411 + $0x78] sm:$0xff]
      %v449 = vld [vmem:[%s411 + $0x80] sm:$0xff]
      %v450 = vld [vmem:[%s411 + $0x88] sm:$0xff]
      %v451 = vld [vmem:[%s411 + $0x90] sm:$0xff]
      %v452 = vld [vmem:[%s411 + $0x98] sm:$0xff]
      %v453 = vld [vmem:[%s411 + $0xa0] sm:$0xff]
      %v454 = vld [vmem:[%s411 + $0xa8] sm:$0xff]
      %v455 = vld [vmem:[%s411 + $0xb0] sm:$0xff]
      %v456 = vld [vmem:[%s411 + $0xb8] sm:$0xff]
      %v457 = vld [vmem:[%s411 + $0xc0] sm:$0xff]
      %v458 = vld [vmem:[%s411 + $0xc8] sm:$0xff]
      %v459 = vld [vmem:[%s411 + $0xd0] sm:$0xff]
      %v460 = vld [vmem:[%s411 + $0xd8] sm:$0xff]
      %v461 = vld [vmem:[%s411 + $0xe0] sm:$0xff]
      %v462 = vld [vmem:[%s411 + $0xe8] sm:$0xff]
      %v463 = vld [vmem:[%s411 + $0xf0] sm:$0xff]
      %v464 = vld [vmem:[%s411 + $0xf8] sm:$0xff]
      %v465 = vld [vmem:[%s411 + $0x100] sm:$0xff]
      %v466 = vld [vmem:[%s411 + $0x108] sm:$0xff]
      %v467 = vld [vmem:[%s411 + $0x110] sm:$0xff]
      %v468 = vld [vmem:[%s411 + $0x118] sm:$0xff]
      %v469 = vld [vmem:[%s411 + $0x120] sm:$0xff]
      %v470 = vld [vmem:[%s411 + $0x128] sm:$0xff]
      %v471 = vld [vmem:[%s411 + $0x130] sm:$0xff]
      %v472 = vld [vmem:[%s411 + $0x138] sm:$0xff]
      %v473 = vld [vmem:[%s411 + $0x140] sm:$0xff]
      %v474 = vld [vmem:[%s411 + $0x148] sm:$0xff]
      %v475 = vld [vmem:[%s411 + $0x150] sm:$0xff]
      %v476 = vld [vmem:[%s411 + $0x158] sm:$0xff]
      %v477 = vld [vmem:[%s411 + $0x160] sm:$0xff]
      %v478 = vld [vmem:[%s411 + $0x168] sm:$0xff]
      %v479 = vld [vmem:[%s411 + $0x170] sm:$0xff]
      %v480 = vld [vmem:[%s411 + $0x178] sm:$0xff]
      %v481 = vld [vmem:[%s411 + $0x180] sm:$0xff]
      %v482 = vld [vmem:[%s411 + $0x188] sm:$0xff]
      %v483 = vld [vmem:[%s411 + $0x190] sm:$0xff]
      %v484 = vld [vmem:[%s411 + $0x198] sm:$0xff]
      %v485 = vld [vmem:[%s411 + $0x1a0] sm:$0xff]
      %v486 = vld [vmem:[%s411 + $0x1a8] sm:$0xff]
      %v487 = vld [vmem:[%s411 + $0x1b0] sm:$0xff]
      %v488 = vld [vmem:[%s411 + $0x1b8] sm:$0xff]
      %v489 = vld [vmem:[%s411 + $0x1c0] sm:$0xff]
      %v490 = vld [vmem:[%s411 + $0x1c8] sm:$0xff]
      %v491 = vld [vmem:[%s411 + $0x1d0] sm:$0xff]
      %v492 = vld [vmem:[%s411 + $0x1d8] sm:$0xff]
      %v493 = vld [vmem:[%s411 + $0x1e0] sm:$0xff]
      %v494 = vld [vmem:[%s411 + $0x1e8] sm:$0xff]
      %v495 = vld [vmem:[%s411 + $0x1f0] sm:$0xff]
      %v496 = vld [vmem:[%s411 + $0x1f8] sm:$0xff]
      %v497 = vld [vmem:[%s411 + $0x200] sm:$0xff]
      %v498 = vld [vmem:[%s411 + $0x208] sm:$0xff]
      %v499 = vld [vmem:[%s411 + $0x210] sm:$0xff]
      %v500 = vld [vmem:[%s411 + $0x218] sm:$0xff]
      %v501 = vld [vmem:[%s411 + $0x220] sm:$0xff]
      %v502 = vld [vmem:[%s411 + $0x228] sm:$0xff]
      %v503 = vld [vmem:[%s411 + $0x230] sm:$0xff]
      %v504 = vld [vmem:[%s411 + $0x238] sm:$0xff]
      %v505 = vld [vmem:[%s411 + $0x240] sm:$0xff]
      %v506 = vld [vmem:[%s411 + $0x248] sm:$0xff]
      %v507 = vld [vmem:[%s411 + $0x250] sm:$0xff]
      %v508 = vld [vmem:[%s411 + $0x258] sm:$0xff]
      %v509 = vld [vmem:[%s411 + $0x260] sm:$0xff]
      %v510 = vld [vmem:[%s411 + $0x268] sm:$0xff]
      %v511 = vld [vmem:[%s411 + $0x270] sm:$0xff]
      %v512 = vld [vmem:[%s411 + $0x278] sm:$0xff]
      %v513 = vld [vmem:[%s411 + $0x280] sm:$0xff]
      %v514 = vld [vmem:[%s411 + $0x288] sm:$0xff]
      %v515 = vld [vmem:[%s411 + $0x290] sm:$0xff]
      %v516 = vld [vmem:[%s411 + $0x298] sm:$0xff]
      %v517 = vld [vmem:[%s411 + $0x2a0] sm:$0xff]
      %v518 = vld [vmem:[%s411 + $0x2a8] sm:$0xff]
      %v519 = vld [vmem:[%s411 + $0x2b0] sm:$0xff]
      %v520 = vld [vmem:[%s411 + $0x2b8] sm:$0xff]
      %v521 = vld [vmem:[%s411 + $0x2c0] sm:$0xff]
      %v522 = vld [vmem:[%s411 + $0x2c8] sm:$0xff]
      %v523 = vld [vmem:[%s411 + $0x2d0] sm:$0xff]
      %v524 = vld [vmem:[%s411 + $0x2d8] sm:$0xff]
      %v525 = vld [vmem:[%s411 + $0x2e0] sm:$0xff]
      %v526 = vld [vmem:[%s411 + $0x2e8] sm:$0xff]
      %v527 = vld [vmem:[%s411 + $0x2f0] sm:$0xff]
      %v528 = vld [vmem:[%s411 + $0x2f8] sm:$0xff]
      %v529 = vld [vmem:[%s411 + $0x300] sm:$0xff]
      %v530 = vld [vmem:[%s411 + $0x308] sm:$0xff]
      %v531 = vld [vmem:[%s411 + $0x310] sm:$0xff]
      %v532 = vld [vmem:[%s411 + $0x318] sm:$0xff]
      %v533 = vld [vmem:[%s411 + $0x320] sm:$0xff]
      %v534 = vld [vmem:[%s411 + $0x328] sm:$0xff]
      %v535 = vld [vmem:[%s411 + $0x330] sm:$0xff]
      %v536 = vld [vmem:[%s411 + $0x338] sm:$0xff]
      %v537 = vld [vmem:[%s411 + $0x340] sm:$0xff]
      %v538 = vld [vmem:[%s411 + $0x348] sm:$0xff]
      %v539 = vld [vmem:[%s411 + $0x350] sm:$0xff]
      %v540 = vld [vmem:[%s411 + $0x358] sm:$0xff]
      %v541 = vld [vmem:[%s411 + $0x360] sm:$0xff]
      %v542 = vld [vmem:[%s411 + $0x368] sm:$0xff]
      %v543 = vld [vmem:[%s411 + $0x370] sm:$0xff]
      %v544 = vld [vmem:[%s411 + $0x378] sm:$0xff]
      %v545 = vld [vmem:[%s2] sm:$0xff]
      %v546 = vld [vmem:[%s2 + $0x8] sm:$0xff]
      %v547 = vld [vmem:[%s2 + $0x10] sm:$0xff]
      %v548 = vld [vmem:[%s2 + $0x18] sm:$0xff]
      %v549 = vld [vmem:[%s2 + $0x20] sm:$0xff]
      %v550 = vld [vmem:[%s2 + $0x28] sm:$0xff]
      %v551 = vld [vmem:[%s2 + $0x30] sm:$0xff]
      %v552 = vld [vmem:[%s2 + $0x38] sm:$0xff]
      %v553 = vld [vmem:[%s2 + $0x40] sm:$0xff]
      %v554 = vld [vmem:[%s2 + $0x48] sm:$0xff]
      %v555 = vld [vmem:[%s2 + $0x50] sm:$0xff]
      %v556 = vld [vmem:[%s2 + $0x58] sm:$0xff]
      %v557 = vld [vmem:[%s2 + $0x60] sm:$0xff]
      %v558 = vld [vmem:[%s2 + $0x68] sm:$0xff]
      %v559 = vld [vmem:[%s2 + $0x70] sm:$0xff]
      %v560 = vld [vmem:[%s2 + $0x78] sm:$0xff]
      %v561 = vld [vmem:[%s2 + $0x80] sm:$0xff]
      %v562 = vld [vmem:[%s2 + $0x88] sm:$0xff]
      %v563 = vld [vmem:[%s2 + $0x90] sm:$0xff]
      %v564 = vld [vmem:[%s2 + $0x98] sm:$0xff]
      %v565 = vld [vmem:[%s2 + $0xa0] sm:$0xff]
      %v566 = vld [vmem:[%s2 + $0xa8] sm:$0xff]
      %v567 = vld [vmem:[%s2 + $0xb0] sm:$0xff]
      %v568 = vld [vmem:[%s2 + $0xb8] sm:$0xff]
      %v569 = vld [vmem:[%s2 + $0xc0] sm:$0xff]
      %v570 = vld [vmem:[%s2 + $0xc8] sm:$0xff]
      %v571 = vld [vmem:[%s2 + $0xd0] sm:$0xff]
      %v572 = vld [vmem:[%s2 + $0xd8] sm:$0xff]
      %v573 = vld [vmem:[%s2 + $0xe0] sm:$0xff]
      %v574 = vld [vmem:[%s2 + $0xe8] sm:$0xff]
      %v575 = vld [vmem:[%s2 + $0xf0] sm:$0xff]
      %v576 = vld [vmem:[%s2 + $0xf8] sm:$0xff]
      %v577 = vld [vmem:[%s2 + $0x100] sm:$0xff]
      %v578 = vld [vmem:[%s2 + $0x108] sm:$0xff]
      %v579 = vld [vmem:[%s2 + $0x110] sm:$0xff]
      %v580 = vld [vmem:[%s2 + $0x118] sm:$0xff]
      %v581 = vld [vmem:[%s2 + $0x120] sm:$0xff]
      %v582 = vld [vmem:[%s2 + $0x128] sm:$0xff]
      %v583 = vld [vmem:[%s2 + $0x130] sm:$0xff]
      %v584 = vld [vmem:[%s2 + $0x138] sm:$0xff]
      %v585 = vld [vmem:[%s2 + $0x140] sm:$0xff]
      %v586 = vld [vmem:[%s2 + $0x148] sm:$0xff]
      %v587 = vld [vmem:[%s2 + $0x150] sm:$0xff]
      %v588 = vld [vmem:[%s2 + $0x158] sm:$0xff]
      %v589 = vld [vmem:[%s2 + $0x160] sm:$0xff]
      %v590 = vld [vmem:[%s2 + $0x168] sm:$0xff]
      %v591 = vld [vmem:[%s2 + $0x170] sm:$0xff]
      %v592 = vld [vmem:[%s2 + $0x178] sm:$0xff]
      %v593 = vld [vmem:[%s2 + $0x180] sm:$0xff]
      %v594 = vld [vmem:[%s2 + $0x188] sm:$0xff]
      %v595 = vld [vmem:[%s2 + $0x190] sm:$0xff]
      %v596 = vld [vmem:[%s2 + $0x198] sm:$0xff]
      %v597 = vld [vmem:[%s2 + $0x1a0] sm:$0xff]
      %v598 = vld [vmem:[%s2 + $0x1a8] sm:$0xff]
      %v599 = vld [vmem:[%s2 + $0x1b0] sm:$0xff]
      %v600 = vld [vmem:[%s2 + $0x1b8] sm:$0xff]
      %v601 = vld [vmem:[%s2 + $0x1c0] sm:$0xff]
      %v602 = vld [vmem:[%s2 + $0x1c8] sm:$0xff]
      %v603 = vld [vmem:[%s2 + $0x1d0] sm:$0xff]
      %v604 = vld [vmem:[%s2 + $0x1d8] sm:$0xff]
      %v605 = vld [vmem:[%s2 + $0x1e0] sm:$0xff]
      %v606 = vld [vmem:[%s2 + $0x1e8] sm:$0xff]
      %v607 = vld [vmem:[%s2 + $0x1f0] sm:$0xff]
      %v608 = vld [vmem:[%s2 + $0x1f8] sm:$0xff]
      %v609 = vld [vmem:[%s2 + $0x200] sm:$0xff]
      %v610 = vld [vmem:[%s2 + $0x208] sm:$0xff]
      %v611 = vld [vmem:[%s2 + $0x210] sm:$0xff]
      %v612 = vld [vmem:[%s2 + $0x218] sm:$0xff]
      %v613 = vld [vmem:[%s2 + $0x220] sm:$0xff]
      %v614 = vld [vmem:[%s2 + $0x228] sm:$0xff]
      %v615 = vld [vmem:[%s2 + $0x230] sm:$0xff]
      %v616 = vld [vmem:[%s2 + $0x238] sm:$0xff]
      %v617 = vld [vmem:[%s2 + $0x240] sm:$0xff]
      %v618 = vld [vmem:[%s2 + $0x248] sm:$0xff]
      %v619 = vld [vmem:[%s2 + $0x250] sm:$0xff]
      %v620 = vld [vmem:[%s2 + $0x258] sm:$0xff]
      %v621 = vld [vmem:[%s2 + $0x260] sm:$0xff]
      %v622 = vld [vmem:[%s2 + $0x268] sm:$0xff]
      %v623 = vld [vmem:[%s2 + $0x270] sm:$0xff]
      %v624 = vld [vmem:[%s2 + $0x278] sm:$0xff]
      %v625 = vld [vmem:[%s2 + $0x280] sm:$0xff]
      %v626 = vld [vmem:[%s2 + $0x288] sm:$0xff]
      %v627 = vld [vmem:[%s2 + $0x290] sm:$0xff]
      %v628 = vld [vmem:[%s2 + $0x298] sm:$0xff]
      %v629 = vld [vmem:[%s2 + $0x2a0] sm:$0xff]
      %v630 = vld [vmem:[%s2 + $0x2a8] sm:$0xff]
      %v631 = vld [vmem:[%s2 + $0x2b0] sm:$0xff]
      %v632 = vld [vmem:[%s2 + $0x2b8] sm:$0xff]
      %v633 = vld [vmem:[%s2 + $0x2c0] sm:$0xff]
      %v634 = vld [vmem:[%s2 + $0x2c8] sm:$0xff]
      %v635 = vld [vmem:[%s2 + $0x2d0] sm:$0xff]
      %v636 = vld [vmem:[%s2 + $0x2d8] sm:$0xff]
      %v637 = vld [vmem:[%s2 + $0x2e0] sm:$0xff]
      %v638 = vld [vmem:[%s2 + $0x2e8] sm:$0xff]
      %v639 = vld [vmem:[%s2 + $0x2f0] sm:$0xff]
      %v640 = vld [vmem:[%s2 + $0x2f8] sm:$0xff]
      %v641 = vld [vmem:[%s2 + $0x300] sm:$0xff]
      %v642 = vld [vmem:[%s2 + $0x308] sm:$0xff]
      %v643 = vld [vmem:[%s2 + $0x310] sm:$0xff]
      %v644 = vld [vmem:[%s2 + $0x318] sm:$0xff]
      %v645 = vld [vmem:[%s2 + $0x320] sm:$0xff]
      %v646 = vld [vmem:[%s2 + $0x328] sm:$0xff]
      %v647 = vld [vmem:[%s2 + $0x330] sm:$0xff]
      %v648 = vld [vmem:[%s2 + $0x338] sm:$0xff]
      %v649 = vld [vmem:[%s2 + $0x340] sm:$0xff]
      %v650 = vld [vmem:[%s2 + $0x348] sm:$0xff]
      %v651 = vld [vmem:[%s2 + $0x350] sm:$0xff]
      %v652 = vld [vmem:[%s2 + $0x358] sm:$0xff]
      %v653 = vld [vmem:[%s2 + $0x360] sm:$0xff]
      %v654 = vld [vmem:[%s2 + $0x368] sm:$0xff]
      %v655 = vld [vmem:[%s2 + $0x370] sm:$0xff]
      %v656 = vld [vmem:[%s2 + $0x378] sm:$0xff]
      %v657 = vld [vmem:[%s2 + $0x380] sm:$0xff]
      %v658 = vld [vmem:[%s2 + $0x388] sm:$0xff]
      %v659 = vld [vmem:[%s2 + $0x390] sm:$0xff]
      %v660 = vld [vmem:[%s2 + $0x398] sm:$0xff]
      %v661 = vld [vmem:[%s2 + $0x3a0] sm:$0xff]
      %v662 = vld [vmem:[%s2 + $0x3a8] sm:$0xff]
      %v663 = vld [vmem:[%s2 + $0x3b0] sm:$0xff]
      %v664 = vld [vmem:[%s2 + $0x3b8] sm:$0xff]
      %v665 = vld [vmem:[%s2 + $0x3c0] sm:$0xff]
      %v666 = vld [vmem:[%s2 + $0x3c8] sm:$0xff]
      %v667 = vld [vmem:[%s2 + $0x3d0] sm:$0xff]
      %v668 = vld [vmem:[%s2 + $0x3d8] sm:$0xff]
      %v669 = vld [vmem:[%s2 + $0x3e0] sm:$0xff]
      %v670 = vld [vmem:[%s2 + $0x3e8] sm:$0xff]
      %v671 = vld [vmem:[%s2 + $0x3f0] sm:$0xff]
      %v672 = vld [vmem:[%s2 + $0x3f8] sm:$0xff]
      %v673 = vld [vmem:[%s2 + $0x400] sm:$0xff]
      %v674 = vld [vmem:[%s2 + $0x408] sm:$0xff]
      %v675 = vld [vmem:[%s2 + $0x410] sm:$0xff]
      %v676 = vld [vmem:[%s2 + $0x418] sm:$0xff]
      %v677 = vld [vmem:[%s2 + $0x420] sm:$0xff]
      %v678 = vld [vmem:[%s2 + $0x428] sm:$0xff]
      %v679 = vld [vmem:[%s2 + $0x430] sm:$0xff]
      %v680 = vld [vmem:[%s2 + $0x438] sm:$0xff]
      %v681 = vld [vmem:[%s2 + $0x440] sm:$0xff]
      %v682 = vld [vmem:[%s2 + $0x448] sm:$0xff]
      %v683 = vld [vmem:[%s2 + $0x450] sm:$0xff]
      %v684 = vld [vmem:[%s2 + $0x458] sm:$0xff]
      %v685 = vld [vmem:[%s2 + $0x460] sm:$0xff]
      %v686 = vld [vmem:[%s2 + $0x468] sm:$0xff]
      %v687 = vld [vmem:[%s2 + $0x470] sm:$0xff]
      %v688 = vld [vmem:[%s2 + $0x478] sm:$0xff]
      %v689 = vld [vmem:[%s2 + $0x480] sm:$0xff]
      %v690 = vld [vmem:[%s2 + $0x488] sm:$0xff]
      %v691 = vld [vmem:[%s2 + $0x490] sm:$0xff]
      %v692 = vld [vmem:[%s2 + $0x498] sm:$0xff]
      %v693 = vld [vmem:[%s2 + $0x4a0] sm:$0xff]
      %v694 = vld [vmem:[%s2 + $0x4a8] sm:$0xff]
      %v695 = vld [vmem:[%s2 + $0x4b0] sm:$0xff]
      %v696 = vld [vmem:[%s2 + $0x4b8] sm:$0xff]
      %v697 = vld [vmem:[%s2 + $0x4c0] sm:$0xff]
      %v698 = vld [vmem:[%s2 + $0x4c8] sm:$0xff]
      %v699 = vld [vmem:[%s2 + $0x4d0] sm:$0xff]
      %v700 = vld [vmem:[%s2 + $0x4d8] sm:$0xff]
      %v701 = vld [vmem:[%s2 + $0x4e0] sm:$0xff]
      %v702 = vld [vmem:[%s2 + $0x4e8] sm:$0xff]
      %v703 = vld [vmem:[%s2 + $0x4f0] sm:$0xff]
      %v704 = vld [vmem:[%s2 + $0x4f8] sm:$0xff]
      %v705 = vld [vmem:[%s2 + $0x500] sm:$0xff]
      %v706 = vld [vmem:[%s2 + $0x508] sm:$0xff]
      %v707 = vld [vmem:[%s2 + $0x510] sm:$0xff]
      %v708 = vld [vmem:[%s2 + $0x518] sm:$0xff]
      %v709 = vld [vmem:[%s2 + $0x520] sm:$0xff]
      %v710 = vld [vmem:[%s2 + $0x528] sm:$0xff]
      %v711 = vld [vmem:[%s2 + $0x530] sm:$0xff]
      %v712 = vld [vmem:[%s2 + $0x538] sm:$0xff]
      %v713 = vld [vmem:[%s2 + $0x540] sm:$0xff]
      %v714 = vld [vmem:[%s2 + $0x548] sm:$0xff]
      %v715 = vld [vmem:[%s2 + $0x550] sm:$0xff]
      %v716 = vld [vmem:[%s2 + $0x558] sm:$0xff]
      %v717 = vld [vmem:[%s2 + $0x560] sm:$0xff]
      %v718 = vld [vmem:[%s2 + $0x568] sm:$0xff]
      %v719 = vld [vmem:[%s2 + $0x570] sm:$0xff]
      %v720 = vld [vmem:[%s2 + $0x578] sm:$0xff]
      %v721 = vld [vmem:[%s2 + $0x580] sm:$0xff]
      %v722 = vld [vmem:[%s2 + $0x588] sm:$0xff]
      %v723 = vld [vmem:[%s2 + $0x590] sm:$0xff]
      %v724 = vld [vmem:[%s2 + $0x598] sm:$0xff]
      %v725 = vld [vmem:[%s2 + $0x5a0] sm:$0xff]
      %v726 = vld [vmem:[%s2 + $0x5a8] sm:$0xff]
      %v727 = vld [vmem:[%s2 + $0x5b0] sm:$0xff]
      %v728 = vld [vmem:[%s2 + $0x5b8] sm:$0xff]
      %v729 = vld [vmem:[%s2 + $0x5c0] sm:$0xff]
      %v730 = vld [vmem:[%s2 + $0x5c8] sm:$0xff]
      %v731 = vld [vmem:[%s2 + $0x5d0] sm:$0xff]
      %v732 = vld [vmem:[%s2 + $0x5d8] sm:$0xff]
      %v733 = vld [vmem:[%s2 + $0x5e0] sm:$0xff]
      %v734 = vld [vmem:[%s2 + $0x5e8] sm:$0xff]
      %v735 = vld [vmem:[%s2 + $0x5f0] sm:$0xff]
      %v736 = vld [vmem:[%s2 + $0x5f8] sm:$0xff]
      %v737 = vld [vmem:[%s2 + $0x600] sm:$0xff]
      %v738 = vld [vmem:[%s2 + $0x608] sm:$0xff]
      %v739 = vld [vmem:[%s2 + $0x610] sm:$0xff]
      %v740 = vld [vmem:[%s2 + $0x618] sm:$0xff]
      %v741 = vld [vmem:[%s3] sm:$0x3]
      %v743 = vlaneseq
      %v744 = vshrl.u32 %v743, 7
      %v745 = vsub.s32 0, %v744
      %v746 = vrot.slane %v741, %v745
      %v747 = vlaneseq
      %v748 = vshrl.u32 %v747, 7
      %v749 = vsub.s32 1, %v748
      %v750 = vrot.slane %v741, %v749
      %vm753 = vcmask 130048
      %v755 = vsel %vm753, %v439, 0
      %v758 = vsel %vm753, %v446, 0
      %v761 = vsel %vm753, %v453, 0
      %v764 = vsel %vm753, %v460, 0
      %v767 = vsel %vm753, %v467, 0
      %v770 = vsel %vm753, %v474, 0
      %v773 = vsel %vm753, %v481, 0
      %v776 = vsel %vm753, %v488, 0
      %v779 = vsel %vm753, %v495, 0
      %v782 = vsel %vm753, %v502, 0
      %v785 = vsel %vm753, %v509, 0
      %v788 = vsel %vm753, %v516, 0
      %v791 = vsel %vm753, %v523, 0
      %v794 = vsel %vm753, %v530, 0
      %v797 = vsel %vm753, %v537, 0
      %v800 = vsel %vm753, %v544, 0
      %802 = vmatprep.subr.mxu0 %v546
      %803 = vmatpush1.msra.mxu0 %v545
      %804 = vmatprep.subr.mxu0 %v548
      %805 = vmatpush1.msra.mxu0 %v547
      %806 = vmatprep.subr.mxu0 %v550
      %807 = vmatpush1.msra.mxu0 %v549
      %808 = vmatprep.subr.mxu0 %v552
      %809 = vmatpush1.msra.mxu0 %v551
      %810 = vmatprep.subr.mxu0 %v554
      %811 = vmatpush1.msra.mxu0 %v553
      %812 = vmatprep.subr.mxu0 %v556
      %813 = vmatpush1.msra.mxu0 %v555
      %814 = vmatprep.subr.mxu0 %v558
      %815 = vmatpush1.msra.mxu0 %v557
      %816 = vmatprep.subr.mxu0 %v560
      %817 = vmatpush1.msra.mxu0 %v559
      %818 = vmatprep.subr.mxu0 %v562
      %819 = vmatpush1.msra.mxu0 %v561
      %820 = vmatprep.subr.mxu0 %v564
      %821 = vmatpush1.msra.mxu0 %v563
      %822 = vmatprep.subr.mxu0 %v566
      %823 = vmatpush1.msra.mxu0 %v565
      %824 = vmatprep.subr.mxu0 %v568
      %825 = vmatpush1.msra.mxu0 %v567
      %826 = vmatprep.subr.mxu0 %v570
      %827 = vmatpush1.msra.mxu0 %v569
      %828 = vmatprep.subr.mxu0 %v572
      %829 = vmatpush1.msra.mxu0 %v571
      %830 = vmatprep.subr.mxu0 %v574
      %831 = vmatpush1.msra.mxu0 %v573
      %832 = vmatprep.subr.mxu0 %v576
      %833 = vmatpush1.msra.mxu0 %v575
      %834 = vmatprep.subr.mxu0 %v578
      %835 = vmatpush1.msra.mxu0 %v577
      %836 = vmatprep.subr.mxu0 %v580
      %837 = vmatpush1.msra.mxu0 %v579
      %838 = vmatprep.subr.mxu0 %v582
      %839 = vmatpush1.msra.mxu0 %v581
      %840 = vmatprep.subr.mxu0 %v584
      %841 = vmatpush1.msra.mxu0 %v583
      %842 = vmatprep.subr.mxu0 %v586
      %843 = vmatpush1.msra.mxu0 %v585
      %844 = vmatprep.subr.mxu0 %v588
      %845 = vmatpush1.msra.mxu0 %v587
      %846 = vmatprep.subr.mxu0 %v590
      %847 = vmatpush1.msra.mxu0 %v589
      %848 = vmatprep.subr.mxu0 %v592
      %849 = vmatpush1.msra.mxu0 %v591
      %850 = vmatprep.subr.mxu0 %v594
      %851 = vmatpush1.msra.mxu0 %v593
      %852 = vmatprep.subr.mxu0 %v596
      %853 = vmatpush1.msra.mxu0 %v595
      %854 = vmatprep.subr.mxu0 %v598
      %855 = vmatpush1.msra.mxu0 %v597
      %856 = vmatprep.subr.mxu0 %v600
      %857 = vmatpush1.msra.mxu0 %v599
      %858 = vmatprep.subr.mxu0 %v602
      %859 = vmatpush1.msra.mxu0 %v601
      %860 = vmatprep.subr.mxu0 %v604
      %861 = vmatpush1.msra.mxu0 %v603
      %862 = vmatprep.subr.mxu0 %v606
      %863 = vmatpush1.msra.mxu0 %v605
      %864 = vmatprep.subr.mxu0 %v608
      %865 = vmatpush1.msra.mxu0 %v607
      %866 = vmatprep.mubr.f32.mxu0 %v434
      %867 = vmatmul.mubr.f32.gmra.mrb[0].mxu0 %v433
      %v868 = vpop.f32.mrb[0].mxu0
      %v869 = vadd.f32 %v746, %v868
      %v870 = vpop.f32.mrb[0].mxu0
      %v871 = vadd.f32 %v750, %v870
      %872 = vmatprep.mubr.f32.mxu0 %v441
      %873 = vmatmul.mubr.f32.gmra.mrb[0].mxu0 %v440
      %v874 = vpop.f32.mrb[0].mxu0
      %v875 = vadd.f32 %v746, %v874
      %v876 = vpop.f32.mrb[0].mxu0
      %v877 = vadd.f32 %v750, %v876
      %878 = vmatprep.mubr.f32.mxu0 %v448
      %879 = vmatmul.mubr.f32.gmra.mrb[0].mxu0 %v447
      %v880 = vpop.f32.mrb[0].mxu0
      %v881 = vadd.f32 %v746, %v880
      %v882 = vpop.f32.mrb[0].mxu0
      %v883 = vadd.f32 %v750, %v882
      %884 = vmatprep.mubr.f32.mxu0 %v455
      %885 = vmatmul.mubr.f32.gmra.mrb[0].mxu0 %v454
      %v886 = vpop.f32.mrb[0].mxu0
      %v887 = vadd.f32 %v746, %v886
      %v888 = vpop.f32.mrb[0].mxu0
      %v889 = vadd.f32 %v750, %v888
      %890 = vmatprep.mubr.f32.mxu0 %v462
      %891 = vmatmul.mubr.f32.gmra.mrb[0].mxu0 %v461
      %v892 = vpop.f32.mrb[0].mxu0
      %v893 = vadd.f32 %v746, %v892
      %v894 = vpop.f32.mrb[0].mxu0
      %v895 = vadd.f32 %v750, %v894
      %896 = vmatprep.mubr.f32.mxu0 %v469
      %897 = vmatmul.mubr.f32.gmra.mrb[0].mxu0 %v468
      %v898 = vpop.f32.mrb[0].mxu0
      %v899 = vadd.f32 %v746, %v898
      %v900 = vpop.f32.mrb[0].mxu0
      %v901 = vadd.f32 %v750, %v900
      %902 = vmatprep.mubr.f32.mxu0 %v476
      %903 = vmatmul.mubr.f32.gmra.mrb[0].mxu0 %v475
      %v904 = vpop.f32.mrb[0].mxu0
      %v905 = vadd.f32 %v746, %v904
      %v906 = vpop.f32.mrb[0].mxu0
      %v907 = vadd.f32 %v750, %v906
      %908 = vmatprep.mubr.f32.mxu0 %v483
      %909 = vmatmul.mubr.f32.gmra.mrb[0].mxu0 %v482
      %v910 = vpop.f32.mrb[0].mxu0
      %v911 = vadd.f32 %v746, %v910
      %v912 = vpop.f32.mrb[0].mxu0
      %v913 = vadd.f32 %v750, %v912
      %914 = vmatprep.mubr.f32.mxu0 %v490
      %915 = vmatmul.mubr.f32.gmra.mrb[0].mxu0 %v489
      %v916 = vpop.f32.mrb[0].mxu0
      %v917 = vadd.f32 %v746, %v916
      %v918 = vpop.f32.mrb[0].mxu0
      %v919 = vadd.f32 %v750, %v918
      %920 = vmatprep.mubr.f32.mxu0 %v497
      %921 = vmatmul.mubr.f32.gmra.mrb[0].mxu0 %v496
      %v922 = vpop.f32.mrb[0].mxu0
      %v923 = vadd.f32 %v746, %v922
      %v924 = vpop.f32.mrb[0].mxu0
      %v925 = vadd.f32 %v750, %v924
      %926 = vmatprep.mubr.f32.mxu0 %v504
      %927 = vmatmul.mubr.f32.gmra.mrb[0].mxu0 %v503
      %v928 = vpop.f32.mrb[0].mxu0
      %v929 = vadd.f32 %v746, %v928
      %v930 = vpop.f32.mrb[0].mxu0
      %v931 = vadd.f32 %v750, %v930
      %932 = vmatprep.mubr.f32.mxu0 %v511
      %933 = vmatmul.mubr.f32.gmra.mrb[0].mxu0 %v510
      %v934 = vpop.f32.mrb[0].mxu0
      %v935 = vadd.f32 %v746, %v934
      %v936 = vpop.f32.mrb[0].mxu0
      %v937 = vadd.f32 %v750, %v936
      %938 = vmatprep.mubr.f32.mxu0 %v518
      %939 = vmatmul.mubr.f32.gmra.mrb[0].mxu0 %v517
      %v940 = vpop.f32.mrb[0].mxu0
      %v941 = vadd.f32 %v746, %v940
      %v942 = vpop.f32.mrb[0].mxu0
      %v943 = vadd.f32 %v750, %v942
      %944 = vmatprep.mubr.f32.mxu0 %v525
      %945 = vmatmul.mubr.f32.gmra.mrb[0].mxu0 %v524
      %v946 = vpop.f32.mrb[0].mxu0
      %v947 = vadd.f32 %v746, %v946
      %v948 = vpop.f32.mrb[0].mxu0
      %v949 = vadd.f32 %v750, %v948
      %950 = vmatprep.mubr.f32.mxu0 %v532
      %951 = vmatmul.mubr.f32.gmra.mrb[0].mxu0 %v531
      %v952 = vpop.f32.mrb[0].mxu0
      %v953 = vadd.f32 %v746, %v952
      %v954 = vpop.f32.mrb[0].mxu0
      %v955 = vadd.f32 %v750, %v954
      %956 = vmatprep.mubr.f32.mxu0 %v539
      %957 = vmatmul.mubr.f32.gmra.mrb[0].mxu0 %v538
      %v958 = vpop.f32.mrb[0].mxu0
      %v959 = vadd.f32 %v746, %v958
      %v960 = vpop.f32.mrb[0].mxu0
      %v961 = vadd.f32 %v750, %v960
      %962 = vdwg.mxu0
      %963 = vmatprep.subr.mxu0 %v610
      %964 = vmatpush1.msra.mxu0 %v609
      %965 = vmatprep.subr.mxu0 %v612
      %966 = vmatpush1.msra.mxu0 %v611
      %967 = vmatprep.subr.mxu0 %v614
      %968 = vmatpush1.msra.mxu0 %v613
      %969 = vmatprep.subr.mxu0 %v616
      %970 = vmatpush1.msra.mxu0 %v615
      %971 = vmatprep.subr.mxu0 %v618
      %972 = vmatpush1.msra.mxu0 %v617
      %973 = vmatprep.subr.mxu0 %v620
      %974 = vmatpush1.msra.mxu0 %v619
      %975 = vmatprep.subr.mxu0 %v622
      %976 = vmatpush1.msra.mxu0 %v621
      %977 = vmatprep.subr.mxu0 %v624
      %978 = vmatpush1.msra.mxu0 %v623
      %979 = vmatprep.subr.mxu0 %v626
      %980 = vmatpush1.msra.mxu0 %v625
      %981 = vmatprep.subr.mxu0 %v628
      %982 = vmatpush1.msra.mxu0 %v627
      %983 = vmatprep.subr.mxu0 %v630
      %984 = vmatpush1.msra.mxu0 %v629
      %985 = vmatprep.subr.mxu0 %v632
      %986 = vmatpush1.msra.mxu0 %v631
      %987 = vmatprep.subr.mxu0 %v634
      %988 = vmatpush1.msra.mxu0 %v633
      %989 = vmatprep.subr.mxu0 %v636
      %990 = vmatpush1.msra.mxu0 %v635
      %991 = vmatprep.subr.mxu0 %v638
      %992 = vmatpush1.msra.mxu0 %v637
      %993 = vmatprep.subr.mxu0 %v640
      %994 = vmatpush1.msra.mxu0 %v639
      %995 = vmatprep.subr.mxu0 %v642
      %996 = vmatpush1.msra.mxu0 %v641
      %997 = vmatprep.subr.mxu0 %v644
      %998 = vmatpush1.msra.mxu0 %v643
      %999 = vmatprep.subr.mxu0 %v646
      %1000 = vmatpush1.msra.mxu0 %v645
      %1001 = vmatprep.subr.mxu0 %v648
      %1002 = vmatpush1.msra.mxu0 %v647
      %1003 = vmatprep.subr.mxu0 %v650
      %1004 = vmatpush1.msra.mxu0 %v649
      %1005 = vmatprep.subr.mxu0 %v652
      %1006 = vmatpush1.msra.mxu0 %v651
      %1007 = vmatprep.subr.mxu0 %v654
      %1008 = vmatpush1.msra.mxu0 %v653
      %1009 = vmatprep.subr.mxu0 %v656
      %1010 = vmatpush1.msra.mxu0 %v655
      %1011 = vmatprep.subr.mxu0 %v658
      %1012 = vmatpush1.msra.mxu0 %v657
      %1013 = vmatprep.subr.mxu0 %v660
      %1014 = vmatpush1.msra.mxu0 %v659
      %1015 = vmatprep.subr.mxu0 %v662
      %1016 = vmatpush1.msra.mxu0 %v661
      %1017 = vmatprep.subr.mxu0 %v664
      %1018 = vmatpush1.msra.mxu0 %v663
      %1019 = vmatprep.subr.mxu0 %v666
      %1020 = vmatpush1.msra.mxu0 %v665
      %1021 = vmatprep.subr.mxu0 %v668
      %1022 = vmatpush1.msra.mxu0 %v667
      %1023 = vmatprep.subr.mxu0 %v670
      %1024 = vmatpush1.msra.mxu0 %v669
      %1025 = vmatprep.subr.mxu0 %v672
      %1026 = vmatpush1.msra.mxu0 %v671
      %1027 = vmatprep.mubr.f32.mxu0 %v436
      %1028 = vmatmul.mubr.f32.gmra.mrb[0].mxu0 %v435
      %v1029 = vpop.f32.mrb[0].mxu0
      %v1030 = vadd.f32 %v869, %v1029
      %v1031 = vpop.f32.mrb[0].mxu0
      %v1032 = vadd.f32 %v871, %v1031
      %1033 = vmatprep.mubr.f32.mxu0 %v443
      %1034 = vmatmul.mubr.f32.gmra.mrb[0].mxu0 %v442
      %v1035 = vpop.f32.mrb[0].mxu0
      %v1036 = vadd.f32 %v875, %v1035
      %v1037 = vpop.f32.mrb[0].mxu0
      %v1038 = vadd.f32 %v877, %v1037
      %1039 = vmatprep.mubr.f32.mxu0 %v450
      %1040 = vmatmul.mubr.f32.gmra.mrb[0].mxu0 %v449
      %v1041 = vpop.f32.mrb[0].mxu0
      %v1042 = vadd.f32 %v881, %v1041
      %v1043 = vpop.f32.mrb[0].mxu0
      %v1044 = vadd.f32 %v883, %v1043
      %1045 = vmatprep.mubr.f32.mxu0 %v457
      %1046 = vmatmul.mubr.f32.gmra.mrb[0].mxu0 %v456
      %v1047 = vpop.f32.mrb[0].mxu0
      %v1048 = vadd.f32 %v887, %v1047
      %v1049 = vpop.f32.mrb[0].mxu0
      %v1050 = vadd.f32 %v889, %v1049
      %1051 = vmatprep.mubr.f32.mxu0 %v464
      %1052 = vmatmul.mubr.f32.gmra.mrb[0].mxu0 %v463
      %v1053 = vpop.f32.mrb[0].mxu0
      %v1054 = vadd.f32 %v893, %v1053
      %v1055 = vpop.f32.mrb[0].mxu0
      %v1056 = vadd.f32 %v895, %v1055
      %1057 = vmatprep.mubr.f32.mxu0 %v471
      %1058 = vmatmul.mubr.f32.gmra.mrb[0].mxu0 %v470
      %v1059 = vpop.f32.mrb[0].mxu0
      %v1060 = vadd.f32 %v899, %v1059
      %v1061 = vpop.f32.mrb[0].mxu0
      %v1062 = vadd.f32 %v901, %v1061
      %1063 = vmatprep.mubr.f32.mxu0 %v478
      %1064 = vmatmul.mubr.f32.gmra.mrb[0].mxu0 %v477
      %v1065 = vpop.f32.mrb[0].mxu0
      %v1066 = vadd.f32 %v905, %v1065
      %v1067 = vpop.f32.mrb[0].mxu0
      %v1068 = vadd.f32 %v907, %v1067
      %1069 = vmatprep.mubr.f32.mxu0 %v485
      %1070 = vmatmul.mubr.f32.gmra.mrb[0].mxu0 %v484
      %v1071 = vpop.f32.mrb[0].mxu0
      %v1072 = vadd.f32 %v911, %v1071
      %v1073 = vpop.f32.mrb[0].mxu0
      %v1074 = vadd.f32 %v913, %v1073
      %1075 = vmatprep.mubr.f32.mxu0 %v492
      %1076 = vmatmul.mubr.f32.gmra.mrb[0].mxu0 %v491
      %v1077 = vpop.f32.mrb[0].mxu0
      %v1078 = vadd.f32 %v917, %v1077
      %v1079 = vpop.f32.mrb[0].mxu0
      %v1080 = vadd.f32 %v919, %v1079
      %1081 = vmatprep.mubr.f32.mxu0 %v499
      %1082 = vmatmul.mubr.f32.gmra.mrb[0].mxu0 %v498
      %v1083 = vpop.f32.mrb[0].mxu0
      %v1084 = vadd.f32 %v923, %v1083
      %v1085 = vpop.f32.mrb[0].mxu0
      %v1086 = vadd.f32 %v925, %v1085
      %1087 = vmatprep.mubr.f32.mxu0 %v506
      %1088 = vmatmul.mubr.f32.gmra.mrb[0].mxu0 %v505
      %v1089 = vpop.f32.mrb[0].mxu0
      %v1090 = vadd.f32 %v929, %v1089
      %v1091 = vpop.f32.mrb[0].mxu0
      %v1092 = vadd.f32 %v931, %v1091
      %1093 = vmatprep.mubr.f32.mxu0 %v513
      %1094 = vmatmul.mubr.f32.gmra.mrb[0].mxu0 %v512
      %v1095 = vpop.f32.mrb[0].mxu0
      %v1096 = vadd.f32 %v935, %v1095
      %v1097 = vpop.f32.mrb[0].mxu0
      %v1098 = vadd.f32 %v937, %v1097
      %1099 = vmatprep.mubr.f32.mxu0 %v520
      %1100 = vmatmul.mubr.f32.gmra.mrb[0].mxu0 %v519
      %v1101 = vpop.f32.mrb[0].mxu0
      %v1102 = vadd.f32 %v941, %v1101
      %v1103 = vpop.f32.mrb[0].mxu0
      %v1104 = vadd.f32 %v943, %v1103
      %1105 = vmatprep.mubr.f32.mxu0 %v527
      %1106 = vmatmul.mubr.f32.gmra.mrb[0].mxu0 %v526
      %v1107 = vpop.f32.mrb[0].mxu0
      %v1108 = vadd.f32 %v947, %v1107
      %v1109 = vpop.f32.mrb[0].mxu0
      %v1110 = vadd.f32 %v949, %v1109
      %1111 = vmatprep.mubr.f32.mxu0 %v534
      %1112 = vmatmul.mubr.f32.gmra.mrb[0].mxu0 %v533
      %v1113 = vpop.f32.mrb[0].mxu0
      %v1114 = vadd.f32 %v953, %v1113
      %v1115 = vpop.f32.mrb[0].mxu0
      %v1116 = vadd.f32 %v955, %v1115
      %1117 = vmatprep.mubr.f32.mxu0 %v541
      %1118 = vmatmul.mubr.f32.gmra.mrb[0].mxu0 %v540
      %v1119 = vpop.f32.mrb[0].mxu0
      %v1120 = vadd.f32 %v959, %v1119
      %v1121 = vpop.f32.mrb[0].mxu0
      %v1122 = vadd.f32 %v961, %v1121
      %1123 = vdwg.mxu0
      %1124 = vmatprep.subr.mxu0 %v674
      %1125 = vmatpush1.msra.mxu0 %v673
      %1126 = vmatprep.subr.mxu0 %v676
      %1127 = vmatpush1.msra.mxu0 %v675
      %1128 = vmatprep.subr.mxu0 %v678
      %1129 = vmatpush1.msra.mxu0 %v677
      %1130 = vmatprep.subr.mxu0 %v680
      %1131 = vmatpush1.msra.mxu0 %v679
      %1132 = vmatprep.subr.mxu0 %v682
      %1133 = vmatpush1.msra.mxu0 %v681
      %1134 = vmatprep.subr.mxu0 %v684
      %1135 = vmatpush1.msra.mxu0 %v683
      %1136 = vmatprep.subr.mxu0 %v686
      %1137 = vmatpush1.msra.mxu0 %v685
      %1138 = vmatprep.subr.mxu0 %v688
      %1139 = vmatpush1.msra.mxu0 %v687
      %1140 = vmatprep.subr.mxu0 %v690
      %1141 = vmatpush1.msra.mxu0 %v689
      %1142 = vmatprep.subr.mxu0 %v692
      %1143 = vmatpush1.msra.mxu0 %v691
      %1144 = vmatprep.subr.mxu0 %v694
      %1145 = vmatpush1.msra.mxu0 %v693
      %1146 = vmatprep.subr.mxu0 %v696
      %1147 = vmatpush1.msra.mxu0 %v695
      %1148 = vmatprep.subr.mxu0 %v698
      %1149 = vmatpush1.msra.mxu0 %v697
      %1150 = vmatprep.subr.mxu0 %v700
      %1151 = vmatpush1.msra.mxu0 %v699
      %1152 = vmatprep.subr.mxu0 %v702
      %1153 = vmatpush1.msra.mxu0 %v701
      %1154 = vmatprep.subr.mxu0 %v704
      %1155 = vmatpush1.msra.mxu0 %v703
      %1156 = vmatprep.subr.mxu0 %v706
      %1157 = vmatpush1.msra.mxu0 %v705
      %1158 = vmatprep.subr.mxu0 %v708
      %1159 = vmatpush1.msra.mxu0 %v707
      %1160 = vmatprep.subr.mxu0 %v710
      %1161 = vmatpush1.msra.mxu0 %v709
      %1162 = vmatprep.subr.mxu0 %v712
      %1163 = vmatpush1.msra.mxu0 %v711
      %1164 = vmatprep.subr.mxu0 %v714
      %1165 = vmatpush1.msra.mxu0 %v713
      %1166 = vmatprep.subr.mxu0 %v716
      %1167 = vmatpush1.msra.mxu0 %v715
      %1168 = vmatprep.subr.mxu0 %v718
      %1169 = vmatpush1.msra.mxu0 %v717
      %1170 = vmatprep.subr.mxu0 %v720
      %1171 = vmatpush1.msra.mxu0 %v719
      %1172 = vmatprep.subr.mxu0 %v722
      %1173 = vmatpush1.msra.mxu0 %v721
      %1174 = vmatprep.subr.mxu0 %v724
      %1175 = vmatpush1.msra.mxu0 %v723
      %1176 = vmatprep.subr.mxu0 %v726
      %1177 = vmatpush1.msra.mxu0 %v725
      %1178 = vmatprep.subr.mxu0 %v728
      %1179 = vmatpush1.msra.mxu0 %v727
      %1180 = vmatprep.subr.mxu0 %v730
      %1181 = vmatpush1.msra.mxu0 %v729
      %1182 = vmatprep.subr.mxu0 %v732
      %1183 = vmatpush1.msra.mxu0 %v731
      %1184 = vmatprep.subr.mxu0 %v734
      %1185 = vmatpush1.msra.mxu0 %v733
      %1186 = vmatprep.subr.mxu0 %v736
      %1187 = vmatpush1.msra.mxu0 %v735
      %1188 = vmatprep.mubr.f32.mxu0 %v438
      %1189 = vmatmul.mubr.f32.gmra.mrb[0].mxu0 %v437
      %v1190 = vpop.f32.mrb[0].mxu0
      %v1191 = vadd.f32 %v1030, %v1190
      %v1192 = vpop.f32.mrb[0].mxu0
      %v1193 = vadd.f32 %v1032, %v1192
      %1194 = vmatprep.mubr.f32.mxu0 %v445
      %1195 = vmatmul.mubr.f32.gmra.mrb[0].mxu0 %v444
      %v1196 = vpop.f32.mrb[0].mxu0
      %v1197 = vadd.f32 %v1036, %v1196
      %v1198 = vpop.f32.mrb[0].mxu0
      %v1199 = vadd.f32 %v1038, %v1198
      %1200 = vmatprep.mubr.f32.mxu0 %v452
      %1201 = vmatmul.mubr.f32.gmra.mrb[0].mxu0 %v451
      %v1202 = vpop.f32.mrb[0].mxu0
      %v1203 = vadd.f32 %v1042, %v1202
      %v1204 = vpop.f32.mrb[0].mxu0
      %v1205 = vadd.f32 %v1044, %v1204
      %1206 = vmatprep.mubr.f32.mxu0 %v459
      %1207 = vmatmul.mubr.f32.gmra.mrb[0].mxu0 %v458
      %v1208 = vpop.f32.mrb[0].mxu0
      %v1209 = vadd.f32 %v1048, %v1208
      %v1210 = vpop.f32.mrb[0].mxu0
      %v1211 = vadd.f32 %v1050, %v1210
      %1212 = vmatprep.mubr.f32.mxu0 %v466
      %1213 = vmatmul.mubr.f32.gmra.mrb[0].mxu0 %v465
      %v1214 = vpop.f32.mrb[0].mxu0
      %v1215 = vadd.f32 %v1054, %v1214
      %v1216 = vpop.f32.mrb[0].mxu0
      %v1217 = vadd.f32 %v1056, %v1216
      %1218 = vmatprep.mubr.f32.mxu0 %v473
      %1219 = vmatmul.mubr.f32.gmra.mrb[0].mxu0 %v472
      %v1220 = vpop.f32.mrb[0].mxu0
      %v1221 = vadd.f32 %v1060, %v1220
      %v1222 = vpop.f32.mrb[0].mxu0
      %v1223 = vadd.f32 %v1062, %v1222
      %1224 = vmatprep.mubr.f32.mxu0 %v480
      %1225 = vmatmul.mubr.f32.gmra.mrb[0].mxu0 %v479
      %v1226 = vpop.f32.mrb[0].mxu0
      %v1227 = vadd.f32 %v1066, %v1226
      %v1228 = vpop.f32.mrb[0].mxu0
      %v1229 = vadd.f32 %v1068, %v1228
      %1230 = vmatprep.mubr.f32.mxu0 %v487
      %1231 = vmatmul.mubr.f32.gmra.mrb[0].mxu0 %v486
      %v1232 = vpop.f32.mrb[0].mxu0
      %v1233 = vadd.f32 %v1072, %v1232
      %v1234 = vpop.f32.mrb[0].mxu0
      %v1235 = vadd.f32 %v1074, %v1234
      %1236 = vmatprep.mubr.f32.mxu0 %v494
      %1237 = vmatmul.mubr.f32.gmra.mrb[0].mxu0 %v493
      %v1238 = vpop.f32.mrb[0].mxu0
      %v1239 = vadd.f32 %v1078, %v1238
      %v1240 = vpop.f32.mrb[0].mxu0
      %v1241 = vadd.f32 %v1080, %v1240
      %1242 = vmatprep.mubr.f32.mxu0 %v501
      %1243 = vmatmul.mubr.f32.gmra.mrb[0].mxu0 %v500
      %v1244 = vpop.f32.mrb[0].mxu0
      %v1245 = vadd.f32 %v1084, %v1244
      %v1246 = vpop.f32.mrb[0].mxu0
      %v1247 = vadd.f32 %v1086, %v1246
      %1248 = vmatprep.mubr.f32.mxu0 %v508
      %1249 = vmatmul.mubr.f32.gmra.mrb[0].mxu0 %v507
      %v1250 = vpop.f32.mrb[0].mxu0
      %v1251 = vadd.f32 %v1090, %v1250
      %v1252 = vpop.f32.mrb[0].mxu0
      %v1253 = vadd.f32 %v1092, %v1252
      %1254 = vmatprep.mubr.f32.mxu0 %v515
      %1255 = vmatmul.mubr.f32.gmra.mrb[0].mxu0 %v514
      %v1256 = vpop.f32.mrb[0].mxu0
      %v1257 = vadd.f32 %v1096, %v1256
      %v1258 = vpop.f32.mrb[0].mxu0
      %v1259 = vadd.f32 %v1098, %v1258
      %1260 = vmatprep.mubr.f32.mxu0 %v522
      %1261 = vmatmul.mubr.f32.gmra.mrb[0].mxu0 %v521
      %v1262 = vpop.f32.mrb[0].mxu0
      %v1263 = vadd.f32 %v1102, %v1262
      %v1264 = vpop.f32.mrb[0].mxu0
      %v1265 = vadd.f32 %v1104, %v1264
      %1266 = vmatprep.mubr.f32.mxu0 %v529
      %1267 = vmatmul.mubr.f32.gmra.mrb[0].mxu0 %v528
      %v1268 = vpop.f32.mrb[0].mxu0
      %v1269 = vadd.f32 %v1108, %v1268
      %v1270 = vpop.f32.mrb[0].mxu0
      %v1271 = vadd.f32 %v1110, %v1270
      %1272 = vmatprep.mubr.f32.mxu0 %v536
      %1273 = vmatmul.mubr.f32.gmra.mrb[0].mxu0 %v535
      %v1274 = vpop.f32.mrb[0].mxu0
      %v1275 = vadd.f32 %v1114, %v1274
      %v1276 = vpop.f32.mrb[0].mxu0
      %v1277 = vadd.f32 %v1116, %v1276
      %1278 = vmatprep.mubr.f32.mxu0 %v543
      %1279 = vmatmul.mubr.f32.gmra.mrb[0].mxu0 %v542
      %v1280 = vpop.f32.mrb[0].mxu0
      %v1281 = vadd.f32 %v1120, %v1280
      %v1282 = vpop.f32.mrb[0].mxu0
      %v1283 = vadd.f32 %v1122, %v1282
      %1284 = vdwg.mxu0
      %1285 = vmatprep.subr.mxu0 %v738
      %1286 = vmatpush1.msra.mxu0 %v737
      %1287 = vmatprep.subr.mxu0 %v740
      %1288 = vmatpush1.msra.mxu0 %v739
      %1289 = vmatprep.subr.mxu0 0.0
      %1290 = vmatpush1.msra.mxu0 0.0
      %1291 = vmatprep.subr.mxu0 0.0
      %1292 = vmatpush1.msra.mxu0 0.0
      %1293 = vmatprep.subr.mxu0 0.0
      %1294 = vmatpush1.msra.mxu0 0.0
      %1295 = vmatprep.subr.mxu0 0.0
      %1296 = vmatpush1.msra.mxu0 0.0
      %1297 = vmatprep.subr.mxu0 0.0
      %1298 = vmatpush1.msra.mxu0 0.0
      %1299 = vmatprep.subr.mxu0 0.0
      %1300 = vmatpush1.msra.mxu0 0.0
      %1301 = vmatprep.subr.mxu0 0.0
      %1302 = vmatpush1.msra.mxu0 0.0
      %1303 = vmatprep.subr.mxu0 0.0
      %1304 = vmatpush1.msra.mxu0 0.0
      %1305 = vmatprep.subr.mxu0 0.0
      %1306 = vmatpush1.msra.mxu0 0.0
      %1307 = vmatprep.subr.mxu0 0.0
      %1308 = vmatpush1.msra.mxu0 0.0
      %1309 = vmatprep.subr.mxu0 0.0
      %1310 = vmatpush1.msra.mxu0 0.0
      %1311 = vmatprep.subr.mxu0 0.0
      %1312 = vmatpush1.msra.mxu0 0.0
      %1313 = vmatprep.subr.mxu0 0.0
      %1314 = vmatpush1.msra.mxu0 0.0
      %1315 = vmatprep.subr.mxu0 0.0
      %1316 = vmatpush1.msra.mxu0 0.0
      %1317 = vmatprep.subr.mxu0 0.0
      %1318 = vmatpush1.msra.mxu0 0.0
      %1319 = vmatprep.subr.mxu0 0.0
      %1320 = vmatpush1.msra.mxu0 0.0
      %1321 = vmatprep.subr.mxu0 0.0
      %1322 = vmatpush1.msra.mxu0 0.0
      %1323 = vmatprep.subr.mxu0 0.0
      %1324 = vmatpush1.msra.mxu0 0.0
      %1325 = vmatprep.subr.mxu0 0.0
      %1326 = vmatpush1.msra.mxu0 0.0
      %1327 = vmatprep.subr.mxu0 0.0
      %1328 = vmatpush1.msra.mxu0 0.0
      %1329 = vmatprep.subr.mxu0 0.0
      %1330 = vmatpush1.msra.mxu0 0.0
      %1331 = vmatprep.subr.mxu0 0.0
      %1332 = vmatpush1.msra.mxu0 0.0
      %1333 = vmatprep.subr.mxu0 0.0
      %1334 = vmatpush1.msra.mxu0 0.0
      %1335 = vmatprep.subr.mxu0 0.0
      %1336 = vmatpush1.msra.mxu0 0.0
      %1337 = vmatprep.subr.mxu0 0.0
      %1338 = vmatpush1.msra.mxu0 0.0
      %1339 = vmatprep.subr.mxu0 0.0
      %1340 = vmatpush1.msra.mxu0 0.0
      %1341 = vmatprep.subr.mxu0 0.0
      %1342 = vmatpush1.msra.mxu0 0.0
      %1343 = vmatprep.subr.mxu0 0.0
      %1344 = vmatpush1.msra.mxu0 0.0
      %1345 = vmatprep.subr.mxu0 0.0
      %1346 = vmatpush1.msra.mxu0 0.0
      %1347 = vmatprep.subr.mxu0 0.0
      %1348 = vmatpush1.msra.mxu0 0.0
      %1349 = vmatprep.mubr.f32.mxu0 0.0
      %1350 = vmatmul.mubr.f32.gmra.mrb[0].mxu0 %v755
      %v1351 = vpop.f32.mrb[0].mxu0
      %v1352 = vadd.f32 %v1191, %v1351
      %v1353 = vpop.f32.mrb[0].mxu0
      %v1354 = vadd.f32 %v1193, %v1353
      %1355 = vmatprep.mubr.f32.mxu0 0.0
      %1356 = vmatmul.mubr.f32.gmra.mrb[0].mxu0 %v758
      %v1357 = vpop.f32.mrb[0].mxu0
      %v1358 = vadd.f32 %v1197, %v1357
      %v1359 = vpop.f32.mrb[0].mxu0
      %v1360 = vadd.f32 %v1199, %v1359
      %1361 = vmatprep.mubr.f32.mxu0 0.0
      %1362 = vmatmul.mubr.f32.gmra.mrb[0].mxu0 %v761
      %v1363 = vpop.f32.mrb[0].mxu0
      %v1364 = vadd.f32 %v1203, %v1363
      %v1365 = vpop.f32.mrb[0].mxu0
      %v1366 = vadd.f32 %v1205, %v1365
      %1367 = vmatprep.mubr.f32.mxu0 0.0
      %1368 = vmatmul.mubr.f32.gmra.mrb[0].mxu0 %v764
      %v1369 = vpop.f32.mrb[0].mxu0
      %v1370 = vadd.f32 %v1209, %v1369
      %v1371 = vpop.f32.mrb[0].mxu0
      %v1372 = vadd.f32 %v1211, %v1371
      %1373 = vmatprep.mubr.f32.mxu0 0.0
      %1374 = vmatmul.mubr.f32.gmra.mrb[0].mxu0 %v767
      %v1375 = vpop.f32.mrb[0].mxu0
      %v1376 = vadd.f32 %v1215, %v1375
      %v1377 = vpop.f32.mrb[0].mxu0
      %v1378 = vadd.f32 %v1217, %v1377
      %1379 = vmatprep.mubr.f32.mxu0 0.0
      %1380 = vmatmul.mubr.f32.gmra.mrb[0].mxu0 %v770
      %v1381 = vpop.f32.mrb[0].mxu0
      %v1382 = vadd.f32 %v1221, %v1381
      %v1383 = vpop.f32.mrb[0].mxu0
      %v1384 = vadd.f32 %v1223, %v1383
      %1385 = vmatprep.mubr.f32.mxu0 0.0
      %1386 = vmatmul.mubr.f32.gmra.mrb[0].mxu0 %v773
      %v1387 = vpop.f32.mrb[0].mxu0
      %v1388 = vadd.f32 %v1227, %v1387
      %v1389 = vpop.f32.mrb[0].mxu0
      %v1390 = vadd.f32 %v1229, %v1389
      %1391 = vmatprep.mubr.f32.mxu0 0.0
      %1392 = vmatmul.mubr.f32.gmra.mrb[0].mxu0 %v776
      %v1393 = vpop.f32.mrb[0].mxu0
      %v1394 = vadd.f32 %v1233, %v1393
      %v1395 = vpop.f32.mrb[0].mxu0
      %v1396 = vadd.f32 %v1235, %v1395
      %1397 = vmatprep.mubr.f32.mxu0 0.0
      %1398 = vmatmul.mubr.f32.gmra.mrb[0].mxu0 %v779
      %v1399 = vpop.f32.mrb[0].mxu0
      %v1400 = vadd.f32 %v1239, %v1399
      %v1401 = vpop.f32.mrb[0].mxu0
      %v1402 = vadd.f32 %v1241, %v1401
      %1403 = vmatprep.mubr.f32.mxu0 0.0
      %1404 = vmatmul.mubr.f32.gmra.mrb[0].mxu0 %v782
      %v1405 = vpop.f32.mrb[0].mxu0
      %v1406 = vadd.f32 %v1245, %v1405
      %v1407 = vpop.f32.mrb[0].mxu0
      %v1408 = vadd.f32 %v1247, %v1407
      %1409 = vmatprep.mubr.f32.mxu0 0.0
      %1410 = vmatmul.mubr.f32.gmra.mrb[0].mxu0 %v785
      %v1411 = vpop.f32.mrb[0].mxu0
      %v1412 = vadd.f32 %v1251, %v1411
      %v1413 = vpop.f32.mrb[0].mxu0
      %v1414 = vadd.f32 %v1253, %v1413
      %1415 = vmatprep.mubr.f32.mxu0 0.0
      %1416 = vmatmul.mubr.f32.gmra.mrb[0].mxu0 %v788
      %v1417 = vpop.f32.mrb[0].mxu0
      %v1418 = vadd.f32 %v1257, %v1417
      %v1419 = vpop.f32.mrb[0].mxu0
      %v1420 = vadd.f32 %v1259, %v1419
      %1421 = vmatprep.mubr.f32.mxu0 0.0
      %1422 = vmatmul.mubr.f32.gmra.mrb[0].mxu0 %v791
      %v1423 = vpop.f32.mrb[0].mxu0
      %v1424 = vadd.f32 %v1263, %v1423
      %v1425 = vpop.f32.mrb[0].mxu0
      %v1426 = vadd.f32 %v1265, %v1425
      %1427 = vmatprep.mubr.f32.mxu0 0.0
      %1428 = vmatmul.mubr.f32.gmra.mrb[0].mxu0 %v794
      %v1429 = vpop.f32.mrb[0].mxu0
      %v1430 = vadd.f32 %v1269, %v1429
      %v1431 = vpop.f32.mrb[0].mxu0
      %v1432 = vadd.f32 %v1271, %v1431
      %1433 = vmatprep.mubr.f32.mxu0 0.0
      %1434 = vmatmul.mubr.f32.gmra.mrb[0].mxu0 %v797
      %v1435 = vpop.f32.mrb[0].mxu0
      %v1436 = vadd.f32 %v1275, %v1435
      %v1437 = vpop.f32.mrb[0].mxu0
      %v1438 = vadd.f32 %v1277, %v1437
      %1439 = vmatprep.mubr.f32.mxu0 0.0
      %1440 = vmatmul.mubr.f32.gmra.mrb[0].mxu0 %v800
      %v1441 = vpop.f32.mrb[0].mxu0
      %v1442 = vadd.f32 %v1281, %v1441
      %v1443 = vpop.f32.mrb[0].mxu0
      %v1444 = vadd.f32 %v1283, %v1443
      %1445 = vdwg.mxu0
      %v1446 = vmax.f32 %v1352, 0.0
      %v1447 = vmax.f32 %v1354, 0.0
      %v1448 = vmax.f32 %v1358, 0.0
      %v1449 = vmax.f32 %v1360, 0.0
      %v1450 = vmax.f32 %v1364, 0.0
      %v1451 = vmax.f32 %v1366, 0.0
      %v1452 = vmax.f32 %v1370, 0.0
      %v1453 = vmax.f32 %v1372, 0.0
      %v1454 = vmax.f32 %v1376, 0.0
      %v1455 = vmax.f32 %v1378, 0.0
      %v1456 = vmax.f32 %v1382, 0.0
      %v1457 = vmax.f32 %v1384, 0.0
      %v1458 = vmax.f32 %v1388, 0.0
      %v1459 = vmax.f32 %v1390, 0.0
      %v1460 = vmax.f32 %v1394, 0.0
      %v1461 = vmax.f32 %v1396, 0.0
      %v1462 = vmax.f32 %v1400, 0.0
      %v1463 = vmax.f32 %v1402, 0.0
      %v1464 = vmax.f32 %v1406, 0.0
      %v1465 = vmax.f32 %v1408, 0.0
      %v1466 = vmax.f32 %v1412, 0.0
      %v1467 = vmax.f32 %v1414, 0.0
      %v1468 = vmax.f32 %v1418, 0.0
      %v1469 = vmax.f32 %v1420, 0.0
      %v1470 = vmax.f32 %v1424, 0.0
      %v1471 = vmax.f32 %v1426, 0.0
      %v1472 = vmax.f32 %v1430, 0.0
      %v1473 = vmax.f32 %v1432, 0.0
      %v1474 = vmax.f32 %v1436, 0.0
      %v1475 = vmax.f32 %v1438, 0.0
      %v1476 = vmax.f32 %v1442, 0.0
      %v1477 = vmax.f32 %v1444, 0.0
      %v1478 = vld [vmem:[%s4] sm:$0xff]
      %v1479 = vld [vmem:[%s4 + $0x8] sm:$0xff]
      %v1480 = vld [vmem:[%s4 + $0x10] sm:$0xff]
      %v1481 = vld [vmem:[%s4 + $0x18] sm:$0xff]
      %v1482 = vld [vmem:[%s4 + $0x20] sm:$0xff]
      %v1483 = vld [vmem:[%s4 + $0x28] sm:$0xff]
      %v1484 = vld [vmem:[%s4 + $0x30] sm:$0xff]
      %v1485 = vld [vmem:[%s4 + $0x38] sm:$0xff]
      %v1486 = vld [vmem:[%s4 + $0x40] sm:$0xff]
      %v1487 = vld [vmem:[%s4 + $0x48] sm:$0xff]
      %v1488 = vld [vmem:[%s4 + $0x50] sm:$0xff]
      %v1489 = vld [vmem:[%s4 + $0x58] sm:$0xff]
      %v1490 = vld [vmem:[%s4 + $0x60] sm:$0xff]
      %v1491 = vld [vmem:[%s4 + $0x68] sm:$0xff]
      %v1492 = vld [vmem:[%s4 + $0x70] sm:$0xff]
      %v1493 = vld [vmem:[%s4 + $0x78] sm:$0xff]
      %v1494 = vld [vmem:[%s4 + $0x80] sm:$0xff]
      %v1495 = vld [vmem:[%s4 + $0x88] sm:$0xff]
      %v1496 = vld [vmem:[%s4 + $0x90] sm:$0xff]
      %v1497 = vld [vmem:[%s4 + $0x98] sm:$0xff]
      %v1498 = vld [vmem:[%s4 + $0xa0] sm:$0xff]
      %v1499 = vld [vmem:[%s4 + $0xa8] sm:$0xff]
      %v1500 = vld [vmem:[%s4 + $0xb0] sm:$0xff]
      %v1501 = vld [vmem:[%s4 + $0xb8] sm:$0xff]
      %v1502 = vld [vmem:[%s4 + $0xc0] sm:$0xff]
      %v1503 = vld [vmem:[%s4 + $0xc8] sm:$0xff]
      %v1504 = vld [vmem:[%s4 + $0xd0] sm:$0xff]
      %v1505 = vld [vmem:[%s4 + $0xd8] sm:$0xff]
      %v1506 = vld [vmem:[%s4 + $0xe0] sm:$0xff]
      %v1507 = vld [vmem:[%s4 + $0xe8] sm:$0xff]
      %v1508 = vld [vmem:[%s4 + $0xf0] sm:$0xff]
      %v1509 = vld [vmem:[%s4 + $0xf8] sm:$0xff]
      %v1510 = vld [vmem:[%s4 + $0x100] sm:$0xff]
      %v1511 = vld [vmem:[%s4 + $0x108] sm:$0xff]
      %v1512 = vld [vmem:[%s4 + $0x110] sm:$0xff]
      %v1513 = vld [vmem:[%s4 + $0x118] sm:$0xff]
      %v1514 = vld [vmem:[%s4 + $0x120] sm:$0xff]
      %v1515 = vld [vmem:[%s4 + $0x128] sm:$0xff]
      %v1516 = vld [vmem:[%s4 + $0x130] sm:$0xff]
      %v1517 = vld [vmem:[%s4 + $0x138] sm:$0xff]
      %v1518 = vld [vmem:[%s4 + $0x140] sm:$0xff]
      %v1519 = vld [vmem:[%s4 + $0x148] sm:$0xff]
      %v1520 = vld [vmem:[%s4 + $0x150] sm:$0xff]
      %v1521 = vld [vmem:[%s4 + $0x158] sm:$0xff]
      %v1522 = vld [vmem:[%s4 + $0x160] sm:$0xff]
      %v1523 = vld [vmem:[%s4 + $0x168] sm:$0xff]
      %v1524 = vld [vmem:[%s4 + $0x170] sm:$0xff]
      %v1525 = vld [vmem:[%s4 + $0x178] sm:$0xff]
      %v1526 = vld [vmem:[%s4 + $0x180] sm:$0xf]
      %v1527 = vld [vmem:[%s4 + $0x188] sm:$0xf]
      %v1528 = vld [vmem:[%s5] sm:$0x3]
      %v1530 = vlaneseq
      %v1531 = vshrl.u32 %v1530, 7
      %v1532 = vsub.s32 0, %v1531
      %v1533 = vrot.slane %v1528, %v1532
      %v1534 = vlaneseq
      %v1535 = vshrl.u32 %v1534, 7
      %v1536 = vsub.s32 1, %v1535
      %v1537 = vrot.slane %v1528, %v1536
      %vm1540 = vcmask 556032
      %v1542 = vsel %vm1540, %v1447, 0
      %v1545 = vsel %vm1540, %v1449, 0
      %v1548 = vsel %vm1540, %v1451, 0
      %v1551 = vsel %vm1540, %v1453, 0
      %v1554 = vsel %vm1540, %v1455, 0
      %v1557 = vsel %vm1540, %v1457, 0
      %v1560 = vsel %vm1540, %v1459, 0
      %v1563 = vsel %vm1540, %v1461, 0
      %v1566 = vsel %vm1540, %v1463, 0
      %v1569 = vsel %vm1540, %v1465, 0
      %v1572 = vsel %vm1540, %v1467, 0
      %v1575 = vsel %vm1540, %v1469, 0
      %v1578 = vsel %vm1540, %v1471, 0
      %v1581 = vsel %vm1540, %v1473, 0
      %v1584 = vsel %vm1540, %v1475, 0
      %v1587 = vsel %vm1540, %v1477, 0
      %vm1589 = vcmask 1043456
      %v1591 = vsel %vm1589, %v1526, 0
      %v1594 = vsel %vm1589, %v1527, 0
      %1596 = vmatprep.subr.mxu0 %v1479
      %1597 = vmatpush1.msra.mxu0 %v1478
      %1598 = vmatprep.subr.mxu0 %v1481
      %1599 = vmatpush1.msra.mxu0 %v1480
      %1600 = vmatprep.subr.mxu0 %v1483
      %1601 = vmatpush1.msra.mxu0 %v1482
      %1602 = vmatprep.subr.mxu0 %v1485
      %1603 = vmatpush1.msra.mxu0 %v1484
      %1604 = vmatprep.subr.mxu0 %v1487
      %1605 = vmatpush1.msra.mxu0 %v1486
      %1606 = vmatprep.subr.mxu0 %v1489
      %1607 = vmatpush1.msra.mxu0 %v1488
      %1608 = vmatprep.subr.mxu0 %v1491
      %1609 = vmatpush1.msra.mxu0 %v1490
      %1610 = vmatprep.subr.mxu0 %v1493
      %1611 = vmatpush1.msra.mxu0 %v1492
      %1612 = vmatprep.subr.mxu0 %v1495
      %1613 = vmatpush1.msra.mxu0 %v1494
      %1614 = vmatprep.subr.mxu0 %v1497
      %1615 = vmatpush1.msra.mxu0 %v1496
      %1616 = vmatprep.subr.mxu0 %v1499
      %1617 = vmatpush1.msra.mxu0 %v1498
      %1618 = vmatprep.subr.mxu0 %v1501
      %1619 = vmatpush1.msra.mxu0 %v1500
      %1620 = vmatprep.subr.mxu0 %v1503
      %1621 = vmatpush1.msra.mxu0 %v1502
      %1622 = vmatprep.subr.mxu0 %v1505
      %1623 = vmatpush1.msra.mxu0 %v1504
      %1624 = vmatprep.subr.mxu0 %v1507
      %1625 = vmatpush1.msra.mxu0 %v1506
      %1626 = vmatprep.subr.mxu0 %v1509
      %1627 = vmatpush1.msra.mxu0 %v1508
      %1628 = vmatprep.subr.mxu0 %v1511
      %1629 = vmatpush1.msra.mxu0 %v1510
      %1630 = vmatprep.subr.mxu0 %v1513
      %1631 = vmatpush1.msra.mxu0 %v1512
      %1632 = vmatprep.subr.mxu0 %v1515
      %1633 = vmatpush1.msra.mxu0 %v1514
      %1634 = vmatprep.subr.mxu0 %v1517
      %1635 = vmatpush1.msra.mxu0 %v1516
      %1636 = vmatprep.subr.mxu0 %v1519
      %1637 = vmatpush1.msra.mxu0 %v1518
      %1638 = vmatprep.subr.mxu0 %v1521
      %1639 = vmatpush1.msra.mxu0 %v1520
      %1640 = vmatprep.subr.mxu0 %v1523
      %1641 = vmatpush1.msra.mxu0 %v1522
      %1642 = vmatprep.subr.mxu0 %v1525
      %1643 = vmatpush1.msra.mxu0 %v1524
      %1644 = vmatprep.subr.mxu0 %v1594
      %1645 = vmatpush1.msra.mxu0 %v1591
      %1646 = vmatprep.subr.mxu0 0.0
      %1647 = vmatpush1.msra.mxu0 0.0
      %1648 = vmatprep.subr.mxu0 0.0
      %1649 = vmatpush1.msra.mxu0 0.0
      %1650 = vmatprep.subr.mxu0 0.0
      %1651 = vmatpush1.msra.mxu0 0.0
      %1652 = vmatprep.subr.mxu0 0.0
      %1653 = vmatpush1.msra.mxu0 0.0
      %1654 = vmatprep.subr.mxu0 0.0
      %1655 = vmatpush1.msra.mxu0 0.0
      %1656 = vmatprep.subr.mxu0 0.0
      %1657 = vmatpush1.msra.mxu0 0.0
      %1658 = vmatprep.subr.mxu0 0.0
      %1659 = vmatpush1.msra.mxu0 0.0
      %1660 = vmatprep.mubr.f32.mxu0 %v1542
      %1661 = vmatmul.mubr.f32.gmra.mrb[0].mxu0 %v1446
      %v1662 = vpop.f32.mrb[0].mxu0
      %v1663 = vadd.f32 %v1533, %v1662
      %v1664 = vpop.f32.mrb[0].mxu0
      %v1665 = vadd.f32 %v1537, %v1664
      %1666 = vmatprep.mubr.f32.mxu0 %v1545
      %1667 = vmatmul.mubr.f32.gmra.mrb[0].mxu0 %v1448
      %v1668 = vpop.f32.mrb[0].mxu0
      %v1669 = vadd.f32 %v1533, %v1668
      %v1670 = vpop.f32.mrb[0].mxu0
      %v1671 = vadd.f32 %v1537, %v1670
      %1672 = vmatprep.mubr.f32.mxu0 %v1548
      %1673 = vmatmul.mubr.f32.gmra.mrb[0].mxu0 %v1450
      %v1674 = vpop.f32.mrb[0].mxu0
      %v1675 = vadd.f32 %v1533, %v1674
      %v1676 = vpop.f32.mrb[0].mxu0
      %v1677 = vadd.f32 %v1537, %v1676
      %1678 = vmatprep.mubr.f32.mxu0 %v1551
      %1679 = vmatmul.mubr.f32.gmra.mrb[0].mxu0 %v1452
      %v1680 = vpop.f32.mrb[0].mxu0
      %v1681 = vadd.f32 %v1533, %v1680
      %v1682 = vpop.f32.mrb[0].mxu0
      %v1683 = vadd.f32 %v1537, %v1682
      %1684 = vmatprep.mubr.f32.mxu0 %v1554
      %1685 = vmatmul.mubr.f32.gmra.mrb[0].mxu0 %v1454
      %v1686 = vpop.f32.mrb[0].mxu0
      %v1687 = vadd.f32 %v1533, %v1686
      %v1688 = vpop.f32.mrb[0].mxu0
      %v1689 = vadd.f32 %v1537, %v1688
      %1690 = vmatprep.mubr.f32.mxu0 %v1557
      %1691 = vmatmul.mubr.f32.gmra.mrb[0].mxu0 %v1456
      %v1692 = vpop.f32.mrb[0].mxu0
      %v1693 = vadd.f32 %v1533, %v1692
      %v1694 = vpop.f32.mrb[0].mxu0
      %v1695 = vadd.f32 %v1537, %v1694
      %1696 = vmatprep.mubr.f32.mxu0 %v1560
      %1697 = vmatmul.mubr.f32.gmra.mrb[0].mxu0 %v1458
      %v1698 = vpop.f32.mrb[0].mxu0
      %v1699 = vadd.f32 %v1533, %v1698
      %v1700 = vpop.f32.mrb[0].mxu0
      %v1701 = vadd.f32 %v1537, %v1700
      %1702 = vmatprep.mubr.f32.mxu0 %v1563
      %1703 = vmatmul.mubr.f32.gmra.mrb[0].mxu0 %v1460
      %v1704 = vpop.f32.mrb[0].mxu0
      %v1705 = vadd.f32 %v1533, %v1704
      %v1706 = vpop.f32.mrb[0].mxu0
      %v1707 = vadd.f32 %v1537, %v1706
      %1708 = vmatprep.mubr.f32.mxu0 %v1566
      %1709 = vmatmul.mubr.f32.gmra.mrb[0].mxu0 %v1462
      %v1710 = vpop.f32.mrb[0].mxu0
      %v1711 = vadd.f32 %v1533, %v1710
      %v1712 = vpop.f32.mrb[0].mxu0
      %v1713 = vadd.f32 %v1537, %v1712
      %1714 = vmatprep.mubr.f32.mxu0 %v1569
      %1715 = vmatmul.mubr.f32.gmra.mrb[0].mxu0 %v1464
      %v1716 = vpop.f32.mrb[0].mxu0
      %v1717 = vadd.f32 %v1533, %v1716
      %v1718 = vpop.f32.mrb[0].mxu0
      %v1719 = vadd.f32 %v1537, %v1718
      %1720 = vmatprep.mubr.f32.mxu0 %v1572
      %1721 = vmatmul.mubr.f32.gmra.mrb[0].mxu0 %v1466
      %v1722 = vpop.f32.mrb[0].mxu0
      %v1723 = vadd.f32 %v1533, %v1722
      %v1724 = vpop.f32.mrb[0].mxu0
      %v1725 = vadd.f32 %v1537, %v1724
      %1726 = vmatprep.mubr.f32.mxu0 %v1575
      %1727 = vmatmul.mubr.f32.gmra.mrb[0].mxu0 %v1468
      %v1728 = vpop.f32.mrb[0].mxu0
      %v1729 = vadd.f32 %v1533, %v1728
      %v1730 = vpop.f32.mrb[0].mxu0
      %v1731 = vadd.f32 %v1537, %v1730
      %1732 = vmatprep.mubr.f32.mxu0 %v1578
      %1733 = vmatmul.mubr.f32.gmra.mrb[0].mxu0 %v1470
      %v1734 = vpop.f32.mrb[0].mxu0
      %v1735 = vadd.f32 %v1533, %v1734
      %v1736 = vpop.f32.mrb[0].mxu0
      %v1737 = vadd.f32 %v1537, %v1736
      %1738 = vmatprep.mubr.f32.mxu0 %v1581
      %1739 = vmatmul.mubr.f32.gmra.mrb[0].mxu0 %v1472
      %v1740 = vpop.f32.mrb[0].mxu0
      %v1741 = vadd.f32 %v1533, %v1740
      %v1742 = vpop.f32.mrb[0].mxu0
      %v1743 = vadd.f32 %v1537, %v1742
      %1744 = vmatprep.mubr.f32.mxu0 %v1584
      %1745 = vmatmul.mubr.f32.gmra.mrb[0].mxu0 %v1474
      %v1746 = vpop.f32.mrb[0].mxu0
      %v1747 = vadd.f32 %v1533, %v1746
      %v1748 = vpop.f32.mrb[0].mxu0
      %v1749 = vadd.f32 %v1537, %v1748
      %1750 = vmatprep.mubr.f32.mxu0 %v1587
      %1751 = vmatmul.mubr.f32.gmra.mrb[0].mxu0 %v1476
      %v1752 = vpop.f32.mrb[0].mxu0
      %v1753 = vadd.f32 %v1533, %v1752
      %v1754 = vpop.f32.mrb[0].mxu0
      %v1755 = vadd.f32 %v1537, %v1754
      %1756 = vdwg.mxu0
      %v1757 = vld [vmem:[%s417] sm:$0xff]
      %v1758 = vld [vmem:[%s417 + $0x8] sm:$0xff]
      %v1759 = vld [vmem:[%s417 + $0x10] sm:$0xff]
      %v1760 = vld [vmem:[%s417 + $0x18] sm:$0xff]
      %v1761 = vld [vmem:[%s417 + $0x20] sm:$0xff]
      %v1762 = vld [vmem:[%s417 + $0x28] sm:$0xff]
      %v1763 = vld [vmem:[%s417 + $0x30] sm:$0xff]
      %v1764 = vld [vmem:[%s417 + $0x38] sm:$0xff]
      %v1765 = vld [vmem:[%s417 + $0x40] sm:$0xff]
      %v1766 = vld [vmem:[%s417 + $0x48] sm:$0xff]
      %v1767 = vld [vmem:[%s417 + $0x50] sm:$0xff]
      %v1768 = vld [vmem:[%s417 + $0x58] sm:$0xff]
      %v1769 = vld [vmem:[%s417 + $0x60] sm:$0xff]
      %v1770 = vld [vmem:[%s417 + $0x68] sm:$0xff]
      %v1771 = vld [vmem:[%s417 + $0x70] sm:$0xff]
      %v1772 = vld [vmem:[%s417 + $0x78] sm:$0xff]
      %v1773 = vmul.f32 %v1665, 0.5
      %v1774 = vmul.f32 %v1671, 0.5
      %v1775 = vmul.f32 %v1677, 0.5
      %v1776 = vmul.f32 %v1683, 0.5
      %v1777 = vmul.f32 %v1689, 0.5
      %v1778 = vmul.f32 %v1695, 0.5
      %v1779 = vmul.f32 %v1701, 0.5
      %v1780 = vmul.f32 %v1707, 0.5
      %v1781 = vmul.f32 %v1713, 0.5
      %v1782 = vmul.f32 %v1719, 0.5
      %v1783 = vmul.f32 %v1725, 0.5
      %v1784 = vmul.f32 %v1731, 0.5
      %v1785 = vmul.f32 %v1737, 0.5
      %v1786 = vmul.f32 %v1743, 0.5
      %v1787 = vmul.f32 %v1749, 0.5
      %v1788 = vmul.f32 %v1755, 0.5
      %v1789 = vmul.f32 %v1773, 1.442695
      %v1790 = vpow.pop %v1789
      %v1791 = vmul.f32 %v1774, 1.442695
      %v1792 = vpow.pop %v1791
      %v1793 = vmul.f32 %v1775, 1.442695
      %v1794 = vpow.pop %v1793
      %v1795 = vmul.f32 %v1776, 1.442695
      %v1796 = vpow.pop %v1795
      %v1797 = vmul.f32 %v1777, 1.442695
      %v1798 = vpow.pop %v1797
      %v1799 = vmul.f32 %v1778, 1.442695
      %v1800 = vpow.pop %v1799
      %v1801 = vmul.f32 %v1779, 1.442695
      %v1802 = vpow.pop %v1801
      %v1803 = vmul.f32 %v1780, 1.442695
      %v1804 = vpow.pop %v1803
      %v1805 = vmul.f32 %v1781, 1.442695
      %v1806 = vpow.pop %v1805
      %v1807 = vmul.f32 %v1782, 1.442695
      %v1808 = vpow.pop %v1807
      %v1809 = vmul.f32 %v1783, 1.442695
      %v1810 = vpow.pop %v1809
      %v1811 = vmul.f32 %v1784, 1.442695
      %v1812 = vpow.pop %v1811
      %v1813 = vmul.f32 %v1785, 1.442695
      %v1814 = vpow.pop %v1813
      %v1815 = vmul.f32 %v1786, 1.442695
      %v1816 = vpow.pop %v1815
      %v1817 = vmul.f32 %v1787, 1.442695
      %v1818 = vpow.pop %v1817
      %v1819 = vmul.f32 %v1788, 1.442695
      %v1820 = vpow.pop %v1819
      %v1821 = vmul.f32 %v1757, %v1790
      %v1822 = vmul.f32 %v1758, %v1792
      %v1823 = vmul.f32 %v1759, %v1794
      %v1824 = vmul.f32 %v1760, %v1796
      %v1825 = vmul.f32 %v1761, %v1798
      %v1826 = vmul.f32 %v1762, %v1800
      %v1827 = vmul.f32 %v1763, %v1802
      %v1828 = vmul.f32 %v1764, %v1804
      %v1829 = vmul.f32 %v1765, %v1806
      %v1830 = vmul.f32 %v1766, %v1808
      %v1831 = vmul.f32 %v1767, %v1810
      %v1832 = vmul.f32 %v1768, %v1812
      %v1833 = vmul.f32 %v1769, %v1814
      %v1834 = vmul.f32 %v1770, %v1816
      %v1835 = vmul.f32 %v1771, %v1818
      %v1836 = vmul.f32 %v1772, %v1820
      %v1837 = vadd.f32 %v1663, %v1821
      %v1838 = vadd.f32 %v1669, %v1822
      %v1839 = vadd.f32 %v1675, %v1823
      %v1840 = vadd.f32 %v1681, %v1824
      %v1841 = vadd.f32 %v1687, %v1825
      %v1842 = vadd.f32 %v1693, %v1826
      %v1843 = vadd.f32 %v1699, %v1827
      %v1844 = vadd.f32 %v1705, %v1828
      %v1845 = vadd.f32 %v1711, %v1829
      %v1846 = vadd.f32 %v1717, %v1830
      %v1847 = vadd.f32 %v1723, %v1831
      %v1848 = vadd.f32 %v1729, %v1832
      %v1849 = vadd.f32 %v1735, %v1833
      %v1850 = vadd.f32 %v1741, %v1834
      %v1851 = vadd.f32 %v1747, %v1835
      %v1852 = vadd.f32 %v1753, %v1836
      %v1853 = vld [vmem:[%s6] sm:$0xff]
      %v1854 = vld [vmem:[%s6 + $0x8] sm:$0xff]
      %v1855 = vld [vmem:[%s6 + $0x10] sm:$0xff]
      %v1856 = vld [vmem:[%s6 + $0x18] sm:$0xff]
      %v1857 = vld [vmem:[%s6 + $0x20] sm:$0xff]
      %v1858 = vld [vmem:[%s6 + $0x28] sm:$0xff]
      %v1859 = vld [vmem:[%s6 + $0x30] sm:$0xff]
      %v1860 = vld [vmem:[%s6 + $0x38] sm:$0xff]
      %v1861 = vld [vmem:[%s6 + $0x40] sm:$0xff]
      %v1862 = vld [vmem:[%s6 + $0x48] sm:$0xff]
      %v1863 = vld [vmem:[%s6 + $0x50] sm:$0xff]
      %v1864 = vld [vmem:[%s6 + $0x58] sm:$0xff]
      %v1865 = vld [vmem:[%s6 + $0x60] sm:$0xff]
      %v1866 = vld [vmem:[%s6 + $0x68] sm:$0xff]
      %v1867 = vld [vmem:[%s6 + $0x70] sm:$0xff]
      %v1868 = vld [vmem:[%s6 + $0x78] sm:$0xff]
      %v1869 = vld [vmem:[%s6 + $0x80] sm:$0xff]
      %v1870 = vld [vmem:[%s6 + $0x88] sm:$0xff]
      %v1871 = vld [vmem:[%s6 + $0x90] sm:$0xff]
      %v1872 = vld [vmem:[%s6 + $0x98] sm:$0xff]
      %v1873 = vld [vmem:[%s6 + $0xa0] sm:$0xff]
      %v1874 = vld [vmem:[%s6 + $0xa8] sm:$0xff]
      %v1875 = vld [vmem:[%s6 + $0xb0] sm:$0xff]
      %v1876 = vld [vmem:[%s6 + $0xb8] sm:$0xff]
      %v1877 = vld [vmem:[%s6 + $0xc0] sm:$0xff]
      %v1878 = vld [vmem:[%s6 + $0xc8] sm:$0xff]
      %v1879 = vld [vmem:[%s6 + $0xd0] sm:$0xff]
      %v1880 = vld [vmem:[%s6 + $0xd8] sm:$0xff]
      %v1881 = vld [vmem:[%s6 + $0xe0] sm:$0xff]
      %v1882 = vld [vmem:[%s6 + $0xe8] sm:$0xff]
      %v1883 = vld [vmem:[%s6 + $0xf0] sm:$0xff]
      %v1884 = vld [vmem:[%s6 + $0xf8] sm:$0xff]
      %v1885 = vld [vmem:[%s7] sm:$0x3]
      %v1887 = vlaneseq
      %v1888 = vshrl.u32 %v1887, 7
      %v1889 = vsub.s32 0, %v1888
      %v1890 = vrot.slane %v1885, %v1889
      %v1891 = vlaneseq
      %v1892 = vshrl.u32 %v1891, 7
      %v1893 = vsub.s32 1, %v1892
      %v1894 = vrot.slane %v1885, %v1893
      %1897 = vmatprep.subr.mxu0 %v1854
      %1898 = vmatpush1.msra.mxu0 %v1853
      %1899 = vmatprep.subr.mxu0 %v1856
      %1900 = vmatpush1.msra.mxu0 %v1855
      %1901 = vmatprep.subr.mxu0 %v1858
      %1902 = vmatpush1.msra.mxu0 %v1857
      %1903 = vmatprep.subr.mxu0 %v1860
      %1904 = vmatpush1.msra.mxu0 %v1859
      %1905 = vmatprep.subr.mxu0 %v1862
      %1906 = vmatpush1.msra.mxu0 %v1861
      %1907 = vmatprep.subr.mxu0 %v1864
      %1908 = vmatpush1.msra.mxu0 %v1863
      %1909 = vmatprep.subr.mxu0 %v1866
      %1910 = vmatpush1.msra.mxu0 %v1865
      %1911 = vmatprep.subr.mxu0 %v1868
      %1912 = vmatpush1.msra.mxu0 %v1867
      %1913 = vmatprep.subr.mxu0 %v1870
      %1914 = vmatpush1.msra.mxu0 %v1869
      %1915 = vmatprep.subr.mxu0 %v1872
      %1916 = vmatpush1.msra.mxu0 %v1871
      %1917 = vmatprep.subr.mxu0 %v1874
      %1918 = vmatpush1.msra.mxu0 %v1873
      %1919 = vmatprep.subr.mxu0 %v1876
      %1920 = vmatpush1.msra.mxu0 %v1875
      %1921 = vmatprep.subr.mxu0 %v1878
      %1922 = vmatpush1.msra.mxu0 %v1877
      %1923 = vmatprep.subr.mxu0 %v1880
      %1924 = vmatpush1.msra.mxu0 %v1879
      %1925 = vmatprep.subr.mxu0 %v1882
      %1926 = vmatpush1.msra.mxu0 %v1881
      %1927 = vmatprep.subr.mxu0 %v1884
      %1928 = vmatpush1.msra.mxu0 %v1883
      %1929 = vmatprep.subr.mxu0 0.0
      %1930 = vmatpush1.msra.mxu0 0.0
      %1931 = vmatprep.subr.mxu0 0.0
      %1932 = vmatpush1.msra.mxu0 0.0
      %1933 = vmatprep.subr.mxu0 0.0
      %1934 = vmatpush1.msra.mxu0 0.0
      %1935 = vmatprep.subr.mxu0 0.0
      %1936 = vmatpush1.msra.mxu0 0.0
      %1937 = vmatprep.subr.mxu0 0.0
      %1938 = vmatpush1.msra.mxu0 0.0
      %1939 = vmatprep.subr.mxu0 0.0
      %1940 = vmatpush1.msra.mxu0 0.0
      %1941 = vmatprep.subr.mxu0 0.0
      %1942 = vmatpush1.msra.mxu0 0.0
      %1943 = vmatprep.subr.mxu0 0.0
      %1944 = vmatpush1.msra.mxu0 0.0
      %1945 = vmatprep.subr.mxu0 0.0
      %1946 = vmatpush1.msra.mxu0 0.0
      %1947 = vmatprep.subr.mxu0 0.0
      %1948 = vmatpush1.msra.mxu0 0.0
      %1949 = vmatprep.subr.mxu0 0.0
      %1950 = vmatpush1.msra.mxu0 0.0
      %1951 = vmatprep.subr.mxu0 0.0
      %1952 = vmatpush1.msra.mxu0 0.0
      %1953 = vmatprep.subr.mxu0 0.0
      %1954 = vmatpush1.msra.mxu0 0.0
      %1955 = vmatprep.subr.mxu0 0.0
      %1956 = vmatpush1.msra.mxu0 0.0
      %1957 = vmatprep.subr.mxu0 0.0
      %1958 = vmatpush1.msra.mxu0 0.0
      %1959 = vmatprep.subr.mxu0 0.0
      %1960 = vmatpush1.msra.mxu0 0.0
      %1961 = vmatprep.mubr.f32.mxu0 0.0
      %1962 = vmatmul.mubr.f32.gmra.mrb[0].mxu0 %v1837
      %v1963 = vpop.f32.mrb[0].mxu0
      %v1964 = vadd.f32 %v1890, %v1963
      %v1965 = vpop.f32.mrb[0].mxu0
      %v1966 = vadd.f32 %v1894, %v1965
      %1967 = vmatprep.mubr.f32.mxu0 0.0
      %1968 = vmatmul.mubr.f32.gmra.mrb[0].mxu0 %v1838
      %v1969 = vpop.f32.mrb[0].mxu0
      %v1970 = vadd.f32 %v1890, %v1969
      %v1971 = vpop.f32.mrb[0].mxu0
      %v1972 = vadd.f32 %v1894, %v1971
      %1973 = vmatprep.mubr.f32.mxu0 0.0
      %1974 = vmatmul.mubr.f32.gmra.mrb[0].mxu0 %v1839
      %v1975 = vpop.f32.mrb[0].mxu0
      %v1976 = vadd.f32 %v1890, %v1975
      %v1977 = vpop.f32.mrb[0].mxu0
      %v1978 = vadd.f32 %v1894, %v1977
      %1979 = vmatprep.mubr.f32.mxu0 0.0
      %1980 = vmatmul.mubr.f32.gmra.mrb[0].mxu0 %v1840
      %v1981 = vpop.f32.mrb[0].mxu0
      %v1982 = vadd.f32 %v1890, %v1981
      %v1983 = vpop.f32.mrb[0].mxu0
      %v1984 = vadd.f32 %v1894, %v1983
      %1985 = vmatprep.mubr.f32.mxu0 0.0
      %1986 = vmatmul.mubr.f32.gmra.mrb[0].mxu0 %v1841
      %v1987 = vpop.f32.mrb[0].mxu0
      %v1988 = vadd.f32 %v1890, %v1987
      %v1989 = vpop.f32.mrb[0].mxu0
      %v1990 = vadd.f32 %v1894, %v1989
      %1991 = vmatprep.mubr.f32.mxu0 0.0
      %1992 = vmatmul.mubr.f32.gmra.mrb[0].mxu0 %v1842
      %v1993 = vpop.f32.mrb[0].mxu0
      %v1994 = vadd.f32 %v1890, %v1993
      %v1995 = vpop.f32.mrb[0].mxu0
      %v1996 = vadd.f32 %v1894, %v1995
      %1997 = vmatprep.mubr.f32.mxu0 0.0
      %1998 = vmatmul.mubr.f32.gmra.mrb[0].mxu0 %v1843
      %v1999 = vpop.f32.mrb[0].mxu0
      %v2000 = vadd.f32 %v1890, %v1999
      %v2001 = vpop.f32.mrb[0].mxu0
      %v2002 = vadd.f32 %v1894, %v2001
      %2003 = vmatprep.mubr.f32.mxu0 0.0
      %2004 = vmatmul.mubr.f32.gmra.mrb[0].mxu0 %v1844
      %v2005 = vpop.f32.mrb[0].mxu0
      %v2006 = vadd.f32 %v1890, %v2005
      %v2007 = vpop.f32.mrb[0].mxu0
      %v2008 = vadd.f32 %v1894, %v2007
      %2009 = vmatprep.mubr.f32.mxu0 0.0
      %2010 = vmatmul.mubr.f32.gmra.mrb[0].mxu0 %v1845
      %v2011 = vpop.f32.mrb[0].mxu0
      %v2012 = vadd.f32 %v1890, %v2011
      %v2013 = vpop.f32.mrb[0].mxu0
      %v2014 = vadd.f32 %v1894, %v2013
      %2015 = vmatprep.mubr.f32.mxu0 0.0
      %2016 = vmatmul.mubr.f32.gmra.mrb[0].mxu0 %v1846
      %v2017 = vpop.f32.mrb[0].mxu0
      %v2018 = vadd.f32 %v1890, %v2017
      %v2019 = vpop.f32.mrb[0].mxu0
      %v2020 = vadd.f32 %v1894, %v2019
      %2021 = vmatprep.mubr.f32.mxu0 0.0
      %2022 = vmatmul.mubr.f32.gmra.mrb[0].mxu0 %v1847
      %v2023 = vpop.f32.mrb[0].mxu0
      %v2024 = vadd.f32 %v1890, %v2023
      %v2025 = vpop.f32.mrb[0].mxu0
      %v2026 = vadd.f32 %v1894, %v2025
      %2027 = vmatprep.mubr.f32.mxu0 0.0
      %2028 = vmatmul.mubr.f32.gmra.mrb[0].mxu0 %v1848
      %v2029 = vpop.f32.mrb[0].mxu0
      %v2030 = vadd.f32 %v1890, %v2029
      %v2031 = vpop.f32.mrb[0].mxu0
      %v2032 = vadd.f32 %v1894, %v2031
      %2033 = vmatprep.mubr.f32.mxu0 0.0
      %2034 = vmatmul.mubr.f32.gmra.mrb[0].mxu0 %v1849
      %v2035 = vpop.f32.mrb[0].mxu0
      %v2036 = vadd.f32 %v1890, %v2035
      %v2037 = vpop.f32.mrb[0].mxu0
      %v2038 = vadd.f32 %v1894, %v2037
      %2039 = vmatprep.mubr.f32.mxu0 0.0
      %2040 = vmatmul.mubr.f32.gmra.mrb[0].mxu0 %v1850
      %v2041 = vpop.f32.mrb[0].mxu0
      %v2042 = vadd.f32 %v1890, %v2041
      %v2043 = vpop.f32.mrb[0].mxu0
      %v2044 = vadd.f32 %v1894, %v2043
      %2045 = vmatprep.mubr.f32.mxu0 0.0
      %2046 = vmatmul.mubr.f32.gmra.mrb[0].mxu0 %v1851
      %v2047 = vpop.f32.mrb[0].mxu0
      %v2048 = vadd.f32 %v1890, %v2047
      %v2049 = vpop.f32.mrb[0].mxu0
      %v2050 = vadd.f32 %v1894, %v2049
      %2051 = vmatprep.mubr.f32.mxu0 0.0
      %2052 = vmatmul.mubr.f32.gmra.mrb[0].mxu0 %v1852
      %v2053 = vpop.f32.mrb[0].mxu0
      %v2054 = vadd.f32 %v1890, %v2053
      %v2055 = vpop.f32.mrb[0].mxu0
      %v2056 = vadd.f32 %v1894, %v2055
      %2057 = vdwg.mxu0
      %v2058 = vmax.f32 %v1964, 0.0
      %v2059 = vmax.f32 %v1966, 0.0
      %v2060 = vmax.f32 %v1970, 0.0
      %v2061 = vmax.f32 %v1972, 0.0
      %v2062 = vmax.f32 %v1976, 0.0
      %v2063 = vmax.f32 %v1978, 0.0
      %v2064 = vmax.f32 %v1982, 0.0
      %v2065 = vmax.f32 %v1984, 0.0
      %v2066 = vmax.f32 %v1988, 0.0
      %v2067 = vmax.f32 %v1990, 0.0
      %v2068 = vmax.f32 %v1994, 0.0
      %v2069 = vmax.f32 %v1996, 0.0
      %v2070 = vmax.f32 %v2000, 0.0
      %v2071 = vmax.f32 %v2002, 0.0
      %v2072 = vmax.f32 %v2006, 0.0
      %v2073 = vmax.f32 %v2008, 0.0
      %v2074 = vmax.f32 %v2012, 0.0
      %v2075 = vmax.f32 %v2014, 0.0
      %v2076 = vmax.f32 %v2018, 0.0
      %v2077 = vmax.f32 %v2020, 0.0
      %v2078 = vmax.f32 %v2024, 0.0
      %v2079 = vmax.f32 %v2026, 0.0
      %v2080 = vmax.f32 %v2030, 0.0
      %v2081 = vmax.f32 %v2032, 0.0
      %v2082 = vmax.f32 %v2036, 0.0
      %v2083 = vmax.f32 %v2038, 0.0
      %v2084 = vmax.f32 %v2042, 0.0
      %v2085 = vmax.f32 %v2044, 0.0
      %v2086 = vmax.f32 %v2048, 0.0
      %v2087 = vmax.f32 %v2050, 0.0
      %v2088 = vmax.f32 %v2054, 0.0
      %v2089 = vmax.f32 %v2056, 0.0
      %v2090 = vld [vmem:[%s8] sm:$0xff]
      %v2091 = vld [vmem:[%s8 + $0x8] sm:$0xff]
      %v2092 = vld [vmem:[%s8 + $0x10] sm:$0xff]
      %v2093 = vld [vmem:[%s8 + $0x18] sm:$0xff]
      %v2094 = vld [vmem:[%s8 + $0x20] sm:$0xff]
      %v2095 = vld [vmem:[%s8 + $0x28] sm:$0xff]
      %v2096 = vld [vmem:[%s8 + $0x30] sm:$0xff]
      %v2097 = vld [vmem:[%s8 + $0x38] sm:$0xff]
      %v2098 = vld [vmem:[%s8 + $0x40] sm:$0xff]
      %v2099 = vld [vmem:[%s8 + $0x48] sm:$0xff]
      %v2100 = vld [vmem:[%s8 + $0x50] sm:$0xff]
      %v2101 = vld [vmem:[%s8 + $0x58] sm:$0xff]
      %v2102 = vld [vmem:[%s8 + $0x60] sm:$0xff]
      %v2103 = vld [vmem:[%s8 + $0x68] sm:$0xff]
      %v2104 = vld [vmem:[%s8 + $0x70] sm:$0xff]
      %v2105 = vld [vmem:[%s8 + $0x78] sm:$0xff]
      %v2106 = vld [vmem:[%s8 + $0x80] sm:$0xff]
      %v2107 = vld [vmem:[%s8 + $0x88] sm:$0xff]
      %v2108 = vld [vmem:[%s8 + $0x90] sm:$0xff]
      %v2109 = vld [vmem:[%s8 + $0x98] sm:$0xff]
      %v2110 = vld [vmem:[%s8 + $0xa0] sm:$0xff]
      %v2111 = vld [vmem:[%s8 + $0xa8] sm:$0xff]
      %v2112 = vld [vmem:[%s8 + $0xb0] sm:$0xff]
      %v2113 = vld [vmem:[%s8 + $0xb8] sm:$0xff]
      %v2114 = vld [vmem:[%s8 + $0xc0] sm:$0xff]
      %v2115 = vld [vmem:[%s8 + $0xc8] sm:$0xff]
      %v2116 = vld [vmem:[%s8 + $0xd0] sm:$0xff]
      %v2117 = vld [vmem:[%s8 + $0xd8] sm:$0xff]
      %v2118 = vld [vmem:[%s8 + $0xe0] sm:$0xff]
      %v2119 = vld [vmem:[%s8 + $0xe8] sm:$0xff]
      %v2120 = vld [vmem:[%s8 + $0xf0] sm:$0xff]
      %v2121 = vld [vmem:[%s8 + $0xf8] sm:$0xff]
      %v2122 = vld [vmem:[%s8 + $0x100] sm:$0xff]
      %v2123 = vld [vmem:[%s8 + $0x108] sm:$0xff]
      %v2124 = vld [vmem:[%s8 + $0x110] sm:$0xff]
      %v2125 = vld [vmem:[%s8 + $0x118] sm:$0xff]
      %v2126 = vld [vmem:[%s8 + $0x120] sm:$0xff]
      %v2127 = vld [vmem:[%s8 + $0x128] sm:$0xff]
      %v2128 = vld [vmem:[%s8 + $0x130] sm:$0xff]
      %v2129 = vld [vmem:[%s8 + $0x138] sm:$0xff]
      %v2130 = vld [vmem:[%s8 + $0x140] sm:$0xff]
      %v2131 = vld [vmem:[%s8 + $0x148] sm:$0xff]
      %v2132 = vld [vmem:[%s8 + $0x150] sm:$0xff]
      %v2133 = vld [vmem:[%s8 + $0x158] sm:$0xff]
      %v2134 = vld [vmem:[%s8 + $0x160] sm:$0xff]
      %v2135 = vld [vmem:[%s8 + $0x168] sm:$0xff]
      %v2136 = vld [vmem:[%s8 + $0x170] sm:$0xff]
      %v2137 = vld [vmem:[%s8 + $0x178] sm:$0xff]
      %v2138 = vld [vmem:[%s8 + $0x180] sm:$0xff]
      %v2139 = vld [vmem:[%s8 + $0x188] sm:$0xff]
      %v2140 = vld [vmem:[%s8 + $0x190] sm:$0xff]
      %v2141 = vld [vmem:[%s8 + $0x198] sm:$0xff]
      %v2142 = vld [vmem:[%s8 + $0x1a0] sm:$0xff]
      %v2143 = vld [vmem:[%s8 + $0x1a8] sm:$0xff]
      %v2144 = vld [vmem:[%s8 + $0x1b0] sm:$0xff]
      %v2145 = vld [vmem:[%s8 + $0x1b8] sm:$0xff]
      %v2146 = vld [vmem:[%s8 + $0x1c0] sm:$0xff]
      %v2147 = vld [vmem:[%s8 + $0x1c8] sm:$0xff]
      %v2148 = vld [vmem:[%s8 + $0x1d0] sm:$0xff]
      %v2149 = vld [vmem:[%s8 + $0x1d8] sm:$0xff]
      %v2150 = vld [vmem:[%s8 + $0x1e0] sm:$0xff]
      %v2151 = vld [vmem:[%s8 + $0x1e8] sm:$0xff]
      %v2152 = vld [vmem:[%s8 + $0x1f0] sm:$0xff]
      %v2153 = vld [vmem:[%s8 + $0x1f8] sm:$0xff]
      %v2154 = vld [vmem:[%s8 + $0x200] sm:$0xff]
      %v2155 = vld [vmem:[%s8 + $0x208] sm:$0xff]
      %v2156 = vld [vmem:[%s8 + $0x210] sm:$0xff]
      %v2157 = vld [vmem:[%s8 + $0x218] sm:$0xff]
      %v2158 = vld [vmem:[%s8 + $0x220] sm:$0xff]
      %v2159 = vld [vmem:[%s8 + $0x228] sm:$0xff]
      %v2160 = vld [vmem:[%s8 + $0x230] sm:$0xff]
      %v2161 = vld [vmem:[%s8 + $0x238] sm:$0xff]
      %v2162 = vld [vmem:[%s8 + $0x240] sm:$0xff]
      %v2163 = vld [vmem:[%s8 + $0x248] sm:$0xff]
      %v2164 = vld [vmem:[%s8 + $0x250] sm:$0xff]
      %v2165 = vld [vmem:[%s8 + $0x258] sm:$0xff]
      %v2166 = vld [vmem:[%s8 + $0x260] sm:$0xff]
      %v2167 = vld [vmem:[%s8 + $0x268] sm:$0xff]
      %v2168 = vld [vmem:[%s8 + $0x270] sm:$0xff]
      %v2169 = vld [vmem:[%s8 + $0x278] sm:$0xff]
      %v2170 = vld [vmem:[%s8 + $0x280] sm:$0xff]
      %v2171 = vld [vmem:[%s8 + $0x288] sm:$0xff]
      %v2172 = vld [vmem:[%s8 + $0x290] sm:$0xff]
      %v2173 = vld [vmem:[%s8 + $0x298] sm:$0xff]
      %v2174 = vld [vmem:[%s8 + $0x2a0] sm:$0xff]
      %v2175 = vld [vmem:[%s8 + $0x2a8] sm:$0xff]
      %v2176 = vld [vmem:[%s8 + $0x2b0] sm:$0xff]
      %v2177 = vld [vmem:[%s8 + $0x2b8] sm:$0xff]
      %v2178 = vld [vmem:[%s8 + $0x2c0] sm:$0xff]
      %v2179 = vld [vmem:[%s8 + $0x2c8] sm:$0xff]
      %v2180 = vld [vmem:[%s8 + $0x2d0] sm:$0xff]
      %v2181 = vld [vmem:[%s8 + $0x2d8] sm:$0xff]
      %v2182 = vld [vmem:[%s8 + $0x2e0] sm:$0xff]
      %v2183 = vld [vmem:[%s8 + $0x2e8] sm:$0xff]
      %v2184 = vld [vmem:[%s8 + $0x2f0] sm:$0xff]
      %v2185 = vld [vmem:[%s8 + $0x2f8] sm:$0xff]
      %v2186 = vld [vmem:[%s8 + $0x300] sm:$0xff]
      %v2187 = vld [vmem:[%s8 + $0x308] sm:$0xff]
      %v2188 = vld [vmem:[%s8 + $0x310] sm:$0xff]
      %v2189 = vld [vmem:[%s8 + $0x318] sm:$0xff]
      %v2190 = vld [vmem:[%s8 + $0x320] sm:$0xff]
      %v2191 = vld [vmem:[%s8 + $0x328] sm:$0xff]
      %v2192 = vld [vmem:[%s8 + $0x330] sm:$0xff]
      %v2193 = vld [vmem:[%s8 + $0x338] sm:$0xff]
      %v2194 = vld [vmem:[%s8 + $0x340] sm:$0xff]
      %v2195 = vld [vmem:[%s8 + $0x348] sm:$0xff]
      %v2196 = vld [vmem:[%s8 + $0x350] sm:$0xff]
      %v2197 = vld [vmem:[%s8 + $0x358] sm:$0xff]
      %v2198 = vld [vmem:[%s8 + $0x360] sm:$0xff]
      %v2199 = vld [vmem:[%s8 + $0x368] sm:$0xff]
      %v2200 = vld [vmem:[%s8 + $0x370] sm:$0xff]
      %v2201 = vld [vmem:[%s8 + $0x378] sm:$0xff]
      %v2202 = vld [vmem:[%s8 + $0x380] sm:$0xff]
      %v2203 = vld [vmem:[%s8 + $0x388] sm:$0xff]
      %v2204 = vld [vmem:[%s8 + $0x390] sm:$0xff]
      %v2205 = vld [vmem:[%s8 + $0x398] sm:$0xff]
      %v2206 = vld [vmem:[%s8 + $0x3a0] sm:$0xff]
      %v2207 = vld [vmem:[%s8 + $0x3a8] sm:$0xff]
      %v2208 = vld [vmem:[%s8 + $0x3b0] sm:$0xff]
      %v2209 = vld [vmem:[%s8 + $0x3b8] sm:$0xff]
      %v2210 = vld [vmem:[%s8 + $0x3c0] sm:$0xff]
      %v2211 = vld [vmem:[%s8 + $0x3c8] sm:$0xff]
      %v2212 = vld [vmem:[%s8 + $0x3d0] sm:$0xff]
      %v2213 = vld [vmem:[%s8 + $0x3d8] sm:$0xff]
      %v2214 = vld [vmem:[%s8 + $0x3e0] sm:$0xff]
      %v2215 = vld [vmem:[%s8 + $0x3e8] sm:$0xff]
      %v2216 = vld [vmem:[%s8 + $0x3f0] sm:$0xff]
      %v2217 = vld [vmem:[%s8 + $0x3f8] sm:$0xff]
      %v2218 = vld [vmem:[%s8 + $0x400] sm:$0xff]
      %v2219 = vld [vmem:[%s8 + $0x408] sm:$0xff]
      %v2220 = vld [vmem:[%s8 + $0x410] sm:$0xff]
      %v2221 = vld [vmem:[%s8 + $0x418] sm:$0xff]
      %v2222 = vld [vmem:[%s8 + $0x420] sm:$0xff]
      %v2223 = vld [vmem:[%s8 + $0x428] sm:$0xff]
      %v2224 = vld [vmem:[%s8 + $0x430] sm:$0xff]
      %v2225 = vld [vmem:[%s8 + $0x438] sm:$0xff]
      %v2226 = vld [vmem:[%s8 + $0x440] sm:$0xff]
      %v2227 = vld [vmem:[%s8 + $0x448] sm:$0xff]
      %v2228 = vld [vmem:[%s8 + $0x450] sm:$0xff]
      %v2229 = vld [vmem:[%s8 + $0x458] sm:$0xff]
      %v2230 = vld [vmem:[%s8 + $0x460] sm:$0xff]
      %v2231 = vld [vmem:[%s8 + $0x468] sm:$0xff]
      %v2232 = vld [vmem:[%s8 + $0x470] sm:$0xff]
      %v2233 = vld [vmem:[%s8 + $0x478] sm:$0xff]
      %v2234 = vld [vmem:[%s8 + $0x480] sm:$0xff]
      %v2235 = vld [vmem:[%s8 + $0x488] sm:$0xff]
      %v2236 = vld [vmem:[%s8 + $0x490] sm:$0xff]
      %v2237 = vld [vmem:[%s8 + $0x498] sm:$0xff]
      %v2238 = vld [vmem:[%s8 + $0x4a0] sm:$0xff]
      %v2239 = vld [vmem:[%s8 + $0x4a8] sm:$0xff]
      %v2240 = vld [vmem:[%s8 + $0x4b0] sm:$0xff]
      %v2241 = vld [vmem:[%s8 + $0x4b8] sm:$0xff]
      %v2242 = vld [vmem:[%s8 + $0x4c0] sm:$0xff]
      %v2243 = vld [vmem:[%s8 + $0x4c8] sm:$0xff]
      %v2244 = vld [vmem:[%s8 + $0x4d0] sm:$0xff]
      %v2245 = vld [vmem:[%s8 + $0x4d8] sm:$0xff]
      %v2246 = vld [vmem:[%s8 + $0x4e0] sm:$0xff]
      %v2247 = vld [vmem:[%s8 + $0x4e8] sm:$0xff]
      %v2248 = vld [vmem:[%s8 + $0x4f0] sm:$0xff]
      %v2249 = vld [vmem:[%s8 + $0x4f8] sm:$0xff]
      %v2250 = vld [vmem:[%s8 + $0x500] sm:$0xff]
      %v2251 = vld [vmem:[%s8 + $0x508] sm:$0xff]
      %v2252 = vld [vmem:[%s8 + $0x510] sm:$0xff]
      %v2253 = vld [vmem:[%s8 + $0x518] sm:$0xff]
      %v2254 = vld [vmem:[%s8 + $0x520] sm:$0xff]
      %v2255 = vld [vmem:[%s8 + $0x528] sm:$0xff]
      %v2256 = vld [vmem:[%s8 + $0x530] sm:$0xff]
      %v2257 = vld [vmem:[%s8 + $0x538] sm:$0xff]
      %v2258 = vld [vmem:[%s8 + $0x540] sm:$0xf]
      %v2259 = vld [vmem:[%s8 + $0x548] sm:$0xf]
      %v2260 = vld [vmem:[%s8 + $0x550] sm:$0xf]
      %v2261 = vld [vmem:[%s8 + $0x558] sm:$0xf]
      %v2262 = vld [vmem:[%s8 + $0x560] sm:$0xf]
      %v2263 = vld [vmem:[%s8 + $0x568] sm:$0xf]
      %v2264 = vld [vmem:[%s8 + $0x570] sm:$0xf]
      %v2265 = vld [vmem:[%s9] sm:$0x7f]
      %v2267 = vlaneseq
      %v2268 = vshrl.u32 %v2267, 7
      %v2269 = vsub.s32 0, %v2268
      %v2270 = vrot.slane %v2265, %v2269
      %v2271 = vlaneseq
      %v2272 = vshrl.u32 %v2271, 7
      %v2273 = vsub.s32 1, %v2272
      %v2274 = vrot.slane %v2265, %v2273
      %v2275 = vlaneseq
      %v2276 = vshrl.u32 %v2275, 7
      %v2277 = vsub.s32 2, %v2276
      %v2278 = vrot.slane %v2265, %v2277
      %v2279 = vlaneseq
      %v2280 = vshrl.u32 %v2279, 7
      %v2281 = vsub.s32 3, %v2280
      %v2282 = vrot.slane %v2265, %v2281
      %v2283 = vlaneseq
      %v2284 = vshrl.u32 %v2283, 7
      %v2285 = vsub.s32 4, %v2284
      %v2286 = vrot.slane %v2265, %v2285
      %v2287 = vlaneseq
      %v2288 = vshrl.u32 %v2287, 7
      %v2289 = vsub.s32 5, %v2288
      %v2290 = vrot.slane %v2265, %v2289
      %v2291 = vlaneseq
      %v2292 = vshrl.u32 %v2291, 7
      %v2293 = vsub.s32 6, %v2292
      %v2294 = vrot.slane %v2265, %v2293
      %v2303 = vsel %vm1540, %v2059, 0
      %v2306 = vsel %vm1540, %v2061, 0
      %v2309 = vsel %vm1540, %v2063, 0
      %v2312 = vsel %vm1540, %v2065, 0
      %v2315 = vsel %vm1540, %v2067, 0
      %v2318 = vsel %vm1540, %v2069, 0
      %v2321 = vsel %vm1540, %v2071, 0
      %v2324 = vsel %vm1540, %v2073, 0
      %v2327 = vsel %vm1540, %v2075, 0
      %v2330 = vsel %vm1540, %v2077, 0
      %v2333 = vsel %vm1540, %v2079, 0
      %v2336 = vsel %vm1540, %v2081, 0
      %v2339 = vsel %vm1540, %v2083, 0
      %v2342 = vsel %vm1540, %v2085, 0
      %v2345 = vsel %vm1540, %v2087, 0
      %v2348 = vsel %vm1540, %v2089, 0
      %v2351 = vsel %vm1589, %v2258, 0
      %v2354 = vsel %vm1589, %v2259, 0
      %v2357 = vsel %vm1589, %v2260, 0
      %v2360 = vsel %vm1589, %v2261, 0
      %v2363 = vsel %vm1589, %v2262, 0
      %v2366 = vsel %vm1589, %v2263, 0
      %v2369 = vsel %vm1589, %v2264, 0
      %2371 = vmatprep.subr.mxu0 %v2091
      %2372 = vmatpush1.msra.mxu0 %v2090
      %2373 = vmatprep.subr.mxu0 %v2098
      %2374 = vmatpush1.msra.mxu0 %v2097
      %2375 = vmatprep.subr.mxu0 %v2105
      %2376 = vmatpush1.msra.mxu0 %v2104
      %2377 = vmatprep.subr.mxu0 %v2112
      %2378 = vmatpush1.msra.mxu0 %v2111
      %2379 = vmatprep.subr.mxu0 %v2119
      %2380 = vmatpush1.msra.mxu0 %v2118
      %2381 = vmatprep.subr.mxu0 %v2126
      %2382 = vmatpush1.msra.mxu0 %v2125
      %2383 = vmatprep.subr.mxu0 %v2133
      %2384 = vmatpush1.msra.mxu0 %v2132
      %2385 = vmatprep.subr.mxu0 %v2140
      %2386 = vmatpush1.msra.mxu0 %v2139
      %2387 = vmatprep.subr.mxu0 %v2147
      %2388 = vmatpush1.msra.mxu0 %v2146
      %2389 = vmatprep.subr.mxu0 %v2154
      %2390 = vmatpush1.msra.mxu0 %v2153
      %2391 = vmatprep.subr.mxu0 %v2161
      %2392 = vmatpush1.msra.mxu0 %v2160
      %2393 = vmatprep.subr.mxu0 %v2168
      %2394 = vmatpush1.msra.mxu0 %v2167
      %2395 = vmatprep.subr.mxu0 %v2175
      %2396 = vmatpush1.msra.mxu0 %v2174
      %2397 = vmatprep.subr.mxu0 %v2182
      %2398 = vmatpush1.msra.mxu0 %v2181
      %2399 = vmatprep.subr.mxu0 %v2189
      %2400 = vmatpush1.msra.mxu0 %v2188
      %2401 = vmatprep.subr.mxu0 %v2196
      %2402 = vmatpush1.msra.mxu0 %v2195
      %2403 = vmatprep.subr.mxu0 %v2203
      %2404 = vmatpush1.msra.mxu0 %v2202
      %2405 = vmatprep.subr.mxu0 %v2210
      %2406 = vmatpush1.msra.mxu0 %v2209
      %2407 = vmatprep.subr.mxu0 %v2217
      %2408 = vmatpush1.msra.mxu0 %v2216
      %2409 = vmatprep.subr.mxu0 %v2224
      %2410 = vmatpush1.msra.mxu0 %v2223
      %2411 = vmatprep.subr.mxu0 %v2231
      %2412 = vmatpush1.msra.mxu0 %v2230
      %2413 = vmatprep.subr.mxu0 %v2238
      %2414 = vmatpush1.msra.mxu0 %v2237
      %2415 = vmatprep.subr.mxu0 %v2245
      %2416 = vmatpush1.msra.mxu0 %v2244
      %2417 = vmatprep.subr.mxu0 %v2252
      %2418 = vmatpush1.msra.mxu0 %v2251
      %2419 = vmatprep.subr.mxu0 %v2354
      %2420 = vmatpush1.msra.mxu0 %v2351
      %2421 = vmatprep.subr.mxu0 0.0
      %2422 = vmatpush1.msra.mxu0 0.0
      %2423 = vmatprep.subr.mxu0 0.0
      %2424 = vmatpush1.msra.mxu0 0.0
      %2425 = vmatprep.subr.mxu0 0.0
      %2426 = vmatpush1.msra.mxu0 0.0
      %2427 = vmatprep.subr.mxu0 0.0
      %2428 = vmatpush1.msra.mxu0 0.0
      %2429 = vmatprep.subr.mxu0 0.0
      %2430 = vmatpush1.msra.mxu0 0.0
      %2431 = vmatprep.subr.mxu0 0.0
      %2432 = vmatpush1.msra.mxu0 0.0
      %2433 = vmatprep.subr.mxu0 0.0
      %2434 = vmatpush1.msra.mxu0 0.0
      %2435 = vmatprep.mubr.f32.mxu0 %v2303
      %2436 = vmatmul.mubr.f32.gmra.mrb[0].mxu0 %v2058
      %v2437 = vpop.f32.mrb[0].mxu0
      %v2438 = vadd.f32 %v2270, %v2437
      %v2439 = vpop.f32.mrb[0].mxu0
      %v2440 = vadd.f32 %v2274, %v2439
      %2441 = vmatprep.mubr.f32.mxu0 %v2306
      %2442 = vmatmul.mubr.f32.gmra.mrb[0].mxu0 %v2060
      %v2443 = vpop.f32.mrb[0].mxu0
      %v2444 = vadd.f32 %v2270, %v2443
      %v2445 = vpop.f32.mrb[0].mxu0
      %v2446 = vadd.f32 %v2274, %v2445
      %2447 = vmatprep.mubr.f32.mxu0 %v2309
      %2448 = vmatmul.mubr.f32.gmra.mrb[0].mxu0 %v2062
      %v2449 = vpop.f32.mrb[0].mxu0
      %v2450 = vadd.f32 %v2270, %v2449
      %v2451 = vpop.f32.mrb[0].mxu0
      %v2452 = vadd.f32 %v2274, %v2451
      %2453 = vmatprep.mubr.f32.mxu0 %v2312
      %2454 = vmatmul.mubr.f32.gmra.mrb[0].mxu0 %v2064
      %v2455 = vpop.f32.mrb[0].mxu0
      %v2456 = vadd.f32 %v2270, %v2455
      %v2457 = vpop.f32.mrb[0].mxu0
      %v2458 = vadd.f32 %v2274, %v2457
      %2459 = vmatprep.mubr.f32.mxu0 %v2315
      %2460 = vmatmul.mubr.f32.gmra.mrb[0].mxu0 %v2066
      %v2461 = vpop.f32.mrb[0].mxu0
      %v2462 = vadd.f32 %v2270, %v2461
      %v2463 = vpop.f32.mrb[0].mxu0
      %v2464 = vadd.f32 %v2274, %v2463
      %2465 = vmatprep.mubr.f32.mxu0 %v2318
      %2466 = vmatmul.mubr.f32.gmra.mrb[0].mxu0 %v2068
      %v2467 = vpop.f32.mrb[0].mxu0
      %v2468 = vadd.f32 %v2270, %v2467
      %v2469 = vpop.f32.mrb[0].mxu0
      %v2470 = vadd.f32 %v2274, %v2469
      %2471 = vmatprep.mubr.f32.mxu0 %v2321
      %2472 = vmatmul.mubr.f32.gmra.mrb[0].mxu0 %v2070
      %v2473 = vpop.f32.mrb[0].mxu0
      %v2474 = vadd.f32 %v2270, %v2473
      %v2475 = vpop.f32.mrb[0].mxu0
      %v2476 = vadd.f32 %v2274, %v2475
      %2477 = vmatprep.mubr.f32.mxu0 %v2324
      %2478 = vmatmul.mubr.f32.gmra.mrb[0].mxu0 %v2072
      %v2479 = vpop.f32.mrb[0].mxu0
      %v2480 = vadd.f32 %v2270, %v2479
      %v2481 = vpop.f32.mrb[0].mxu0
      %v2482 = vadd.f32 %v2274, %v2481
      %2483 = vmatprep.mubr.f32.mxu0 %v2327
      %2484 = vmatmul.mubr.f32.gmra.mrb[0].mxu0 %v2074
      %v2485 = vpop.f32.mrb[0].mxu0
      %v2486 = vadd.f32 %v2270, %v2485
      %v2487 = vpop.f32.mrb[0].mxu0
      %v2488 = vadd.f32 %v2274, %v2487
      %2489 = vmatprep.mubr.f32.mxu0 %v2330
      %2490 = vmatmul.mubr.f32.gmra.mrb[0].mxu0 %v2076
      %v2491 = vpop.f32.mrb[0].mxu0
      %v2492 = vadd.f32 %v2270, %v2491
      %v2493 = vpop.f32.mrb[0].mxu0
      %v2494 = vadd.f32 %v2274, %v2493
      %2495 = vmatprep.mubr.f32.mxu0 %v2333
      %2496 = vmatmul.mubr.f32.gmra.mrb[0].mxu0 %v2078
      %v2497 = vpop.f32.mrb[0].mxu0
      %v2498 = vadd.f32 %v2270, %v2497
      %v2499 = vpop.f32.mrb[0].mxu0
      %v2500 = vadd.f32 %v2274, %v2499
      %2501 = vmatprep.mubr.f32.mxu0 %v2336
      %2502 = vmatmul.mubr.f32.gmra.mrb[0].mxu0 %v2080
      %v2503 = vpop.f32.mrb[0].mxu0
      %v2504 = vadd.f32 %v2270, %v2503
      %v2505 = vpop.f32.mrb[0].mxu0
      %v2506 = vadd.f32 %v2274, %v2505
      %2507 = vmatprep.mubr.f32.mxu0 %v2339
      %2508 = vmatmul.mubr.f32.gmra.mrb[0].mxu0 %v2082
      %v2509 = vpop.f32.mrb[0].mxu0
      %v2510 = vadd.f32 %v2270, %v2509
      %v2511 = vpop.f32.mrb[0].mxu0
      %v2512 = vadd.f32 %v2274, %v2511
      %2513 = vmatprep.mubr.f32.mxu0 %v2342
      %2514 = vmatmul.mubr.f32.gmra.mrb[0].mxu0 %v2084
      %v2515 = vpop.f32.mrb[0].mxu0
      %v2516 = vadd.f32 %v2270, %v2515
      %v2517 = vpop.f32.mrb[0].mxu0
      %v2518 = vadd.f32 %v2274, %v2517
      %2519 = vmatprep.mubr.f32.mxu0 %v2345
      %2520 = vmatmul.mubr.f32.gmra.mrb[0].mxu0 %v2086
      %v2521 = vpop.f32.mrb[0].mxu0
      %v2522 = vadd.f32 %v2270, %v2521
      %v2523 = vpop.f32.mrb[0].mxu0
      %v2524 = vadd.f32 %v2274, %v2523
      %2525 = vmatprep.mubr.f32.mxu0 %v2348
      %2526 = vmatmul.mubr.f32.gmra.mrb[0].mxu0 %v2088
      %v2527 = vpop.f32.mrb[0].mxu0
      %v2528 = vadd.f32 %v2270, %v2527
      %v2529 = vpop.f32.mrb[0].mxu0
      %v2530 = vadd.f32 %v2274, %v2529
      %2531 = vdwg.mxu0
      %2532 = vmatprep.subr.mxu0 %v2093
      %2533 = vmatpush1.msra.mxu0 %v2092
      %2534 = vmatprep.subr.mxu0 %v2100
      %2535 = vmatpush1.msra.mxu0 %v2099
      %2536 = vmatprep.subr.mxu0 %v2107
      %2537 = vmatpush1.msra.mxu0 %v2106
      %2538 = vmatprep.subr.mxu0 %v2114
      %2539 = vmatpush1.msra.mxu0 %v2113
      %2540 = vmatprep.subr.mxu0 %v2121
      %2541 = vmatpush1.msra.mxu0 %v2120
      %2542 = vmatprep.subr.mxu0 %v2128
      %2543 = vmatpush1.msra.mxu0 %v2127
      %2544 = vmatprep.subr.mxu0 %v2135
      %2545 = vmatpush1.msra.mxu0 %v2134
      %2546 = vmatprep.subr.mxu0 %v2142
      %2547 = vmatpush1.msra.mxu0 %v2141
      %2548 = vmatprep.subr.mxu0 %v2149
      %2549 = vmatpush1.msra.mxu0 %v2148
      %2550 = vmatprep.subr.mxu0 %v2156
      %2551 = vmatpush1.msra.mxu0 %v2155
      %2552 = vmatprep.subr.mxu0 %v2163
      %2553 = vmatpush1.msra.mxu0 %v2162
      %2554 = vmatprep.subr.mxu0 %v2170
      %2555 = vmatpush1.msra.mxu0 %v2169
      %2556 = vmatprep.subr.mxu0 %v2177
      %2557 = vmatpush1.msra.mxu0 %v2176
      %2558 = vmatprep.subr.mxu0 %v2184
      %2559 = vmatpush1.msra.mxu0 %v2183
      %2560 = vmatprep.subr.mxu0 %v2191
      %2561 = vmatpush1.msra.mxu0 %v2190
      %2562 = vmatprep.subr.mxu0 %v2198
      %2563 = vmatpush1.msra.mxu0 %v2197
      %2564 = vmatprep.subr.mxu0 %v2205
      %2565 = vmatpush1.msra.mxu0 %v2204
      %2566 = vmatprep.subr.mxu0 %v2212
      %2567 = vmatpush1.msra.mxu0 %v2211
      %2568 = vmatprep.subr.mxu0 %v2219
      %2569 = vmatpush1.msra.mxu0 %v2218
      %2570 = vmatprep.subr.mxu0 %v2226
      %2571 = vmatpush1.msra.mxu0 %v2225
      %2572 = vmatprep.subr.mxu0 %v2233
      %2573 = vmatpush1.msra.mxu0 %v2232
      %2574 = vmatprep.subr.mxu0 %v2240
      %2575 = vmatpush1.msra.mxu0 %v2239
      %2576 = vmatprep.subr.mxu0 %v2247
      %2577 = vmatpush1.msra.mxu0 %v2246
      %2578 = vmatprep.subr.mxu0 %v2254
      %2579 = vmatpush1.msra.mxu0 %v2253
      %2580 = vmatprep.subr.mxu0 %v2360
      %2581 = vmatpush1.msra.mxu0 %v2357
      %2582 = vmatprep.subr.mxu0 0.0
      %2583 = vmatpush1.msra.mxu0 0.0
      %2584 = vmatprep.subr.mxu0 0.0
      %2585 = vmatpush1.msra.mxu0 0.0
      %2586 = vmatprep.subr.mxu0 0.0
      %2587 = vmatpush1.msra.mxu0 0.0
      %2588 = vmatprep.subr.mxu0 0.0
      %2589 = vmatpush1.msra.mxu0 0.0
      %2590 = vmatprep.subr.mxu0 0.0
      %2591 = vmatpush1.msra.mxu0 0.0
      %2592 = vmatprep.subr.mxu0 0.0
      %2593 = vmatpush1.msra.mxu0 0.0
      %2594 = vmatprep.subr.mxu0 0.0
      %2595 = vmatpush1.msra.mxu0 0.0
      %2596 = vmatprep.mubr.f32.mxu0 %v2303
      %2597 = vmatmul.mubr.f32.gmra.mrb[0].mxu0 %v2058
      %v2598 = vpop.f32.mrb[0].mxu0
      %v2599 = vadd.f32 %v2278, %v2598
      %v2600 = vpop.f32.mrb[0].mxu0
      %v2601 = vadd.f32 %v2282, %v2600
      %2602 = vmatprep.mubr.f32.mxu0 %v2306
      %2603 = vmatmul.mubr.f32.gmra.mrb[0].mxu0 %v2060
      %v2604 = vpop.f32.mrb[0].mxu0
      %v2605 = vadd.f32 %v2278, %v2604
      %v2606 = vpop.f32.mrb[0].mxu0
      %v2607 = vadd.f32 %v2282, %v2606
      %2608 = vmatprep.mubr.f32.mxu0 %v2309
      %2609 = vmatmul.mubr.f32.gmra.mrb[0].mxu0 %v2062
      %v2610 = vpop.f32.mrb[0].mxu0
      %v2611 = vadd.f32 %v2278, %v2610
      %v2612 = vpop.f32.mrb[0].mxu0
      %v2613 = vadd.f32 %v2282, %v2612
      %2614 = vmatprep.mubr.f32.mxu0 %v2312
      %2615 = vmatmul.mubr.f32.gmra.mrb[0].mxu0 %v2064
      %v2616 = vpop.f32.mrb[0].mxu0
      %v2617 = vadd.f32 %v2278, %v2616
      %v2618 = vpop.f32.mrb[0].mxu0
      %v2619 = vadd.f32 %v2282, %v2618
      %2620 = vmatprep.mubr.f32.mxu0 %v2315
      %2621 = vmatmul.mubr.f32.gmra.mrb[0].mxu0 %v2066
      %v2622 = vpop.f32.mrb[0].mxu0
      %v2623 = vadd.f32 %v2278, %v2622
      %v2624 = vpop.f32.mrb[0].mxu0
      %v2625 = vadd.f32 %v2282, %v2624
      %2626 = vmatprep.mubr.f32.mxu0 %v2318
      %2627 = vmatmul.mubr.f32.gmra.mrb[0].mxu0 %v2068
      %v2628 = vpop.f32.mrb[0].mxu0
      %v2629 = vadd.f32 %v2278, %v2628
      %v2630 = vpop.f32.mrb[0].mxu0
      %v2631 = vadd.f32 %v2282, %v2630
      %2632 = vmatprep.mubr.f32.mxu0 %v2321
      %2633 = vmatmul.mubr.f32.gmra.mrb[0].mxu0 %v2070
      %v2634 = vpop.f32.mrb[0].mxu0
      %v2635 = vadd.f32 %v2278, %v2634
      %v2636 = vpop.f32.mrb[0].mxu0
      %v2637 = vadd.f32 %v2282, %v2636
      %2638 = vmatprep.mubr.f32.mxu0 %v2324
      %2639 = vmatmul.mubr.f32.gmra.mrb[0].mxu0 %v2072
      %v2640 = vpop.f32.mrb[0].mxu0
      %v2641 = vadd.f32 %v2278, %v2640
      %v2642 = vpop.f32.mrb[0].mxu0
      %v2643 = vadd.f32 %v2282, %v2642
      %2644 = vmatprep.mubr.f32.mxu0 %v2327
      %2645 = vmatmul.mubr.f32.gmra.mrb[0].mxu0 %v2074
      %v2646 = vpop.f32.mrb[0].mxu0
      %v2647 = vadd.f32 %v2278, %v2646
      %v2648 = vpop.f32.mrb[0].mxu0
      %v2649 = vadd.f32 %v2282, %v2648
      %2650 = vmatprep.mubr.f32.mxu0 %v2330
      %2651 = vmatmul.mubr.f32.gmra.mrb[0].mxu0 %v2076
      %v2652 = vpop.f32.mrb[0].mxu0
      %v2653 = vadd.f32 %v2278, %v2652
      %v2654 = vpop.f32.mrb[0].mxu0
      %v2655 = vadd.f32 %v2282, %v2654
      %2656 = vmatprep.mubr.f32.mxu0 %v2333
      %2657 = vmatmul.mubr.f32.gmra.mrb[0].mxu0 %v2078
      %v2658 = vpop.f32.mrb[0].mxu0
      %v2659 = vadd.f32 %v2278, %v2658
      %v2660 = vpop.f32.mrb[0].mxu0
      %v2661 = vadd.f32 %v2282, %v2660
      %2662 = vmatprep.mubr.f32.mxu0 %v2336
      %2663 = vmatmul.mubr.f32.gmra.mrb[0].mxu0 %v2080
      %v2664 = vpop.f32.mrb[0].mxu0
      %v2665 = vadd.f32 %v2278, %v2664
      %v2666 = vpop.f32.mrb[0].mxu0
      %v2667 = vadd.f32 %v2282, %v2666
      %2668 = vmatprep.mubr.f32.mxu0 %v2339
      %2669 = vmatmul.mubr.f32.gmra.mrb[0].mxu0 %v2082
      %v2670 = vpop.f32.mrb[0].mxu0
      %v2671 = vadd.f32 %v2278, %v2670
      %v2672 = vpop.f32.mrb[0].mxu0
      %v2673 = vadd.f32 %v2282, %v2672
      %2674 = vmatprep.mubr.f32.mxu0 %v2342
      %2675 = vmatmul.mubr.f32.gmra.mrb[0].mxu0 %v2084
      %v2676 = vpop.f32.mrb[0].mxu0
      %v2677 = vadd.f32 %v2278, %v2676
      %v2678 = vpop.f32.mrb[0].mxu0
      %v2679 = vadd.f32 %v2282, %v2678
      %2680 = vmatprep.mubr.f32.mxu0 %v2345
      %2681 = vmatmul.mubr.f32.gmra.mrb[0].mxu0 %v2086
      %v2682 = vpop.f32.mrb[0].mxu0
      %v2683 = vadd.f32 %v2278, %v2682
      %v2684 = vpop.f32.mrb[0].mxu0
      %v2685 = vadd.f32 %v2282, %v2684
      %2686 = vmatprep.mubr.f32.mxu0 %v2348
      %2687 = vmatmul.mubr.f32.gmra.mrb[0].mxu0 %v2088
      %v2688 = vpop.f32.mrb[0].mxu0
      %v2689 = vadd.f32 %v2278, %v2688
      %v2690 = vpop.f32.mrb[0].mxu0
      %v2691 = vadd.f32 %v2282, %v2690
      %2692 = vdwg.mxu0
      %2693 = vmatprep.subr.mxu0 %v2095
      %2694 = vmatpush1.msra.mxu0 %v2094
      %2695 = vmatprep.subr.mxu0 %v2102
      %2696 = vmatpush1.msra.mxu0 %v2101
      %2697 = vmatprep.subr.mxu0 %v2109
      %2698 = vmatpush1.msra.mxu0 %v2108
      %2699 = vmatprep.subr.mxu0 %v2116
      %2700 = vmatpush1.msra.mxu0 %v2115
      %2701 = vmatprep.subr.mxu0 %v2123
      %2702 = vmatpush1.msra.mxu0 %v2122
      %2703 = vmatprep.subr.mxu0 %v2130
      %2704 = vmatpush1.msra.mxu0 %v2129
      %2705 = vmatprep.subr.mxu0 %v2137
      %2706 = vmatpush1.msra.mxu0 %v2136
      %2707 = vmatprep.subr.mxu0 %v2144
      %2708 = vmatpush1.msra.mxu0 %v2143
      %2709 = vmatprep.subr.mxu0 %v2151
      %2710 = vmatpush1.msra.mxu0 %v2150
      %2711 = vmatprep.subr.mxu0 %v2158
      %2712 = vmatpush1.msra.mxu0 %v2157
      %2713 = vmatprep.subr.mxu0 %v2165
      %2714 = vmatpush1.msra.mxu0 %v2164
      %2715 = vmatprep.subr.mxu0 %v2172
      %2716 = vmatpush1.msra.mxu0 %v2171
      %2717 = vmatprep.subr.mxu0 %v2179
      %2718 = vmatpush1.msra.mxu0 %v2178
      %2719 = vmatprep.subr.mxu0 %v2186
      %2720 = vmatpush1.msra.mxu0 %v2185
      %2721 = vmatprep.subr.mxu0 %v2193
      %2722 = vmatpush1.msra.mxu0 %v2192
      %2723 = vmatprep.subr.mxu0 %v2200
      %2724 = vmatpush1.msra.mxu0 %v2199
      %2725 = vmatprep.subr.mxu0 %v2207
      %2726 = vmatpush1.msra.mxu0 %v2206
      %2727 = vmatprep.subr.mxu0 %v2214
      %2728 = vmatpush1.msra.mxu0 %v2213
      %2729 = vmatprep.subr.mxu0 %v2221
      %2730 = vmatpush1.msra.mxu0 %v2220
      %2731 = vmatprep.subr.mxu0 %v2228
      %2732 = vmatpush1.msra.mxu0 %v2227
      %2733 = vmatprep.subr.mxu0 %v2235
      %2734 = vmatpush1.msra.mxu0 %v2234
      %2735 = vmatprep.subr.mxu0 %v2242
      %2736 = vmatpush1.msra.mxu0 %v2241
      %2737 = vmatprep.subr.mxu0 %v2249
      %2738 = vmatpush1.msra.mxu0 %v2248
      %2739 = vmatprep.subr.mxu0 %v2256
      %2740 = vmatpush1.msra.mxu0 %v2255
      %2741 = vmatprep.subr.mxu0 %v2366
      %2742 = vmatpush1.msra.mxu0 %v2363
      %2743 = vmatprep.subr.mxu0 0.0
      %2744 = vmatpush1.msra.mxu0 0.0
      %2745 = vmatprep.subr.mxu0 0.0
      %2746 = vmatpush1.msra.mxu0 0.0
      %2747 = vmatprep.subr.mxu0 0.0
      %2748 = vmatpush1.msra.mxu0 0.0
      %2749 = vmatprep.subr.mxu0 0.0
      %2750 = vmatpush1.msra.mxu0 0.0
      %2751 = vmatprep.subr.mxu0 0.0
      %2752 = vmatpush1.msra.mxu0 0.0
      %2753 = vmatprep.subr.mxu0 0.0
      %2754 = vmatpush1.msra.mxu0 0.0
      %2755 = vmatprep.subr.mxu0 0.0
      %2756 = vmatpush1.msra.mxu0 0.0
      %2757 = vmatprep.mubr.f32.mxu0 %v2303
      %2758 = vmatmul.mubr.f32.gmra.mrb[0].mxu0 %v2058
      %v2759 = vpop.f32.mrb[0].mxu0
      %v2760 = vadd.f32 %v2286, %v2759
      %v2761 = vpop.f32.mrb[0].mxu0
      %v2762 = vadd.f32 %v2290, %v2761
      %2763 = vmatprep.mubr.f32.mxu0 %v2306
      %2764 = vmatmul.mubr.f32.gmra.mrb[0].mxu0 %v2060
      %v2765 = vpop.f32.mrb[0].mxu0
      %v2766 = vadd.f32 %v2286, %v2765
      %v2767 = vpop.f32.mrb[0].mxu0
      %v2768 = vadd.f32 %v2290, %v2767
      %2769 = vmatprep.mubr.f32.mxu0 %v2309
      %2770 = vmatmul.mubr.f32.gmra.mrb[0].mxu0 %v2062
      %v2771 = vpop.f32.mrb[0].mxu0
      %v2772 = vadd.f32 %v2286, %v2771
      %v2773 = vpop.f32.mrb[0].mxu0
      %v2774 = vadd.f32 %v2290, %v2773
      %2775 = vmatprep.mubr.f32.mxu0 %v2312
      %2776 = vmatmul.mubr.f32.gmra.mrb[0].mxu0 %v2064
      %v2777 = vpop.f32.mrb[0].mxu0
      %v2778 = vadd.f32 %v2286, %v2777
      %v2779 = vpop.f32.mrb[0].mxu0
      %v2780 = vadd.f32 %v2290, %v2779
      %2781 = vmatprep.mubr.f32.mxu0 %v2315
      %2782 = vmatmul.mubr.f32.gmra.mrb[0].mxu0 %v2066
      %v2783 = vpop.f32.mrb[0].mxu0
      %v2784 = vadd.f32 %v2286, %v2783
      %v2785 = vpop.f32.mrb[0].mxu0
      %v2786 = vadd.f32 %v2290, %v2785
      %2787 = vmatprep.mubr.f32.mxu0 %v2318
      %2788 = vmatmul.mubr.f32.gmra.mrb[0].mxu0 %v2068
      %v2789 = vpop.f32.mrb[0].mxu0
      %v2790 = vadd.f32 %v2286, %v2789
      %v2791 = vpop.f32.mrb[0].mxu0
      %v2792 = vadd.f32 %v2290, %v2791
      %2793 = vmatprep.mubr.f32.mxu0 %v2321
      %2794 = vmatmul.mubr.f32.gmra.mrb[0].mxu0 %v2070
      %v2795 = vpop.f32.mrb[0].mxu0
      %v2796 = vadd.f32 %v2286, %v2795
      %v2797 = vpop.f32.mrb[0].mxu0
      %v2798 = vadd.f32 %v2290, %v2797
      %2799 = vmatprep.mubr.f32.mxu0 %v2324
      %2800 = vmatmul.mubr.f32.gmra.mrb[0].mxu0 %v2072
      %v2801 = vpop.f32.mrb[0].mxu0
      %v2802 = vadd.f32 %v2286, %v2801
      %v2803 = vpop.f32.mrb[0].mxu0
      %v2804 = vadd.f32 %v2290, %v2803
      %2805 = vmatprep.mubr.f32.mxu0 %v2327
      %2806 = vmatmul.mubr.f32.gmra.mrb[0].mxu0 %v2074
      %v2807 = vpop.f32.mrb[0].mxu0
      %v2808 = vadd.f32 %v2286, %v2807
      %v2809 = vpop.f32.mrb[0].mxu0
      %v2810 = vadd.f32 %v2290, %v2809
      %2811 = vmatprep.mubr.f32.mxu0 %v2330
      %2812 = vmatmul.mubr.f32.gmra.mrb[0].mxu0 %v2076
      %v2813 = vpop.f32.mrb[0].mxu0
      %v2814 = vadd.f32 %v2286, %v2813
      %v2815 = vpop.f32.mrb[0].mxu0
      %v2816 = vadd.f32 %v2290, %v2815
      %2817 = vmatprep.mubr.f32.mxu0 %v2333
      %2818 = vmatmul.mubr.f32.gmra.mrb[0].mxu0 %v2078
      %v2819 = vpop.f32.mrb[0].mxu0
      %v2820 = vadd.f32 %v2286, %v2819
      %v2821 = vpop.f32.mrb[0].mxu0
      %v2822 = vadd.f32 %v2290, %v2821
      %2823 = vmatprep.mubr.f32.mxu0 %v2336
      %2824 = vmatmul.mubr.f32.gmra.mrb[0].mxu0 %v2080
      %v2825 = vpop.f32.mrb[0].mxu0
      %v2826 = vadd.f32 %v2286, %v2825
      %v2827 = vpop.f32.mrb[0].mxu0
      %v2828 = vadd.f32 %v2290, %v2827
      %2829 = vmatprep.mubr.f32.mxu0 %v2339
      %2830 = vmatmul.mubr.f32.gmra.mrb[0].mxu0 %v2082
      %v2831 = vpop.f32.mrb[0].mxu0
      %v2832 = vadd.f32 %v2286, %v2831
      %v2833 = vpop.f32.mrb[0].mxu0
      %v2834 = vadd.f32 %v2290, %v2833
      %2835 = vmatprep.mubr.f32.mxu0 %v2342
      %2836 = vmatmul.mubr.f32.gmra.mrb[0].mxu0 %v2084
      %v2837 = vpop.f32.mrb[0].mxu0
      %v2838 = vadd.f32 %v2286, %v2837
      %v2839 = vpop.f32.mrb[0].mxu0
      %v2840 = vadd.f32 %v2290, %v2839
      %2841 = vmatprep.mubr.f32.mxu0 %v2345
      %2842 = vmatmul.mubr.f32.gmra.mrb[0].mxu0 %v2086
      %v2843 = vpop.f32.mrb[0].mxu0
      %v2844 = vadd.f32 %v2286, %v2843
      %v2845 = vpop.f32.mrb[0].mxu0
      %v2846 = vadd.f32 %v2290, %v2845
      %2847 = vmatprep.mubr.f32.mxu0 %v2348
      %2848 = vmatmul.mubr.f32.gmra.mrb[0].mxu0 %v2088
      %v2849 = vpop.f32.mrb[0].mxu0
      %v2850 = vadd.f32 %v2286, %v2849
      %v2851 = vpop.f32.mrb[0].mxu0
      %v2852 = vadd.f32 %v2290, %v2851
      %2853 = vdwg.mxu0
      %2854 = vmatprep.subr.mxu0 0.0
      %2855 = vmatpush1.msra.mxu0 %v2096
      %2856 = vmatprep.subr.mxu0 0.0
      %2857 = vmatpush1.msra.mxu0 %v2103
      %2858 = vmatprep.subr.mxu0 0.0
      %2859 = vmatpush1.msra.mxu0 %v2110
      %2860 = vmatprep.subr.mxu0 0.0
      %2861 = vmatpush1.msra.mxu0 %v2117
      %2862 = vmatprep.subr.mxu0 0.0
      %2863 = vmatpush1.msra.mxu0 %v2124
      %2864 = vmatprep.subr.mxu0 0.0
      %2865 = vmatpush1.msra.mxu0 %v2131
      %2866 = vmatprep.subr.mxu0 0.0
      %2867 = vmatpush1.msra.mxu0 %v2138
      %2868 = vmatprep.subr.mxu0 0.0
      %2869 = vmatpush1.msra.mxu0 %v2145
      %2870 = vmatprep.subr.mxu0 0.0
      %2871 = vmatpush1.msra.mxu0 %v2152
      %2872 = vmatprep.subr.mxu0 0.0
      %2873 = vmatpush1.msra.mxu0 %v2159
      %2874 = vmatprep.subr.mxu0 0.0
      %2875 = vmatpush1.msra.mxu0 %v2166
      %2876 = vmatprep.subr.mxu0 0.0
      %2877 = vmatpush1.msra.mxu0 %v2173
      %2878 = vmatprep.subr.mxu0 0.0
      %2879 = vmatpush1.msra.mxu0 %v2180
      %2880 = vmatprep.subr.mxu0 0.0
      %2881 = vmatpush1.msra.mxu0 %v2187
      %2882 = vmatprep.subr.mxu0 0.0
      %2883 = vmatpush1.msra.mxu0 %v2194
      %2884 = vmatprep.subr.mxu0 0.0
      %2885 = vmatpush1.msra.mxu0 %v2201
      %2886 = vmatprep.subr.mxu0 0.0
      %2887 = vmatpush1.msra.mxu0 %v2208
      %2888 = vmatprep.subr.mxu0 0.0
      %2889 = vmatpush1.msra.mxu0 %v2215
      %2890 = vmatprep.subr.mxu0 0.0
      %2891 = vmatpush1.msra.mxu0 %v2222
      %2892 = vmatprep.subr.mxu0 0.0
      %2893 = vmatpush1.msra.mxu0 %v2229
      %2894 = vmatprep.subr.mxu0 0.0
      %2895 = vmatpush1.msra.mxu0 %v2236
      %2896 = vmatprep.subr.mxu0 0.0
      %2897 = vmatpush1.msra.mxu0 %v2243
      %2898 = vmatprep.subr.mxu0 0.0
      %2899 = vmatpush1.msra.mxu0 %v2250
      %2900 = vmatprep.subr.mxu0 0.0
      %2901 = vmatpush1.msra.mxu0 %v2257
      %2902 = vmatprep.subr.mxu0 0.0
      %2903 = vmatpush1.msra.mxu0 %v2369
      %2904 = vmatprep.subr.mxu0 0.0
      %2905 = vmatpush1.msra.mxu0 0.0
      %2906 = vmatprep.subr.mxu0 0.0
      %2907 = vmatpush1.msra.mxu0 0.0
      %2908 = vmatprep.subr.mxu0 0.0
      %2909 = vmatpush1.msra.mxu0 0.0
      %2910 = vmatprep.subr.mxu0 0.0
      %2911 = vmatpush1.msra.mxu0 0.0
      %2912 = vmatprep.subr.mxu0 0.0
      %2913 = vmatpush1.msra.mxu0 0.0
      %2914 = vmatprep.subr.mxu0 0.0
      %2915 = vmatpush1.msra.mxu0 0.0
      %2916 = vmatprep.subr.mxu0 0.0
      %2917 = vmatpush1.msra.mxu0 0.0
      %2918 = vmatprep.mubr.f32.mxu0 %v2303
      %2919 = vmatmul.mubr.f32.gmra.mrb[0].mxu0 %v2058
      %v2920 = vpop.f32.mrb[0].mxu0
      %v2921 = vadd.f32 %v2294, %v2920
      %v2922 = vpop.f32.mrb[0].mxu0
      %2923 = vmatprep.mubr.f32.mxu0 %v2306
      %2924 = vmatmul.mubr.f32.gmra.mrb[0].mxu0 %v2060
      %v2925 = vpop.f32.mrb[0].mxu0
      %v2926 = vadd.f32 %v2294, %v2925
      %v2927 = vpop.f32.mrb[0].mxu0
      %2928 = vmatprep.mubr.f32.mxu0 %v2309
      %2929 = vmatmul.mubr.f32.gmra.mrb[0].mxu0 %v2062
      %v2930 = vpop.f32.mrb[0].mxu0
      %v2931 = vadd.f32 %v2294, %v2930
      %v2932 = vpop.f32.mrb[0].mxu0
      %2933 = vmatprep.mubr.f32.mxu0 %v2312
      %2934 = vmatmul.mubr.f32.gmra.mrb[0].mxu0 %v2064
      %v2935 = vpop.f32.mrb[0].mxu0
      %v2936 = vadd.f32 %v2294, %v2935
      %v2937 = vpop.f32.mrb[0].mxu0
      %2938 = vmatprep.mubr.f32.mxu0 %v2315
      %2939 = vmatmul.mubr.f32.gmra.mrb[0].mxu0 %v2066
      %v2940 = vpop.f32.mrb[0].mxu0
      %v2941 = vadd.f32 %v2294, %v2940
      %v2942 = vpop.f32.mrb[0].mxu0
      %2943 = vmatprep.mubr.f32.mxu0 %v2318
      %2944 = vmatmul.mubr.f32.gmra.mrb[0].mxu0 %v2068
      %v2945 = vpop.f32.mrb[0].mxu0
      %v2946 = vadd.f32 %v2294, %v2945
      %v2947 = vpop.f32.mrb[0].mxu0
      %2948 = vmatprep.mubr.f32.mxu0 %v2321
      %2949 = vmatmul.mubr.f32.gmra.mrb[0].mxu0 %v2070
      %v2950 = vpop.f32.mrb[0].mxu0
      %v2951 = vadd.f32 %v2294, %v2950
      %v2952 = vpop.f32.mrb[0].mxu0
      %2953 = vmatprep.mubr.f32.mxu0 %v2324
      %2954 = vmatmul.mubr.f32.gmra.mrb[0].mxu0 %v2072
      %v2955 = vpop.f32.mrb[0].mxu0
      %v2956 = vadd.f32 %v2294, %v2955
      %v2957 = vpop.f32.mrb[0].mxu0
      %2958 = vmatprep.mubr.f32.mxu0 %v2327
      %2959 = vmatmul.mubr.f32.gmra.mrb[0].mxu0 %v2074
      %v2960 = vpop.f32.mrb[0].mxu0
      %v2961 = vadd.f32 %v2294, %v2960
      %v2962 = vpop.f32.mrb[0].mxu0
      %2963 = vmatprep.mubr.f32.mxu0 %v2330
      %2964 = vmatmul.mubr.f32.gmra.mrb[0].mxu0 %v2076
      %v2965 = vpop.f32.mrb[0].mxu0
      %v2966 = vadd.f32 %v2294, %v2965
      %v2967 = vpop.f32.mrb[0].mxu0
      %2968 = vmatprep.mubr.f32.mxu0 %v2333
      %2969 = vmatmul.mubr.f32.gmra.mrb[0].mxu0 %v2078
      %v2970 = vpop.f32.mrb[0].mxu0
      %v2971 = vadd.f32 %v2294, %v2970
      %v2972 = vpop.f32.mrb[0].mxu0
      %2973 = vmatprep.mubr.f32.mxu0 %v2336
      %2974 = vmatmul.mubr.f32.gmra.mrb[0].mxu0 %v2080
      %v2975 = vpop.f32.mrb[0].mxu0
      %v2976 = vadd.f32 %v2294, %v2975
      %v2977 = vpop.f32.mrb[0].mxu0
      %2978 = vmatprep.mubr.f32.mxu0 %v2339
      %2979 = vmatmul.mubr.f32.gmra.mrb[0].mxu0 %v2082
      %v2980 = vpop.f32.mrb[0].mxu0
      %v2981 = vadd.f32 %v2294, %v2980
      %v2982 = vpop.f32.mrb[0].mxu0
      %2983 = vmatprep.mubr.f32.mxu0 %v2342
      %2984 = vmatmul.mubr.f32.gmra.mrb[0].mxu0 %v2084
      %v2985 = vpop.f32.mrb[0].mxu0
      %v2986 = vadd.f32 %v2294, %v2985
      %v2987 = vpop.f32.mrb[0].mxu0
      %2988 = vmatprep.mubr.f32.mxu0 %v2345
      %2989 = vmatmul.mubr.f32.gmra.mrb[0].mxu0 %v2086
      %v2990 = vpop.f32.mrb[0].mxu0
      %v2991 = vadd.f32 %v2294, %v2990
      %v2992 = vpop.f32.mrb[0].mxu0
      %2993 = vmatprep.mubr.f32.mxu0 %v2348
      %2994 = vmatmul.mubr.f32.gmra.mrb[0].mxu0 %v2088
      %v2995 = vpop.f32.mrb[0].mxu0
      %v2996 = vadd.f32 %v2294, %v2995
      %v2997 = vpop.f32.mrb[0].mxu0
      %2998 = vdwg.mxu0
      %v2999 = vxor.u32 %v2438, 2147483648
      %v3000 = vxor.u32 %v2440, 2147483648
      %v3001 = vxor.u32 %v2599, 2147483648
      %v3002 = vxor.u32 %v2601, 2147483648
      %v3003 = vxor.u32 %v2760, 2147483648
      %v3004 = vxor.u32 %v2762, 2147483648
      %v3005 = vxor.u32 %v2921, 2147483648
      %v3006 = vxor.u32 %v2444, 2147483648
      %v3007 = vxor.u32 %v2446, 2147483648
      %v3008 = vxor.u32 %v2605, 2147483648
      %v3009 = vxor.u32 %v2607, 2147483648
      %v3010 = vxor.u32 %v2766, 2147483648
      %v3011 = vxor.u32 %v2768, 2147483648
      %v3012 = vxor.u32 %v2926, 2147483648
      %v3013 = vxor.u32 %v2450, 2147483648
      %v3014 = vxor.u32 %v2452, 2147483648
      %v3015 = vxor.u32 %v2611, 2147483648
      %v3016 = vxor.u32 %v2613, 2147483648
      %v3017 = vxor.u32 %v2772, 2147483648
      %v3018 = vxor.u32 %v2774, 2147483648
      %v3019 = vxor.u32 %v2931, 2147483648
      %v3020 = vxor.u32 %v2456, 2147483648
      %v3021 = vxor.u32 %v2458, 2147483648
      %v3022 = vxor.u32 %v2617, 2147483648
      %v3023 = vxor.u32 %v2619, 2147483648
      %v3024 = vxor.u32 %v2778, 2147483648
      %v3025 = vxor.u32 %v2780, 2147483648
      %v3026 = vxor.u32 %v2936, 2147483648
      %v3027 = vxor.u32 %v2462, 2147483648
      %v3028 = vxor.u32 %v2464, 2147483648
      %v3029 = vxor.u32 %v2623, 2147483648
      %v3030 = vxor.u32 %v2625, 2147483648
      %v3031 = vxor.u32 %v2784, 2147483648
      %v3032 = vxor.u32 %v2786, 2147483648
      %v3033 = vxor.u32 %v2941, 2147483648
      %v3034 = vxor.u32 %v2468, 2147483648
      %v3035 = vxor.u32 %v2470, 2147483648
      %v3036 = vxor.u32 %v2629, 2147483648
      %v3037 = vxor.u32 %v2631, 2147483648
      %v3038 = vxor.u32 %v2790, 2147483648
      %v3039 = vxor.u32 %v2792, 2147483648
      %v3040 = vxor.u32 %v2946, 2147483648
      %v3041 = vxor.u32 %v2474, 2147483648
      %v3042 = vxor.u32 %v2476, 2147483648
      %v3043 = vxor.u32 %v2635, 2147483648
      %v3044 = vxor.u32 %v2637, 2147483648
      %v3045 = vxor.u32 %v2796, 2147483648
      %v3046 = vxor.u32 %v2798, 2147483648
      %v3047 = vxor.u32 %v2951, 2147483648
      %v3048 = vxor.u32 %v2480, 2147483648
      %v3049 = vxor.u32 %v2482, 2147483648
      %v3050 = vxor.u32 %v2641, 2147483648
      %v3051 = vxor.u32 %v2643, 2147483648
      %v3052 = vxor.u32 %v2802, 2147483648
      %v3053 = vxor.u32 %v2804, 2147483648
      %v3054 = vxor.u32 %v2956, 2147483648
      %v3055 = vxor.u32 %v2486, 2147483648
      %v3056 = vxor.u32 %v2488, 2147483648
      %v3057 = vxor.u32 %v2647, 2147483648
      %v3058 = vxor.u32 %v2649, 2147483648
      %v3059 = vxor.u32 %v2808, 2147483648
      %v3060 = vxor.u32 %v2810, 2147483648
      %v3061 = vxor.u32 %v2961, 2147483648
      %v3062 = vxor.u32 %v2492, 2147483648
      %v3063 = vxor.u32 %v2494, 2147483648
      %v3064 = vxor.u32 %v2653, 2147483648
      %v3065 = vxor.u32 %v2655, 2147483648
      %v3066 = vxor.u32 %v2814, 2147483648
      %v3067 = vxor.u32 %v2816, 2147483648
      %v3068 = vxor.u32 %v2966, 2147483648
      %v3069 = vxor.u32 %v2498, 2147483648
      %v3070 = vxor.u32 %v2500, 2147483648
      %v3071 = vxor.u32 %v2659, 2147483648
      %v3072 = vxor.u32 %v2661, 2147483648
      %v3073 = vxor.u32 %v2820, 2147483648
      %v3074 = vxor.u32 %v2822, 2147483648
      %v3075 = vxor.u32 %v2971, 2147483648
      %v3076 = vxor.u32 %v2504, 2147483648
      %v3077 = vxor.u32 %v2506, 2147483648
      %v3078 = vxor.u32 %v2665, 2147483648
      %v3079 = vxor.u32 %v2667, 2147483648
      %v3080 = vxor.u32 %v2826, 2147483648
      %v3081 = vxor.u32 %v2828, 2147483648
      %v3082 = vxor.u32 %v2976, 2147483648
      %v3083 = vxor.u32 %v2510, 2147483648
      %v3084 = vxor.u32 %v2512, 2147483648
      %v3085 = vxor.u32 %v2671, 2147483648
      %v3086 = vxor.u32 %v2673, 2147483648
      %v3087 = vxor.u32 %v2832, 2147483648
      %v3088 = vxor.u32 %v2834, 2147483648
      %v3089 = vxor.u32 %v2981, 2147483648
      %v3090 = vxor.u32 %v2516, 2147483648
      %v3091 = vxor.u32 %v2518, 2147483648
      %v3092 = vxor.u32 %v2677, 2147483648
      %v3093 = vxor.u32 %v2679, 2147483648
      %v3094 = vxor.u32 %v2838, 2147483648
      %v3095 = vxor.u32 %v2840, 2147483648
      %v3096 = vxor.u32 %v2986, 2147483648
      %v3097 = vxor.u32 %v2522, 2147483648
      %v3098 = vxor.u32 %v2524, 2147483648
      %v3099 = vxor.u32 %v2683, 2147483648
      %v3100 = vxor.u32 %v2685, 2147483648
      %v3101 = vxor.u32 %v2844, 2147483648
      %v3102 = vxor.u32 %v2846, 2147483648
      %v3103 = vxor.u32 %v2991, 2147483648
      %v3104 = vxor.u32 %v2528, 2147483648
      %v3105 = vxor.u32 %v2530, 2147483648
      %v3106 = vxor.u32 %v2689, 2147483648
      %v3107 = vxor.u32 %v2691, 2147483648
      %v3108 = vxor.u32 %v2850, 2147483648
      %v3109 = vxor.u32 %v2852, 2147483648
      %v3110 = vxor.u32 %v2996, 2147483648
      %v3111 = vmul.f32 %v2999, 1.442695
      %v3112 = vpow.pop %v3111
      %v3113 = vmul.f32 %v3000, 1.442695
      %v3114 = vpow.pop %v3113
      %v3115 = vmul.f32 %v3001, 1.442695
      %v3116 = vpow.pop %v3115
      %v3117 = vmul.f32 %v3002, 1.442695
      %v3118 = vpow.pop %v3117
      %v3119 = vmul.f32 %v3003, 1.442695
      %v3120 = vpow.pop %v3119
      %v3121 = vmul.f32 %v3004, 1.442695
      %v3122 = vpow.pop %v3121
      %v3123 = vmul.f32 %v3005, 1.442695
      %v3124 = vpow.pop %v3123
      %v3125 = vmul.f32 %v3006, 1.442695
      %v3126 = vpow.pop %v3125
      %v3127 = vmul.f32 %v3007, 1.442695
      %v3128 = vpow.pop %v3127
      %v3129 = vmul.f32 %v3008, 1.442695
      %v3130 = vpow.pop %v3129
      %v3131 = vmul.f32 %v3009, 1.442695
      %v3132 = vpow.pop %v3131
      %v3133 = vmul.f32 %v3010, 1.442695
      %v3134 = vpow.pop %v3133
      %v3135 = vmul.f32 %v3011, 1.442695
      %v3136 = vpow.pop %v3135
      %v3137 = vmul.f32 %v3012, 1.442695
      %v3138 = vpow.pop %v3137
      %v3139 = vmul.f32 %v3013, 1.442695
      %v3140 = vpow.pop %v3139
      %v3141 = vmul.f32 %v3014, 1.442695
      %v3142 = vpow.pop %v3141
      %v3143 = vmul.f32 %v3015, 1.442695
      %v3144 = vpow.pop %v3143
      %v3145 = vmul.f32 %v3016, 1.442695
      %v3146 = vpow.pop %v3145
      %v3147 = vmul.f32 %v3017, 1.442695
      %v3148 = vpow.pop %v3147
      %v3149 = vmul.f32 %v3018, 1.442695
      %v3150 = vpow.pop %v3149
      %v3151 = vmul.f32 %v3019, 1.442695
      %v3152 = vpow.pop %v3151
      %v3153 = vmul.f32 %v3020, 1.442695
      %v3154 = vpow.pop %v3153
      %v3155 = vmul.f32 %v3021, 1.442695
      %v3156 = vpow.pop %v3155
      %v3157 = vmul.f32 %v3022, 1.442695
      %v3158 = vpow.pop %v3157
      %v3159 = vmul.f32 %v3023, 1.442695
      %v3160 = vpow.pop %v3159
      %v3161 = vmul.f32 %v3024, 1.442695
      %v3162 = vpow.pop %v3161
      %v3163 = vmul.f32 %v3025, 1.442695
      %v3164 = vpow.pop %v3163
      %v3165 = vmul.f32 %v3026, 1.442695
      %v3166 = vpow.pop %v3165
      %v3167 = vmul.f32 %v3027, 1.442695
      %v3168 = vpow.pop %v3167
      %v3169 = vmul.f32 %v3028, 1.442695
      %v3170 = vpow.pop %v3169
      %v3171 = vmul.f32 %v3029, 1.442695
      %v3172 = vpow.pop %v3171
      %v3173 = vmul.f32 %v3030, 1.442695
      %v3174 = vpow.pop %v3173
      %v3175 = vmul.f32 %v3031, 1.442695
      %v3176 = vpow.pop %v3175
      %v3177 = vmul.f32 %v3032, 1.442695
      %v3178 = vpow.pop %v3177
      %v3179 = vmul.f32 %v3033, 1.442695
      %v3180 = vpow.pop %v3179
      %v3181 = vmul.f32 %v3034, 1.442695
      %v3182 = vpow.pop %v3181
      %v3183 = vmul.f32 %v3035, 1.442695
      %v3184 = vpow.pop %v3183
      %v3185 = vmul.f32 %v3036, 1.442695
      %v3186 = vpow.pop %v3185
      %v3187 = vmul.f32 %v3037, 1.442695
      %v3188 = vpow.pop %v3187
      %v3189 = vmul.f32 %v3038, 1.442695
      %v3190 = vpow.pop %v3189
      %v3191 = vmul.f32 %v3039, 1.442695
      %v3192 = vpow.pop %v3191
      %v3193 = vmul.f32 %v3040, 1.442695
      %v3194 = vpow.pop %v3193
      %v3195 = vmul.f32 %v3041, 1.442695
      %v3196 = vpow.pop %v3195
      %v3197 = vmul.f32 %v3042, 1.442695
      %v3198 = vpow.pop %v3197
      %v3199 = vmul.f32 %v3043, 1.442695
      %v3200 = vpow.pop %v3199
      %v3201 = vmul.f32 %v3044, 1.442695
      %v3202 = vpow.pop %v3201
      %v3203 = vmul.f32 %v3045, 1.442695
      %v3204 = vpow.pop %v3203
      %v3205 = vmul.f32 %v3046, 1.442695
      %v3206 = vpow.pop %v3205
      %v3207 = vmul.f32 %v3047, 1.442695
      %v3208 = vpow.pop %v3207
      %v3209 = vmul.f32 %v3048, 1.442695
      %v3210 = vpow.pop %v3209
      %v3211 = vmul.f32 %v3049, 1.442695
      %v3212 = vpow.pop %v3211
      %v3213 = vmul.f32 %v3050, 1.442695
      %v3214 = vpow.pop %v3213
      %v3215 = vmul.f32 %v3051, 1.442695
      %v3216 = vpow.pop %v3215
      %v3217 = vmul.f32 %v3052, 1.442695
      %v3218 = vpow.pop %v3217
      %v3219 = vmul.f32 %v3053, 1.442695
      %v3220 = vpow.pop %v3219
      %v3221 = vmul.f32 %v3054, 1.442695
      %v3222 = vpow.pop %v3221
      %v3223 = vmul.f32 %v3055, 1.442695
      %v3224 = vpow.pop %v3223
      %v3225 = vmul.f32 %v3056, 1.442695
      %v3226 = vpow.pop %v3225
      %v3227 = vmul.f32 %v3057, 1.442695
      %v3228 = vpow.pop %v3227
      %v3229 = vmul.f32 %v3058, 1.442695
      %v3230 = vpow.pop %v3229
      %v3231 = vmul.f32 %v3059, 1.442695
      %v3232 = vpow.pop %v3231
      %v3233 = vmul.f32 %v3060, 1.442695
      %v3234 = vpow.pop %v3233
      %v3235 = vmul.f32 %v3061, 1.442695
      %v3236 = vpow.pop %v3235
      %v3237 = vmul.f32 %v3062, 1.442695
      %v3238 = vpow.pop %v3237
      %v3239 = vmul.f32 %v3063, 1.442695
      %v3240 = vpow.pop %v3239
      %v3241 = vmul.f32 %v3064, 1.442695
      %v3242 = vpow.pop %v3241
      %v3243 = vmul.f32 %v3065, 1.442695
      %v3244 = vpow.pop %v3243
      %v3245 = vmul.f32 %v3066, 1.442695
      %v3246 = vpow.pop %v3245
      %v3247 = vmul.f32 %v3067, 1.442695
      %v3248 = vpow.pop %v3247
      %v3249 = vmul.f32 %v3068, 1.442695
      %v3250 = vpow.pop %v3249
      %v3251 = vmul.f32 %v3069, 1.442695
      %v3252 = vpow.pop %v3251
      %v3253 = vmul.f32 %v3070, 1.442695
      %v3254 = vpow.pop %v3253
      %v3255 = vmul.f32 %v3071, 1.442695
      %v3256 = vpow.pop %v3255
      %v3257 = vmul.f32 %v3072, 1.442695
      %v3258 = vpow.pop %v3257
      %v3259 = vmul.f32 %v3073, 1.442695
      %v3260 = vpow.pop %v3259
      %v3261 = vmul.f32 %v3074, 1.442695
      %v3262 = vpow.pop %v3261
      %v3263 = vmul.f32 %v3075, 1.442695
      %v3264 = vpow.pop %v3263
      %v3265 = vmul.f32 %v3076, 1.442695
      %v3266 = vpow.pop %v3265
      %v3267 = vmul.f32 %v3077, 1.442695
      %v3268 = vpow.pop %v3267
      %v3269 = vmul.f32 %v3078, 1.442695
      %v3270 = vpow.pop %v3269
      %v3271 = vmul.f32 %v3079, 1.442695
      %v3272 = vpow.pop %v3271
      %v3273 = vmul.f32 %v3080, 1.442695
      %v3274 = vpow.pop %v3273
      %v3275 = vmul.f32 %v3081, 1.442695
      %v3276 = vpow.pop %v3275
      %v3277 = vmul.f32 %v3082, 1.442695
      %v3278 = vpow.pop %v3277
      %v3279 = vmul.f32 %v3083, 1.442695
      %v3280 = vpow.pop %v3279
      %v3281 = vmul.f32 %v3084, 1.442695
      %v3282 = vpow.pop %v3281
      %v3283 = vmul.f32 %v3085, 1.442695
      %v3284 = vpow.pop %v3283
      %v3285 = vmul.f32 %v3086, 1.442695
      %v3286 = vpow.pop %v3285
      %v3287 = vmul.f32 %v3087, 1.442695
      %v3288 = vpow.pop %v3287
      %v3289 = vmul.f32 %v3088, 1.442695
      %v3290 = vpow.pop %v3289
      %v3291 = vmul.f32 %v3089, 1.442695
      %v3292 = vpow.pop %v3291
      %v3293 = vmul.f32 %v3090, 1.442695
      %v3294 = vpow.pop %v3293
      %v3295 = vmul.f32 %v3091, 1.442695
      %v3296 = vpow.pop %v3295
      %v3297 = vmul.f32 %v3092, 1.442695
      %v3298 = vpow.pop %v3297
      %v3299 = vmul.f32 %v3093, 1.442695
      %v3300 = vpow.pop %v3299
      %v3301 = vmul.f32 %v3094, 1.442695
      %v3302 = vpow.pop %v3301
      %v3303 = vmul.f32 %v3095, 1.442695
      %v3304 = vpow.pop %v3303
      %v3305 = vmul.f32 %v3096, 1.442695
      %v3306 = vpow.pop %v3305
      %v3307 = vmul.f32 %v3097, 1.442695
      %v3308 = vpow.pop %v3307
      %v3309 = vmul.f32 %v3098, 1.442695
      %v3310 = vpow.pop %v3309
      %v3311 = vmul.f32 %v3099, 1.442695
      %v3312 = vpow.pop %v3311
      %v3313 = vmul.f32 %v3100, 1.442695
      %v3314 = vpow.pop %v3313
      %v3315 = vmul.f32 %v3101, 1.442695
      %v3316 = vpow.pop %v3315
      %v3317 = vmul.f32 %v3102, 1.442695
      %v3318 = vpow.pop %v3317
      %v3319 = vmul.f32 %v3103, 1.442695
      %v3320 = vpow.pop %v3319
      %v3321 = vmul.f32 %v3104, 1.442695
      %v3322 = vpow.pop %v3321
      %v3323 = vmul.f32 %v3105, 1.442695
      %v3324 = vpow.pop %v3323
      %v3325 = vmul.f32 %v3106, 1.442695
      %v3326 = vpow.pop %v3325
      %v3327 = vmul.f32 %v3107, 1.442695
      %v3328 = vpow.pop %v3327
      %v3329 = vmul.f32 %v3108, 1.442695
      %v3330 = vpow.pop %v3329
      %v3331 = vmul.f32 %v3109, 1.442695
      %v3332 = vpow.pop %v3331
      %v3333 = vmul.f32 %v3110, 1.442695
      %v3334 = vpow.pop %v3333
      %v3335 = vadd.f32 %v3112, 1.0
      %v3336 = vadd.f32 %v3114, 1.0
      %v3337 = vadd.f32 %v3116, 1.0
      %v3338 = vadd.f32 %v3118, 1.0
      %v3339 = vadd.f32 %v3120, 1.0
      %v3340 = vadd.f32 %v3122, 1.0
      %v3341 = vadd.f32 %v3124, 1.0
      %v3342 = vadd.f32 %v3126, 1.0
      %v3343 = vadd.f32 %v3128, 1.0
      %v3344 = vadd.f32 %v3130, 1.0
      %v3345 = vadd.f32 %v3132, 1.0
      %v3346 = vadd.f32 %v3134, 1.0
      %v3347 = vadd.f32 %v3136, 1.0
      %v3348 = vadd.f32 %v3138, 1.0
      %v3349 = vadd.f32 %v3140, 1.0
      %v3350 = vadd.f32 %v3142, 1.0
      %v3351 = vadd.f32 %v3144, 1.0
      %v3352 = vadd.f32 %v3146, 1.0
      %v3353 = vadd.f32 %v3148, 1.0
      %v3354 = vadd.f32 %v3150, 1.0
      %v3355 = vadd.f32 %v3152, 1.0
      %v3356 = vadd.f32 %v3154, 1.0
      %v3357 = vadd.f32 %v3156, 1.0
      %v3358 = vadd.f32 %v3158, 1.0
      %v3359 = vadd.f32 %v3160, 1.0
      %v3360 = vadd.f32 %v3162, 1.0
      %v3361 = vadd.f32 %v3164, 1.0
      %v3362 = vadd.f32 %v3166, 1.0
      %v3363 = vadd.f32 %v3168, 1.0
      %v3364 = vadd.f32 %v3170, 1.0
      %v3365 = vadd.f32 %v3172, 1.0
      %v3366 = vadd.f32 %v3174, 1.0
      %v3367 = vadd.f32 %v3176, 1.0
      %v3368 = vadd.f32 %v3178, 1.0
      %v3369 = vadd.f32 %v3180, 1.0
      %v3370 = vadd.f32 %v3182, 1.0
      %v3371 = vadd.f32 %v3184, 1.0
      %v3372 = vadd.f32 %v3186, 1.0
      %v3373 = vadd.f32 %v3188, 1.0
      %v3374 = vadd.f32 %v3190, 1.0
      %v3375 = vadd.f32 %v3192, 1.0
      %v3376 = vadd.f32 %v3194, 1.0
      %v3377 = vadd.f32 %v3196, 1.0
      %v3378 = vadd.f32 %v3198, 1.0
      %v3379 = vadd.f32 %v3200, 1.0
      %v3380 = vadd.f32 %v3202, 1.0
      %v3381 = vadd.f32 %v3204, 1.0
      %v3382 = vadd.f32 %v3206, 1.0
      %v3383 = vadd.f32 %v3208, 1.0
      %v3384 = vadd.f32 %v3210, 1.0
      %v3385 = vadd.f32 %v3212, 1.0
      %v3386 = vadd.f32 %v3214, 1.0
      %v3387 = vadd.f32 %v3216, 1.0
      %v3388 = vadd.f32 %v3218, 1.0
      %v3389 = vadd.f32 %v3220, 1.0
      %v3390 = vadd.f32 %v3222, 1.0
      %v3391 = vadd.f32 %v3224, 1.0
      %v3392 = vadd.f32 %v3226, 1.0
      %v3393 = vadd.f32 %v3228, 1.0
      %v3394 = vadd.f32 %v3230, 1.0
      %v3395 = vadd.f32 %v3232, 1.0
      %v3396 = vadd.f32 %v3234, 1.0
      %v3397 = vadd.f32 %v3236, 1.0
      %v3398 = vadd.f32 %v3238, 1.0
      %v3399 = vadd.f32 %v3240, 1.0
      %v3400 = vadd.f32 %v3242, 1.0
      %v3401 = vadd.f32 %v3244, 1.0
      %v3402 = vadd.f32 %v3246, 1.0
      %v3403 = vadd.f32 %v3248, 1.0
      %v3404 = vadd.f32 %v3250, 1.0
      %v3405 = vadd.f32 %v3252, 1.0
      %v3406 = vadd.f32 %v3254, 1.0
      %v3407 = vadd.f32 %v3256, 1.0
      %v3408 = vadd.f32 %v3258, 1.0
      %v3409 = vadd.f32 %v3260, 1.0
      %v3410 = vadd.f32 %v3262, 1.0
      %v3411 = vadd.f32 %v3264, 1.0
      %v3412 = vadd.f32 %v3266, 1.0
      %v3413 = vadd.f32 %v3268, 1.0
      %v3414 = vadd.f32 %v3270, 1.0
      %v3415 = vadd.f32 %v3272, 1.0
      %v3416 = vadd.f32 %v3274, 1.0
      %v3417 = vadd.f32 %v3276, 1.0
      %v3418 = vadd.f32 %v3278, 1.0
      %v3419 = vadd.f32 %v3280, 1.0
      %v3420 = vadd.f32 %v3282, 1.0
      %v3421 = vadd.f32 %v3284, 1.0
      %v3422 = vadd.f32 %v3286, 1.0
      %v3423 = vadd.f32 %v3288, 1.0
      %v3424 = vadd.f32 %v3290, 1.0
      %v3425 = vadd.f32 %v3292, 1.0
      %v3426 = vadd.f32 %v3294, 1.0
      %v3427 = vadd.f32 %v3296, 1.0
      %v3428 = vadd.f32 %v3298, 1.0
      %v3429 = vadd.f32 %v3300, 1.0
      %v3430 = vadd.f32 %v3302, 1.0
      %v3431 = vadd.f32 %v3304, 1.0
      %v3432 = vadd.f32 %v3306, 1.0
      %v3433 = vadd.f32 %v3308, 1.0
      %v3434 = vadd.f32 %v3310, 1.0
      %v3435 = vadd.f32 %v3312, 1.0
      %v3436 = vadd.f32 %v3314, 1.0
      %v3437 = vadd.f32 %v3316, 1.0
      %v3438 = vadd.f32 %v3318, 1.0
      %v3439 = vadd.f32 %v3320, 1.0
      %v3440 = vadd.f32 %v3322, 1.0
      %v3441 = vadd.f32 %v3324, 1.0
      %v3442 = vadd.f32 %v3326, 1.0
      %v3443 = vadd.f32 %v3328, 1.0
      %v3444 = vadd.f32 %v3330, 1.0
      %v3445 = vadd.f32 %v3332, 1.0
      %v3446 = vadd.f32 %v3334, 1.0
      %v3447 = vrcp.pop %v3335
      %v3448 = vmul.f32 1.0, %v3447
      %v3449 = vrcp.pop %v3336
      %v3450 = vmul.f32 1.0, %v3449
      %v3451 = vrcp.pop %v3337
      %v3452 = vmul.f32 1.0, %v3451
      %v3453 = vrcp.pop %v3338
      %v3454 = vmul.f32 1.0, %v3453
      %v3455 = vrcp.pop %v3339
      %v3456 = vmul.f32 1.0, %v3455
      %v3457 = vrcp.pop %v3340
      %v3458 = vmul.f32 1.0, %v3457
      %v3459 = vrcp.pop %v3341
      %v3460 = vmul.f32 1.0, %v3459
      %v3461 = vrcp.pop %v3342
      %v3462 = vmul.f32 1.0, %v3461
      %v3463 = vrcp.pop %v3343
      %v3464 = vmul.f32 1.0, %v3463
      %v3465 = vrcp.pop %v3344
      %v3466 = vmul.f32 1.0, %v3465
      %v3467 = vrcp.pop %v3345
      %v3468 = vmul.f32 1.0, %v3467
      %v3469 = vrcp.pop %v3346
      %v3470 = vmul.f32 1.0, %v3469
      %v3471 = vrcp.pop %v3347
      %v3472 = vmul.f32 1.0, %v3471
      %v3473 = vrcp.pop %v3348
      %v3474 = vmul.f32 1.0, %v3473
      %v3475 = vrcp.pop %v3349
      %v3476 = vmul.f32 1.0, %v3475
      %v3477 = vrcp.pop %v3350
      %v3478 = vmul.f32 1.0, %v3477
      %v3479 = vrcp.pop %v3351
      %v3480 = vmul.f32 1.0, %v3479
      %v3481 = vrcp.pop %v3352
      %v3482 = vmul.f32 1.0, %v3481
      %v3483 = vrcp.pop %v3353
      %v3484 = vmul.f32 1.0, %v3483
      %v3485 = vrcp.pop %v3354
      %v3486 = vmul.f32 1.0, %v3485
      %v3487 = vrcp.pop %v3355
      %v3488 = vmul.f32 1.0, %v3487
      %v3489 = vrcp.pop %v3356
      %v3490 = vmul.f32 1.0, %v3489
      %v3491 = vrcp.pop %v3357
      %v3492 = vmul.f32 1.0, %v3491
      %v3493 = vrcp.pop %v3358
      %v3494 = vmul.f32 1.0, %v3493
      %v3495 = vrcp.pop %v3359
      %v3496 = vmul.f32 1.0, %v3495
      %v3497 = vrcp.pop %v3360
      %v3498 = vmul.f32 1.0, %v3497
      %v3499 = vrcp.pop %v3361
      %v3500 = vmul.f32 1.0, %v3499
      %v3501 = vrcp.pop %v3362
      %v3502 = vmul.f32 1.0, %v3501
      %v3503 = vrcp.pop %v3363
      %v3504 = vmul.f32 1.0, %v3503
      %v3505 = vrcp.pop %v3364
      %v3506 = vmul.f32 1.0, %v3505
      %v3507 = vrcp.pop %v3365
      %v3508 = vmul.f32 1.0, %v3507
      %v3509 = vrcp.pop %v3366
      %v3510 = vmul.f32 1.0, %v3509
      %v3511 = vrcp.pop %v3367
      %v3512 = vmul.f32 1.0, %v3511
      %v3513 = vrcp.pop %v3368
      %v3514 = vmul.f32 1.0, %v3513
      %v3515 = vrcp.pop %v3369
      %v3516 = vmul.f32 1.0, %v3515
      %v3517 = vrcp.pop %v3370
      %v3518 = vmul.f32 1.0, %v3517
      %v3519 = vrcp.pop %v3371
      %v3520 = vmul.f32 1.0, %v3519
      %v3521 = vrcp.pop %v3372
      %v3522 = vmul.f32 1.0, %v3521
      %v3523 = vrcp.pop %v3373
      %v3524 = vmul.f32 1.0, %v3523
      %v3525 = vrcp.pop %v3374
      %v3526 = vmul.f32 1.0, %v3525
      %v3527 = vrcp.pop %v3375
      %v3528 = vmul.f32 1.0, %v3527
      %v3529 = vrcp.pop %v3376
      %v3530 = vmul.f32 1.0, %v3529
      %v3531 = vrcp.pop %v3377
      %v3532 = vmul.f32 1.0, %v3531
      %v3533 = vrcp.pop %v3378
      %v3534 = vmul.f32 1.0, %v3533
      %v3535 = vrcp.pop %v3379
      %v3536 = vmul.f32 1.0, %v3535
      %v3537 = vrcp.pop %v3380
      %v3538 = vmul.f32 1.0, %v3537
      %v3539 = vrcp.pop %v3381
      %v3540 = vmul.f32 1.0, %v3539
      %v3541 = vrcp.pop %v3382
      %v3542 = vmul.f32 1.0, %v3541
      %v3543 = vrcp.pop %v3383
      %v3544 = vmul.f32 1.0, %v3543
      %v3545 = vrcp.pop %v3384
      %v3546 = vmul.f32 1.0, %v3545
      %v3547 = vrcp.pop %v3385
      %v3548 = vmul.f32 1.0, %v3547
      %v3549 = vrcp.pop %v3386
      %v3550 = vmul.f32 1.0, %v3549
      %v3551 = vrcp.pop %v3387
      %v3552 = vmul.f32 1.0, %v3551
      %v3553 = vrcp.pop %v3388
      %v3554 = vmul.f32 1.0, %v3553
      %v3555 = vrcp.pop %v3389
      %v3556 = vmul.f32 1.0, %v3555
      %v3557 = vrcp.pop %v3390
      %v3558 = vmul.f32 1.0, %v3557
      %v3559 = vrcp.pop %v3391
      %v3560 = vmul.f32 1.0, %v3559
      %v3561 = vrcp.pop %v3392
      %v3562 = vmul.f32 1.0, %v3561
      %v3563 = vrcp.pop %v3393
      %v3564 = vmul.f32 1.0, %v3563
      %v3565 = vrcp.pop %v3394
      %v3566 = vmul.f32 1.0, %v3565
      %v3567 = vrcp.pop %v3395
      %v3568 = vmul.f32 1.0, %v3567
      %v3569 = vrcp.pop %v3396
      %v3570 = vmul.f32 1.0, %v3569
      %v3571 = vrcp.pop %v3397
      %v3572 = vmul.f32 1.0, %v3571
      %v3573 = vrcp.pop %v3398
      %v3574 = vmul.f32 1.0, %v3573
      %v3575 = vrcp.pop %v3399
      %v3576 = vmul.f32 1.0, %v3575
      %v3577 = vrcp.pop %v3400
      %v3578 = vmul.f32 1.0, %v3577
      %v3579 = vrcp.pop %v3401
      %v3580 = vmul.f32 1.0, %v3579
      %v3581 = vrcp.pop %v3402
      %v3582 = vmul.f32 1.0, %v3581
      %v3583 = vrcp.pop %v3403
      %v3584 = vmul.f32 1.0, %v3583
      %v3585 = vrcp.pop %v3404
      %v3586 = vmul.f32 1.0, %v3585
      %v3587 = vrcp.pop %v3405
      %v3588 = vmul.f32 1.0, %v3587
      %v3589 = vrcp.pop %v3406
      %v3590 = vmul.f32 1.0, %v3589
      %v3591 = vrcp.pop %v3407
      %v3592 = vmul.f32 1.0, %v3591
      %v3593 = vrcp.pop %v3408
      %v3594 = vmul.f32 1.0, %v3593
      %v3595 = vrcp.pop %v3409
      %v3596 = vmul.f32 1.0, %v3595
      %v3597 = vrcp.pop %v3410
      %v3598 = vmul.f32 1.0, %v3597
      %v3599 = vrcp.pop %v3411
      %v3600 = vmul.f32 1.0, %v3599
      %v3601 = vrcp.pop %v3412
      %v3602 = vmul.f32 1.0, %v3601
      %v3603 = vrcp.pop %v3413
      %v3604 = vmul.f32 1.0, %v3603
      %v3605 = vrcp.pop %v3414
      %v3606 = vmul.f32 1.0, %v3605
      %v3607 = vrcp.pop %v3415
      %v3608 = vmul.f32 1.0, %v3607
      %v3609 = vrcp.pop %v3416
      %v3610 = vmul.f32 1.0, %v3609
      %v3611 = vrcp.pop %v3417
      %v3612 = vmul.f32 1.0, %v3611
      %v3613 = vrcp.pop %v3418
      %v3614 = vmul.f32 1.0, %v3613
      %v3615 = vrcp.pop %v3419
      %v3616 = vmul.f32 1.0, %v3615
      %v3617 = vrcp.pop %v3420
      %v3618 = vmul.f32 1.0, %v3617
      %v3619 = vrcp.pop %v3421
      %v3620 = vmul.f32 1.0, %v3619
      %v3621 = vrcp.pop %v3422
      %v3622 = vmul.f32 1.0, %v3621
      %v3623 = vrcp.pop %v3423
      %v3624 = vmul.f32 1.0, %v3623
      %v3625 = vrcp.pop %v3424
      %v3626 = vmul.f32 1.0, %v3625
      %v3627 = vrcp.pop %v3425
      %v3628 = vmul.f32 1.0, %v3627
      %v3629 = vrcp.pop %v3426
      %v3630 = vmul.f32 1.0, %v3629
      %v3631 = vrcp.pop %v3427
      %v3632 = vmul.f32 1.0, %v3631
      %v3633 = vrcp.pop %v3428
      %v3634 = vmul.f32 1.0, %v3633
      %v3635 = vrcp.pop %v3429
      %v3636 = vmul.f32 1.0, %v3635
      %v3637 = vrcp.pop %v3430
      %v3638 = vmul.f32 1.0, %v3637
      %v3639 = vrcp.pop %v3431
      %v3640 = vmul.f32 1.0, %v3639
      %v3641 = vrcp.pop %v3432
      %v3642 = vmul.f32 1.0, %v3641
      %v3643 = vrcp.pop %v3433
      %v3644 = vmul.f32 1.0, %v3643
      %v3645 = vrcp.pop %v3434
      %v3646 = vmul.f32 1.0, %v3645
      %v3647 = vrcp.pop %v3435
      %v3648 = vmul.f32 1.0, %v3647
      %v3649 = vrcp.pop %v3436
      %v3650 = vmul.f32 1.0, %v3649
      %v3651 = vrcp.pop %v3437
      %v3652 = vmul.f32 1.0, %v3651
      %v3653 = vrcp.pop %v3438
      %v3654 = vmul.f32 1.0, %v3653
      %v3655 = vrcp.pop %v3439
      %v3656 = vmul.f32 1.0, %v3655
      %v3657 = vrcp.pop %v3440
      %v3658 = vmul.f32 1.0, %v3657
      %v3659 = vrcp.pop %v3441
      %v3660 = vmul.f32 1.0, %v3659
      %v3661 = vrcp.pop %v3442
      %v3662 = vmul.f32 1.0, %v3661
      %v3663 = vrcp.pop %v3443
      %v3664 = vmul.f32 1.0, %v3663
      %v3665 = vrcp.pop %v3444
      %v3666 = vmul.f32 1.0, %v3665
      %v3667 = vrcp.pop %v3445
      %v3668 = vmul.f32 1.0, %v3667
      %v3669 = vrcp.pop %v3446
      %v3670 = vmul.f32 1.0, %v3669
      %3671 = vst [vmem:[%s424] sm:$0xff] %v3448
      %3672 = vst [vmem:[%s424 + $0x8] sm:$0xff] %v3450
      %3673 = vst [vmem:[%s424 + $0x10] sm:$0xff] %v3452
      %3674 = vst [vmem:[%s424 + $0x18] sm:$0xff] %v3454
      %3675 = vst [vmem:[%s424 + $0x20] sm:$0xff] %v3456
      %3676 = vst [vmem:[%s424 + $0x28] sm:$0xff] %v3458
      %3677 = vst.msk [vmem:[%s424 + $0x30] sm:$0xff] %vm753, %v3460
      %3678 = vst [vmem:[%s424 + $0x38] sm:$0xff] %v3462
      %3679 = vst [vmem:[%s424 + $0x40] sm:$0xff] %v3464
      %3680 = vst [vmem:[%s424 + $0x48] sm:$0xff] %v3466
      %3681 = vst [vmem:[%s424 + $0x50] sm:$0xff] %v3468
      %3682 = vst [vmem:[%s424 + $0x58] sm:$0xff] %v3470
      %3683 = vst [vmem:[%s424 + $0x60] sm:$0xff] %v3472
      %3684 = vst.msk [vmem:[%s424 + $0x68] sm:$0xff] %vm753, %v3474
      %3685 = vst [vmem:[%s424 + $0x70] sm:$0xff] %v3476
      %3686 = vst [vmem:[%s424 + $0x78] sm:$0xff] %v3478
      %3687 = vst [vmem:[%s424 + $0x80] sm:$0xff] %v3480
      %3688 = vst [vmem:[%s424 + $0x88] sm:$0xff] %v3482
      %3689 = vst [vmem:[%s424 + $0x90] sm:$0xff] %v3484
      %3690 = vst [vmem:[%s424 + $0x98] sm:$0xff] %v3486
      %3691 = vst.msk [vmem:[%s424 + $0xa0] sm:$0xff] %vm753, %v3488
      %3692 = vst [vmem:[%s424 + $0xa8] sm:$0xff] %v3490
      %3693 = vst [vmem:[%s424 + $0xb0] sm:$0xff] %v3492
      %3694 = vst [vmem:[%s424 + $0xb8] sm:$0xff] %v3494
      %3695 = vst [vmem:[%s424 + $0xc0] sm:$0xff] %v3496
      %3696 = vst [vmem:[%s424 + $0xc8] sm:$0xff] %v3498
      %3697 = vst [vmem:[%s424 + $0xd0] sm:$0xff] %v3500
      %3698 = vst.msk [vmem:[%s424 + $0xd8] sm:$0xff] %vm753, %v3502
      %3699 = vst [vmem:[%s424 + $0xe0] sm:$0xff] %v3504
      %3700 = vst [vmem:[%s424 + $0xe8] sm:$0xff] %v3506
      %3701 = vst [vmem:[%s424 + $0xf0] sm:$0xff] %v3508
      %3702 = vst [vmem:[%s424 + $0xf8] sm:$0xff] %v3510
      %3703 = vst [vmem:[%s424 + $0x100] sm:$0xff] %v3512
      %3704 = vst [vmem:[%s424 + $0x108] sm:$0xff] %v3514
      %3705 = vst.msk [vmem:[%s424 + $0x110] sm:$0xff] %vm753, %v3516
      %3706 = vst [vmem:[%s424 + $0x118] sm:$0xff] %v3518
      %3707 = vst [vmem:[%s424 + $0x120] sm:$0xff] %v3520
      %3708 = vst [vmem:[%s424 + $0x128] sm:$0xff] %v3522
      %3709 = vst [vmem:[%s424 + $0x130] sm:$0xff] %v3524
      %3710 = vst [vmem:[%s424 + $0x138] sm:$0xff] %v3526
      %3711 = vst [vmem:[%s424 + $0x140] sm:$0xff] %v3528
      %3712 = vst.msk [vmem:[%s424 + $0x148] sm:$0xff] %vm753, %v3530
      %3713 = vst [vmem:[%s424 + $0x150] sm:$0xff] %v3532
      %3714 = vst [vmem:[%s424 + $0x158] sm:$0xff] %v3534
      %3715 = vst [vmem:[%s424 + $0x160] sm:$0xff] %v3536
      %3716 = vst [vmem:[%s424 + $0x168] sm:$0xff] %v3538
      %3717 = vst [vmem:[%s424 + $0x170] sm:$0xff] %v3540
      %3718 = vst [vmem:[%s424 + $0x178] sm:$0xff] %v3542
      %3719 = vst.msk [vmem:[%s424 + $0x180] sm:$0xff] %vm753, %v3544
      %3720 = vst [vmem:[%s424 + $0x188] sm:$0xff] %v3546
      %3721 = vst [vmem:[%s424 + $0x190] sm:$0xff] %v3548
      %3722 = vst [vmem:[%s424 + $0x198] sm:$0xff] %v3550
      %3723 = vst [vmem:[%s424 + $0x1a0] sm:$0xff] %v3552
      %3724 = vst [vmem:[%s424 + $0x1a8] sm:$0xff] %v3554
      %3725 = vst [vmem:[%s424 + $0x1b0] sm:$0xff] %v3556
      %3726 = vst.msk [vmem:[%s424 + $0x1b8] sm:$0xff] %vm753, %v3558
      %3727 = vst [vmem:[%s424 + $0x1c0] sm:$0xff] %v3560
      %3728 = vst [vmem:[%s424 + $0x1c8] sm:$0xff] %v3562
      %3729 = vst [vmem:[%s424 + $0x1d0] sm:$0xff] %v3564
      %3730 = vst [vmem:[%s424 + $0x1d8] sm:$0xff] %v3566
      %3731 = vst [vmem:[%s424 + $0x1e0] sm:$0xff] %v3568
      %3732 = vst [vmem:[%s424 + $0x1e8] sm:$0xff] %v3570
      %3733 = vst.msk [vmem:[%s424 + $0x1f0] sm:$0xff] %vm753, %v3572
      %3734 = vst [vmem:[%s424 + $0x1f8] sm:$0xff] %v3574
      %3735 = vst [vmem:[%s424 + $0x200] sm:$0xff] %v3576
      %3736 = vst [vmem:[%s424 + $0x208] sm:$0xff] %v3578
      %3737 = vst [vmem:[%s424 + $0x210] sm:$0xff] %v3580
      %3738 = vst [vmem:[%s424 + $0x218] sm:$0xff] %v3582
      %3739 = vst [vmem:[%s424 + $0x220] sm:$0xff] %v3584
      %3740 = vst.msk [vmem:[%s424 + $0x228] sm:$0xff] %vm753, %v3586
      %3741 = vst [vmem:[%s424 + $0x230] sm:$0xff] %v3588
      %3742 = vst [vmem:[%s424 + $0x238] sm:$0xff] %v3590
      %3743 = vst [vmem:[%s424 + $0x240] sm:$0xff] %v3592
      %3744 = vst [vmem:[%s424 + $0x248] sm:$0xff] %v3594
      %3745 = vst [vmem:[%s424 + $0x250] sm:$0xff] %v3596
      %3746 = vst [vmem:[%s424 + $0x258] sm:$0xff] %v3598
      %3747 = vst.msk [vmem:[%s424 + $0x260] sm:$0xff] %vm753, %v3600
      %3748 = vst [vmem:[%s424 + $0x268] sm:$0xff] %v3602
      %3749 = vst [vmem:[%s424 + $0x270] sm:$0xff] %v3604
      %3750 = vst [vmem:[%s424 + $0x278] sm:$0xff] %v3606
      %3751 = vst [vmem:[%s424 + $0x280] sm:$0xff] %v3608
      %3752 = vst [vmem:[%s424 + $0x288] sm:$0xff] %v3610
      %3753 = vst [vmem:[%s424 + $0x290] sm:$0xff] %v3612
      %3754 = vst.msk [vmem:[%s424 + $0x298] sm:$0xff] %vm753, %v3614
      %3755 = vst [vmem:[%s424 + $0x2a0] sm:$0xff] %v3616
      %3756 = vst [vmem:[%s424 + $0x2a8] sm:$0xff] %v3618
      %3757 = vst [vmem:[%s424 + $0x2b0] sm:$0xff] %v3620
      %3758 = vst [vmem:[%s424 + $0x2b8] sm:$0xff] %v3622
      %3759 = vst [vmem:[%s424 + $0x2c0] sm:$0xff] %v3624
      %3760 = vst [vmem:[%s424 + $0x2c8] sm:$0xff] %v3626
      %3761 = vst.msk [vmem:[%s424 + $0x2d0] sm:$0xff] %vm753, %v3628
      %3762 = vst [vmem:[%s424 + $0x2d8] sm:$0xff] %v3630
      %3763 = vst [vmem:[%s424 + $0x2e0] sm:$0xff] %v3632
      %3764 = vst [vmem:[%s424 + $0x2e8] sm:$0xff] %v3634
      %3765 = vst [vmem:[%s424 + $0x2f0] sm:$0xff] %v3636
      %3766 = vst [vmem:[%s424 + $0x2f8] sm:$0xff] %v3638
      %3767 = vst [vmem:[%s424 + $0x300] sm:$0xff] %v3640
      %3768 = vst.msk [vmem:[%s424 + $0x308] sm:$0xff] %vm753, %v3642
      %3769 = vst [vmem:[%s424 + $0x310] sm:$0xff] %v3644
      %3770 = vst [vmem:[%s424 + $0x318] sm:$0xff] %v3646
      %3771 = vst [vmem:[%s424 + $0x320] sm:$0xff] %v3648
      %3772 = vst [vmem:[%s424 + $0x328] sm:$0xff] %v3650
      %3773 = vst [vmem:[%s424 + $0x330] sm:$0xff] %v3652
      %3774 = vst [vmem:[%s424 + $0x338] sm:$0xff] %v3654
      %3775 = vst.msk [vmem:[%s424 + $0x340] sm:$0xff] %vm753, %v3656
      %3776 = vst [vmem:[%s424 + $0x348] sm:$0xff] %v3658
      %3777 = vst [vmem:[%s424 + $0x350] sm:$0xff] %v3660
      %3778 = vst [vmem:[%s424 + $0x358] sm:$0xff] %v3662
      %3779 = vst [vmem:[%s424 + $0x360] sm:$0xff] %v3664
      %3780 = vst [vmem:[%s424 + $0x368] sm:$0xff] %v3666
      %3781 = vst [vmem:[%s424 + $0x370] sm:$0xff] %v3668
      %3782 = vst.msk [vmem:[%s424 + $0x378] sm:$0xff] %vm753, %v3670
      %3783 = vst [vmem:[%s431] sm:$0xff] %v1663
      %3784 = vst [vmem:[%s431 + $0x8] sm:$0xff] %v1665
      %3785 = vst [vmem:[%s431 + $0x10] sm:$0xff] %v1669
      %3786 = vst [vmem:[%s431 + $0x18] sm:$0xff] %v1671
      %3787 = vst [vmem:[%s431 + $0x20] sm:$0xff] %v1675
      %3788 = vst [vmem:[%s431 + $0x28] sm:$0xff] %v1677
      %3789 = vst [vmem:[%s431 + $0x30] sm:$0xff] %v1681
      %3790 = vst [vmem:[%s431 + $0x38] sm:$0xff] %v1683
      %3791 = vst [vmem:[%s431 + $0x40] sm:$0xff] %v1687
      %3792 = vst [vmem:[%s431 + $0x48] sm:$0xff] %v1689
      %3793 = vst [vmem:[%s431 + $0x50] sm:$0xff] %v1693
      %3794 = vst [vmem:[%s431 + $0x58] sm:$0xff] %v1695
      %3795 = vst [vmem:[%s431 + $0x60] sm:$0xff] %v1699
      %3796 = vst [vmem:[%s431 + $0x68] sm:$0xff] %v1701
      %3797 = vst [vmem:[%s431 + $0x70] sm:$0xff] %v1705
      %3798 = vst [vmem:[%s431 + $0x78] sm:$0xff] %v1707
      %3799 = vst [vmem:[%s431 + $0x80] sm:$0xff] %v1711
      %3800 = vst [vmem:[%s431 + $0x88] sm:$0xff] %v1713
      %3801 = vst [vmem:[%s431 + $0x90] sm:$0xff] %v1717
      %3802 = vst [vmem:[%s431 + $0x98] sm:$0xff] %v1719
      %3803 = vst [vmem:[%s431 + $0xa0] sm:$0xff] %v1723
      %3804 = vst [vmem:[%s431 + $0xa8] sm:$0xff] %v1725
      %3805 = vst [vmem:[%s431 + $0xb0] sm:$0xff] %v1729
      %3806 = vst [vmem:[%s431 + $0xb8] sm:$0xff] %v1731
      %3807 = vst [vmem:[%s431 + $0xc0] sm:$0xff] %v1735
      %3808 = vst [vmem:[%s431 + $0xc8] sm:$0xff] %v1737
      %3809 = vst [vmem:[%s431 + $0xd0] sm:$0xff] %v1741
      %3810 = vst [vmem:[%s431 + $0xd8] sm:$0xff] %v1743
      %3811 = vst [vmem:[%s431 + $0xe0] sm:$0xff] %v1747
      %3812 = vst [vmem:[%s431 + $0xe8] sm:$0xff] %v1749
      %3813 = vst [vmem:[%s431 + $0xf0] sm:$0xff] %v1753
      %3814 = vst [vmem:[%s431 + $0xf8] sm:$0xff] %v1755
      %s3815 = smul.u32 16, %s23
      %p3816 = scmp.lt.s32.totalorder %s3815, 31
      %s3817 = scalar_select %p3816, %s3815, 31
      %s3818 = smul.addr %s3817, 7
      %s3819 = smul.addr %s3818, 8
      %s3820 = scalar_lea.vmem %s10, %s3819
      %s3821 = smul.u32 16, %s23
      %p3822 = scmp.lt.s32.totalorder %s3821, 31
      %s3823 = scalar_select %p3822, %s3821, 31
      %s3824 = smul.addr %s3823, 2
      %s3825 = smul.addr %s3824, 8
      %s3826 = scalar_lea.vmem %s11, %s3825
      // Predicated region
      $region61: #{vae_fc_forward.1} parent=59 // pred_check
        %p3827 = pneg %p261
      $region62: #{vae_fc_forward.1} parent=59 // pred_check_branch
        %3829 = sbr.rel (%p3827) target = $region64
      $region63: #{vae_fc_forward.1} parent=59 // pred_region
        %s3830 = smul.u32 16, %s23
      $region64: #{vae_fc_forward.1} parent=59 // pred_fallthru
        _
      // Predicated region
      $region65: #{vae_fc_forward.1} parent=59 // pred_check
        %p3831 = pneg %p287
      $region66: #{vae_fc_forward.1} parent=59 // pred_check_branch
        %3833 = sbr.rel (%p3831) target = $region68
      $region67: #{vae_fc_forward.1} parent=59 // pred_region
        %s3834 = smul.u32 16, %s23
      $region68: #{vae_fc_forward.1} parent=59 // pred_fallthru
        _
    $region60: #{vae_fc_forward.1} parent=5 // pred_fallthru
      _
    %p3835 = scmp.le.s32.totalorder 2, %s18
    // Predicated region
    $region69: #{vae_fc_forward.1} parent=5 // pred_check
      %p3836 = pneg %p3835
    $region70: #{vae_fc_forward.1} parent=5 // pred_check_branch
      %3838 = sbr.rel (%p3836) target = $region72
    $region71: #{vae_fc_forward.1} parent=5 // pred_region
      %s3839 = ssub.s32 %s18, 2
      // Predicated region
      $region73: #{vae_fc_forward.1} parent=71 // pred_check
        %p3840 = pneg %p267
      $region74: #{vae_fc_forward.1} parent=71 // pred_check_branch
        %3842 = sbr.rel (%p3840) target = $region76
      $region75: #{vae_fc_forward.1} parent=71 // pred_region
        %s3843 = smul.u32 16, %s24
        %p3844 = scmp.lt.s32.totalorder %s3843, 31
        %s3845 = scalar_select %p3844, %s3843, 31
        %s3846 = smul.addr %s3845, 7
        %s3847 = smul.addr %s3846, 8
        %s3848 = scalar_lea.vmem %s10, %s3847
      $region76: #{vae_fc_forward.1} parent=71 // pred_fallthru
        _
      // Predicated region
      $region77: #{vae_fc_forward.1} parent=71 // pred_check
        %p3849 = pneg %p293
      $region78: #{vae_fc_forward.1} parent=71 // pred_check_branch
        %3851 = sbr.rel (%p3849) target = $region80
      $region79: #{vae_fc_forward.1} parent=71 // pred_region
        %s3852 = smul.u32 16, %s24
        %p3853 = scmp.lt.s32.totalorder %s3852, 31
        %s3854 = scalar_select %p3853, %s3852, 31
        %s3855 = smul.addr %s3854, 2
        %s3856 = smul.addr %s3855, 8
        %s3857 = scalar_lea.vmem %s11, %s3856
      $region80: #{vae_fc_forward.1} parent=71 // pred_fallthru
        _
    $region72: #{vae_fc_forward.1} parent=5 // pred_fallthru
      _
  $region6: #{vae_fc_forward.1} parent=0 // loop_footer
    %s22 = sadd.s32 1, %s18
  $region7: #{vae_fc_forward.1} parent=0 // loop_footer_branch
    %17 = sbr.rel target = $region3
  $region8: #{vae_fc_forward.1} parent=0 // loop_exit
    _

</llo_original>
